<compile_context>
chip_gen: v7x
topology: tpu7x:2x2x1
jax: 0.10.0
libtpu: 0.0.40
codegen_flags: <defaults>
</compile_context>

<pallas_src>
import numpy as np
import jax
import jax.numpy as jnp
from jax.experimental import pallas as pl
from jax.experimental.pallas import tpu as pltpu


def _round_up(v, m):
    return (v + m - 1) // m * m


def _disc_kernel(xp_ref, wbig_ref, selm_ref, sel_ref, g1_ref,
                 w2bd_ref, g2_ref, be2_ref,
                 pcat_ref, shiftsel_ref, w3_ref,
                 w4_ref, g3_ref, be3_ref,
                 p2cat_ref, wfc_ref, bfc_ref, out_ref):
    f32 = jnp.float32
    C1, CW = sel_ref.shape              # (8, 512)
    W = CW // C1                        # 64 (input_size)
    C2 = g2_ref.shape[0]                # 16
    BC2 = w2bd_ref.shape[1]             # B*C2 = 32
    B = BC2 // C2                       # batch
    Wp1 = W // 4                        # 16 (width after MaxPool(1,4))
    BW1 = B * Wp1                       # 32
    K3 = w3_ref.shape[1]                # 9
    BNP2 = wfc_ref.shape[1]             # B * npool2 = 4
    NP2 = BNP2 // B                     # 2 (width after MaxPool(1,8))

    def elu(h):
        return jnp.where(h > 0, h, jnp.exp(jnp.minimum(h, 0.0)) - 1.0)

    # ---- conv1: one Toeplitz matmul, K padded to 128 lanes.  The conv1 bias is
    #      omitted: BatchNorm1's mean subtraction cancels it exactly. -------------------
    o1 = jnp.dot(xp_ref[...], wbig_ref[...], preferred_element_type=f32)   # (B*Hpad, C1*W)

    # ---- BatchNorm1 batch statistics (training mode, eps=0).  Only the per-channel
    #      SCALE matters: the shift is a per-channel constant that BatchNorm2 removes. --
    colsum = jnp.sum(o1, axis=0, keepdims=True)                            # (1, C1*W)
    colsq = jnp.sum(o1 * o1, axis=0, keepdims=True)                        # (1, C1*W)
    mean1 = jnp.dot(colsum, selm_ref[...], preferred_element_type=f32)     # (1, C1)
    ex2 = jnp.dot(colsq, selm_ref[...], preferred_element_type=f32)        # (1, C1)
    s1 = jax.lax.rsqrt(ex2 - mean1 * mean1) * g1_ref[...]                  # (1, C1)
    s_row = jnp.dot(s1, sel_ref[...], preferred_element_type=f32)          # (1, C1*W)

    # ---- depthwiseconv2 ((62,1) kernel) fused with the BN1 scale:
    #      8 accumulated matmuls with batch-block-diagonal weights; the whole batch is
    #      processed at once and no output is discarded.  conv2's bias and the BN1
    #      shift are per-c2 constants killed by BatchNorm2's mean subtraction. ----------
    acc = None
    for c1 in range(C1):
        m = jnp.dot(w2bd_ref[c1], o1[:, c1 * W:(c1 + 1) * W],
                    preferred_element_type=f32)                            # (B*C2, W)
        m = m * s_row[:, c1 * W:(c1 + 1) * W]                              # fold BN1 scale
        acc = m if acc is None else acc + m
    # (b, c2) rows -> (c2, b*W) lanes
    h2 = jnp.concatenate([acc[b * C2:(b + 1) * C2, :] for b in range(B)], axis=1)  # (C2, B*W)

    # ---- BatchNorm2 + ELU ----------------------------------------------------------------
    m2 = jnp.mean(h2, axis=1, keepdims=True)
    d2 = h2 - m2
    v2 = jnp.mean(d2 * d2, axis=1, keepdims=True)
    h2 = elu(d2 * jax.lax.rsqrt(v2) * g2_ref[...] + be2_ref[...])          # (C2, B*W)

    # ---- MaxPool2d((1,4)): 4 in-window phases via one lane-dense selector matmul,
    #      then 3 register-resident maxes (no lane shifts, no masked reductions). --------
    ph = jnp.dot(h2, pcat_ref[...], preferred_element_type=f32)            # (C2, 4*BW1)
    pool1 = jnp.maximum(jnp.maximum(ph[:, 0:BW1], ph[:, BW1:2 * BW1]),
                        jnp.maximum(ph[:, 2 * BW1:3 * BW1], ph[:, 3 * BW1:4 * BW1]))

    # ---- separa1conv3: zero-pad + 9 shifted taps from one lane-dense selector matmul.
    #      Its bias (and conv4's) is removed exactly by BatchNorm3 -> dropped. -----------
    taps = jnp.dot(pool1, shiftsel_ref[...], preferred_element_type=f32)   # (C2, 384)
    w3 = w3_ref[...]                                                       # (C2, K3)
    h3 = taps[:, 0:BW1] * w3[:, 0:1]
    for k in range(1, K3):
        h3 = h3 + taps[:, k * BW1:(k + 1) * BW1] * w3[:, k:k + 1]          # (C2, B*Wp1)

    # ---- separa2conv4 (1x1): one channel-mixing matmul for the whole batch --------------
    h4 = jnp.dot(w4_ref[...], h3, preferred_element_type=f32)              # (C1, B*Wp1)

    # ---- BatchNorm3 + ELU ----------------------------------------------------------------
    m3 = jnp.mean(h4, axis=1, keepdims=True)
    d3 = h4 - m3
    v3 = jnp.mean(d3 * d3, axis=1, keepdims=True)
    h4 = elu(d3 * jax.lax.rsqrt(v3) * g3_ref[...] + be3_ref[...])          # (C1, B*Wp1)

    # ---- MaxPool2d((1,8)): 8 phases via one selector matmul + 7 vector maxes ------------
    ph2 = jnp.dot(h4, p2cat_ref[...], preferred_element_type=f32)          # (C1, 8*BNP2)
    pool2 = ph2[:, 0:BNP2]
    for r in range(1, 8):
        pool2 = jnp.maximum(pool2, ph2[:, r * BNP2:(r + 1) * BNP2])        # (C1, BNP2)

    # ---- flatten (channel-major) + fc1 + sigmoid -----------------------------------------
    weighted = pool2 * wfc_ref[...]                                        # (C1, BNP2)
    logits = []
    for b in range(B):                                                     # final 2-scalar assembly
        wb = weighted[:, b * NP2:(b + 1) * NP2]
        logits.append(jnp.sum(jnp.sum(wb, axis=1, keepdims=True),
                              axis=0, keepdims=True))                      # (1, 1)
    logit = jnp.concatenate(logits, axis=1) + bfc_ref[...]                 # (1, B)
    out_ref[...] = 1.0 / (1.0 + jnp.exp(-logit))


def build_constants(p, input_size, batch, height=62):
    """Host-side, run once: Toeplitz / block-diagonal / selector constants."""
    W = int(input_size)
    C1 = p['g1'].shape[0]
    C2 = p['g2'].shape[0]
    K1 = p['w1'].shape[-1]
    K3 = p['w3'].shape[-1]
    pad1 = W // 4
    pad3 = W // 16
    Wp1 = W // 4
    npool2 = Wp1 // 8
    Hpad = _round_up(height, 8)
    B = int(batch)
    PP = _round_up(W + 2 * pad1, 128)                  # conv1 K padded 96 -> 128

    # conv1 weight -> Toeplitz matrix: wbig[pp, c*W + w] = w1[c, pp - w]; rows >= 96 stay 0
    w1 = np.asarray(p['w1'], np.float32)[:, 0, 0, :]                 # (C1, K1)
    wbig = np.zeros((PP, C1 * W), np.float32)
    for c in range(C1):
        for w in range(W):
            wbig[w:w + K1, c * W + w] = w1[c]

    # channel-block selector, and its 1/n-scaled transpose for the BN1 statistics
    sel = np.zeros((C1, C1 * W), np.float32)
    for c in range(C1):
        sel[c, c * W:(c + 1) * W] = 1.0
    selm = sel.T / float(B * height * W)                             # (C1*W, C1)

    # depthwiseconv2: per-c1 batch-block-diagonal weights (B*C2, B*Hpad);
    # columns h=62,63 stay zero so the zero pad rows of conv1 never contribute.
    w2 = np.asarray(p['w2'], np.float32)[:, :, :, 0]                 # (C2, C1, height)
    w2bd = np.zeros((C1, B * C2, B * Hpad), np.float32)
    for c1 in range(C1):
        for b in range(B):
            w2bd[c1, b * C2:(b + 1) * C2, b * Hpad:b * Hpad + height] = w2[:, c1, :]

    # MaxPool(1,4) phase selector: pcat[b*W + 4*q + r, r*(B*Wp1) + b*Wp1 + q] = 1
    pcat = np.zeros((B * W, 4 * B * Wp1), np.float32)
    for r in range(4):
        for b in range(B):
            for q in range(Wp1):
                pcat[b * W + 4 * q + r, r * B * Wp1 + b * Wp1 + q] = 1.0

    # separa1conv3 tap selector (zero pad + 9 shifts), columns padded to a multiple of 128
    TAPW = B * Wp1
    TAPS = _round_up(K3 * TAPW, 128)
    shiftsel = np.zeros((TAPW, TAPS), np.float32)
    for k in range(K3):
        for b in range(B):
            for i in range(Wp1):
                src = i + k - pad3
                if 0 <= src < Wp1:
                    shiftsel[b * Wp1 + src, k * TAPW + b * Wp1 + i] = 1.0

    # MaxPool(1,8) phase selector
    p2cat = np.zeros((B * Wp1, 8 * B * npool2), np.float32)
    for r in range(8):
        for b in range(B):
            for q in range(npool2):
                p2cat[b * Wp1 + 8 * q + r, r * B * npool2 + b * npool2 + q] = 1.0

    # fc1 weight in flatten order (channel, width), tiled over the batch lane blocks
    wfc2 = np.asarray(p['wfc'], np.float32).reshape(C1, npool2)
    wfc_tiled = np.tile(wfc2, (1, B))                                # (C1, B*npool2)

    f32 = jnp.float32
    return dict(
        wbig=jnp.asarray(wbig),
        selm=jnp.asarray(selm),
        sel=jnp.asarray(sel),
        g1r=jnp.asarray(p['g1'], f32)[None, :],
        w2bd=jnp.asarray(w2bd),
        g2c=jnp.asarray(p['g2'], f32)[:, None],
        be2c=jnp.asarray(p['be2'], f32)[:, None],
        pcat=jnp.asarray(pcat),
        shiftsel=jnp.asarray(shiftsel),
        w3=jnp.asarray(p['w3'], f32)[:, 0, 0, :],
        w4=jnp.asarray(p['w4'], f32)[:, :, 0, 0],
        g3c=jnp.asarray(p['g3'], f32)[:, None],
        be3c=jnp.asarray(p['be3'], f32)[:, None],
        p2cat=jnp.asarray(p2cat),
        wfc_tiled=jnp.asarray(wfc_tiled),
        bfc=jnp.asarray(p['bfc'], f32).reshape(1, 1),
    )


@jax.jit
def discriminator_channel_62_pallas(x, consts):
    B, _, H, W = x.shape
    pad1 = W // 4
    Hpad = _round_up(H, 8)
    PP = _round_up(W + 2 * pad1, 128)
    # glue: squeeze channel, zero-pad width (conv1 pad + K alignment), zero-pad height to x8
    xp = jnp.pad(x[:, 0], ((0, 0), (0, Hpad - H), (pad1, PP - W - pad1)))  # (B, Hpad, PP)
    xp2d = xp.reshape(B * Hpad, PP)

    args = (xp2d, consts['wbig'], consts['selm'], consts['sel'], consts['g1r'],
            consts['w2bd'], consts['g2c'], consts['be2c'],
            consts['pcat'], consts['shiftsel'], consts['w3'],
            consts['w4'], consts['g3c'], consts['be3c'],
            consts['p2cat'], consts['wfc_tiled'], consts['bfc'])

    vmem = pl.BlockSpec(memory_space=pltpu.MemorySpace.VMEM)
    out = pl.pallas_call(
        _disc_kernel,
        out_shape=jax.ShapeDtypeStruct((1, B), jnp.float32),
        in_specs=[vmem] * len(args),
        out_specs=vmem,
    )(*args)
    return out.reshape(B, 1)


def init_params(keys, n_filters, input_size):
    F8 = 8 * n_filters
    F16 = 16 * n_filters
    K1 = input_size // 2 + 1
    K3 = input_size // 8 + 1
    fc_in = (input_size // 32) * 8

    def u(k, shape, fan_in):
        bound = 1.0 / np.sqrt(fan_in)
        return jax.random.uniform(k, shape, jnp.float32, -bound, bound)

    p = {}
    p['w1'] = u(keys[0], (F8, 1, 1, K1), K1)
    p['b1'] = u(keys[1], (F8,), K1)
    p['w2'] = u(keys[2], (F16, F8, 62, 1), F8 * 62)
    p['b2'] = u(keys[3], (F16,), F8 * 62)
    p['w3'] = u(keys[4], (F16, 1, 1, K3), K3)
    p['b3'] = u(keys[5], (F16,), K3)
    p['w4'] = u(keys[6], (F8, F16, 1, 1), F16)
    p['b4'] = u(keys[7], (F8,), F16)
    p['wfc'] = u(keys[8], (1, fc_in), fc_in)
    p['bfc'] = u(keys[9], (1,), fc_in)
    # BatchNorm affine params (PyTorch default init: weight=1, bias=0)
    p['g1'], p['be1'] = jnp.ones((F8,), jnp.float32), jnp.zeros((F8,), jnp.float32)
    p['g2'], p['be2'] = jnp.ones((F16,), jnp.float32), jnp.zeros((F16,), jnp.float32)
    p['g3'], p['be3'] = jnp.ones((F8,), jnp.float32), jnp.zeros((F8,), jnp.float32)
    return p


def reference_forward(x, p, input_size):
    # pure-JAX reference of the PyTorch forward (training-mode BN, eps=0)
    prec = jax.lax.Precision.HIGHEST
    dn = ('NCHW', 'OIHW', 'NCHW')

    def conv(h, w, b, pad, groups=1):
        y = jax.lax.conv_general_dilated(h, w, (1, 1), pad, dimension_numbers=dn,
                                         feature_group_count=groups, precision=prec)
        return y + b[None, :, None, None]

    def bn(h, g, bt):
        m = jnp.mean(h, axis=(0, 2, 3), keepdims=True)
        v = jnp.mean((h - m) ** 2, axis=(0, 2, 3), keepdims=True)
        return (h - m) / jnp.sqrt(v) * g[None, :, None, None] + bt[None, :, None, None]

    def elu(h):
        return jnp.where(h > 0, h, jnp.exp(jnp.minimum(h, 0.0)) - 1.0)

    def pool(h, k):
        B, C, H, Wd = h.shape
        return jnp.max(h.reshape(B, C, H, Wd // k, k), axis=-1)

    pad1 = input_size // 4
    pad3 = input_size // 16
    h = conv(x, p['w1'], p['b1'], [(0, 0), (pad1, pad1)])
    h = bn(h, p['g1'], p['be1'])
    h = conv(h, p['w2'], p['b2'], [(0, 0), (0, 0)])
    h = bn(h, p['g2'], p['be2'])
    h = elu(h)
    h = pool(h, 4)
    h = conv(h, p['w3'], p['b3'], [(0, 0), (pad3, pad3)], groups=p['w3'].shape[0])
    h = conv(h, p['w4'], p['b4'], [(0, 0), (0, 0)])
    h = bn(h, p['g3'], p['be3'])
    h = elu(h)
    h = pool(h, 8)
    h = h.reshape(h.shape[0], (input_size // 32) * 8)
    y = h @ p['wfc'].T + p['bfc']
    return 1.0 / (1.0 + jnp.exp(-y))


if __name__ == "__main__":
    n_layer = 1        # unused by the forward pass (as in the PyTorch module)
    n_filters = 1      # must be 1 for the module's reshape -> fc1 to be shape-consistent
    input_size = 64    # W; input height is fixed to 62 (EEG electrodes)
    B = 2

    key = jax.random.PRNGKey(0)
    keys = jax.random.split(key, 12)
    x = jax.random.normal(keys[0], (B, 1, 62, input_size), jnp.float32)
    params = init_params(list(keys[1:]), n_filters, input_size)

    consts = build_constants(params, input_size, B)   # host-side constant build, once

    y = discriminator_channel_62_pallas(x, consts)
    y = jax.block_until_ready(y)

    y_ref = jax.block_until_ready(reference_forward(x, params, input_size))
    max_err = float(jnp.max(jnp.abs(y - y_ref)))
    if y.shape != (B, 1) or not np.isfinite(max_err) or max_err > 5e-3:
        raise AssertionError(f"mismatch vs reference: shape={y.shape}, max_err={max_err}")
    print("KERNEL_OK")
</pallas_src>

<mosaic_0001>
module attributes {stable_mosaic.version = 11 : i64} {
  func.func @_disc_kernel(%arg0: memref<128x128xf32, #tpu.memory_space<vmem>>, %arg1: memref<128x512xf32, #tpu.memory_space<vmem>>, %arg2: memref<512x8xf32, #tpu.memory_space<vmem>>, %arg3: memref<8x512xf32, #tpu.memory_space<vmem>>, %arg4: memref<1x8xf32, #tpu.memory_space<vmem>>, %arg5: memref<8x32x128xf32, #tpu.memory_space<vmem>>, %arg6: memref<16x1xf32, #tpu.memory_space<vmem>>, %arg7: memref<16x1xf32, #tpu.memory_space<vmem>>, %arg8: memref<128x128xf32, #tpu.memory_space<vmem>>, %arg9: memref<32x384xf32, #tpu.memory_space<vmem>>, %arg10: memref<16x9xf32, #tpu.memory_space<vmem>>, %arg11: memref<8x16xf32, #tpu.memory_space<vmem>>, %arg12: memref<8x1xf32, #tpu.memory_space<vmem>>, %arg13: memref<8x1xf32, #tpu.memory_space<vmem>>, %arg14: memref<32x32xf32, #tpu.memory_space<vmem>>, %arg15: memref<8x4xf32, #tpu.memory_space<vmem>>, %arg16: memref<1x1xf32, #tpu.memory_space<vmem>>, %arg17: memref<1x2xf32, #tpu.memory_space<vmem>>) attributes {dimension_semantics = [], scalar_prefetch = 0 : i64, scratch_operands = 0 : i64, tpu.core_type = #tpu.core_type<tc>} {
    %c0 = arith.constant 0 : index
    %c0_0 = arith.constant 0 : index
    %0 = vector.load %arg0[%c0, %c0_0] : memref<128x128xf32, #tpu.memory_space<vmem>>, vector<128x128xf32>
    %c0_1 = arith.constant 0 : index
    %c0_2 = arith.constant 0 : index
    %1 = vector.load %arg1[%c0_1, %c0_2] : memref<128x512xf32, #tpu.memory_space<vmem>>, vector<128x512xf32>
    %cst = arith.constant dense<0.000000e+00> : vector<128x512xf32>
    %2 = tpu.matmul %0, %1, %cst {dimension_numbers = #tpu.dot_dimension_numbers<[1], [0], [0], [1], [0, 0, 1, 1], [], []>} : vector<128x128xf32>, vector<128x512xf32>, vector<128x512xf32> -> vector<128x512xf32>
    %cst_3 = arith.constant dense<0.000000e+00> : vector<512xf32>
    %3 = vector.multi_reduction <add>, %2, %cst_3 [0] : vector<128x512xf32> to vector<512xf32>
    %4 = vector.shape_cast %3 : vector<512xf32> to vector<1x512xf32>
    %5 = arith.mulf %2, %2 : vector<128x512xf32>
    %cst_4 = arith.constant dense<0.000000e+00> : vector<512xf32>
    %6 = vector.multi_reduction <add>, %5, %cst_4 [0] : vector<128x512xf32> to vector<512xf32>
    %7 = vector.shape_cast %6 : vector<512xf32> to vector<1x512xf32>
    %c0_5 = arith.constant 0 : index
    %c0_6 = arith.constant 0 : index
    %8 = vector.load %arg2[%c0_5, %c0_6] : memref<512x8xf32, #tpu.memory_space<vmem>>, vector<512x8xf32>
    %cst_7 = arith.constant dense<0.000000e+00> : vector<1x8xf32>
    %9 = tpu.matmul %4, %8, %cst_7 {dimension_numbers = #tpu.dot_dimension_numbers<[1], [0], [0], [1], [0, 0, 1, 1], [], []>} : vector<1x512xf32>, vector<512x8xf32>, vector<1x8xf32> -> vector<1x8xf32>
    %c0_8 = arith.constant 0 : index
    %c0_9 = arith.constant 0 : index
    %10 = vector.load %arg2[%c0_8, %c0_9] : memref<512x8xf32, #tpu.memory_space<vmem>>, vector<512x8xf32>
    %cst_10 = arith.constant dense<0.000000e+00> : vector<1x8xf32>
    %11 = tpu.matmul %7, %10, %cst_10 {dimension_numbers = #tpu.dot_dimension_numbers<[1], [0], [0], [1], [0, 0, 1, 1], [], []>} : vector<1x512xf32>, vector<512x8xf32>, vector<1x8xf32> -> vector<1x8xf32>
    %12 = arith.mulf %9, %9 : vector<1x8xf32>
    %13 = arith.subf %11, %12 : vector<1x8xf32>
    %14 = math.rsqrt %13 : vector<1x8xf32>
    %c0_11 = arith.constant 0 : index
    %c0_12 = arith.constant 0 : index
    %15 = vector.load %arg4[%c0_11, %c0_12] : memref<1x8xf32, #tpu.memory_space<vmem>>, vector<1x8xf32>
    %16 = arith.mulf %14, %15 : vector<1x8xf32>
    %c0_13 = arith.constant 0 : index
    %c0_14 = arith.constant 0 : index
    %17 = vector.load %arg3[%c0_13, %c0_14] : memref<8x512xf32, #tpu.memory_space<vmem>>, vector<8x512xf32>
    %cst_15 = arith.constant dense<0.000000e+00> : vector<1x512xf32>
    %18 = tpu.matmul %16, %17, %cst_15 {dimension_numbers = #tpu.dot_dimension_numbers<[1], [0], [0], [1], [0, 0, 1, 1], [], []>} : vector<1x8xf32>, vector<8x512xf32>, vector<1x512xf32> -> vector<1x512xf32>
    %c0_16 = arith.constant 0 : index
    %c0_17 = arith.constant 0 : index
    %c0_18 = arith.constant 0 : index
    %19 = vector.load %arg5[%c0_16, %c0_17, %c0_18] : memref<8x32x128xf32, #tpu.memory_space<vmem>>, vector<1x32x128xf32>
    %20 = vector.shape_cast %19 : vector<1x32x128xf32> to vector<32x128xf32>
    %21 = vector.extract_strided_slice %2 {offsets = [0, 0], sizes = [128, 64], strides = [1, 1]} : vector<128x512xf32> to vector<128x64xf32>
    %cst_19 = arith.constant dense<0.000000e+00> : vector<32x64xf32>
    %22 = tpu.matmul %20, %21, %cst_19 {dimension_numbers = #tpu.dot_dimension_numbers<[1], [0], [0], [1], [0, 0, 1, 1], [], []>} : vector<32x128xf32>, vector<128x64xf32>, vector<32x64xf32> -> vector<32x64xf32>
    %23 = vector.extract_strided_slice %18 {offsets = [0, 0], sizes = [1, 64], strides = [1, 1]} : vector<1x512xf32> to vector<1x64xf32>
    %24 = vector.broadcast %23 : vector<1x64xf32> to vector<32x64xf32>
    %25 = arith.mulf %22, %24 : vector<32x64xf32>
    %c1 = arith.constant 1 : index
    %c0_20 = arith.constant 0 : index
    %c0_21 = arith.constant 0 : index
    %26 = vector.load %arg5[%c1, %c0_20, %c0_21] : memref<8x32x128xf32, #tpu.memory_space<vmem>>, vector<1x32x128xf32>
    %27 = vector.shape_cast %26 : vector<1x32x128xf32> to vector<32x128xf32>
    %28 = vector.extract_strided_slice %2 {offsets = [0, 64], sizes = [128, 64], strides = [1, 1]} : vector<128x512xf32> to vector<128x64xf32>
    %cst_22 = arith.constant dense<0.000000e+00> : vector<32x64xf32>
    %29 = tpu.matmul %27, %28, %cst_22 {dimension_numbers = #tpu.dot_dimension_numbers<[1], [0], [0], [1], [0, 0, 1, 1], [], []>} : vector<32x128xf32>, vector<128x64xf32>, vector<32x64xf32> -> vector<32x64xf32>
    %30 = vector.extract_strided_slice %18 {offsets = [0, 64], sizes = [1, 64], strides = [1, 1]} : vector<1x512xf32> to vector<1x64xf32>
    %31 = vector.broadcast %30 : vector<1x64xf32> to vector<32x64xf32>
    %32 = arith.mulf %29, %31 : vector<32x64xf32>
    %33 = arith.addf %25, %32 : vector<32x64xf32>
    %c2 = arith.constant 2 : index
    %c0_23 = arith.constant 0 : index
    %c0_24 = arith.constant 0 : index
    %34 = vector.load %arg5[%c2, %c0_23, %c0_24] : memref<8x32x128xf32, #tpu.memory_space<vmem>>, vector<1x32x128xf32>
    %35 = vector.shape_cast %34 : vector<1x32x128xf32> to vector<32x128xf32>
    %36 = vector.extract_strided_slice %2 {offsets = [0, 128], sizes = [128, 64], strides = [1, 1]} : vector<128x512xf32> to vector<128x64xf32>
    %cst_25 = arith.constant dense<0.000000e+00> : vector<32x64xf32>
    %37 = tpu.matmul %35, %36, %cst_25 {dimension_numbers = #tpu.dot_dimension_numbers<[1], [0], [0], [1], [0, 0, 1, 1], [], []>} : vector<32x128xf32>, vector<128x64xf32>, vector<32x64xf32> -> vector<32x64xf32>
    %38 = vector.extract_strided_slice %18 {offsets = [0, 128], sizes = [1, 64], strides = [1, 1]} : vector<1x512xf32> to vector<1x64xf32>
    %39 = vector.broadcast %38 : vector<1x64xf32> to vector<32x64xf32>
    %40 = arith.mulf %37, %39 : vector<32x64xf32>
    %41 = arith.addf %33, %40 : vector<32x64xf32>
    %c3 = arith.constant 3 : index
    %c0_26 = arith.constant 0 : index
    %c0_27 = arith.constant 0 : index
    %42 = vector.load %arg5[%c3, %c0_26, %c0_27] : memref<8x32x128xf32, #tpu.memory_space<vmem>>, vector<1x32x128xf32>
    %43 = vector.shape_cast %42 : vector<1x32x128xf32> to vector<32x128xf32>
    %44 = vector.extract_strided_slice %2 {offsets = [0, 192], sizes = [128, 64], strides = [1, 1]} : vector<128x512xf32> to vector<128x64xf32>
    %cst_28 = arith.constant dense<0.000000e+00> : vector<32x64xf32>
    %45 = tpu.matmul %43, %44, %cst_28 {dimension_numbers = #tpu.dot_dimension_numbers<[1], [0], [0], [1], [0, 0, 1, 1], [], []>} : vector<32x128xf32>, vector<128x64xf32>, vector<32x64xf32> -> vector<32x64xf32>
    %46 = vector.extract_strided_slice %18 {offsets = [0, 192], sizes = [1, 64], strides = [1, 1]} : vector<1x512xf32> to vector<1x64xf32>
    %47 = vector.broadcast %46 : vector<1x64xf32> to vector<32x64xf32>
    %48 = arith.mulf %45, %47 : vector<32x64xf32>
    %49 = arith.addf %41, %48 : vector<32x64xf32>
    %c4 = arith.constant 4 : index
    %c0_29 = arith.constant 0 : index
    %c0_30 = arith.constant 0 : index
    %50 = vector.load %arg5[%c4, %c0_29, %c0_30] : memref<8x32x128xf32, #tpu.memory_space<vmem>>, vector<1x32x128xf32>
    %51 = vector.shape_cast %50 : vector<1x32x128xf32> to vector<32x128xf32>
    %52 = vector.extract_strided_slice %2 {offsets = [0, 256], sizes = [128, 64], strides = [1, 1]} : vector<128x512xf32> to vector<128x64xf32>
    %cst_31 = arith.constant dense<0.000000e+00> : vector<32x64xf32>
    %53 = tpu.matmul %51, %52, %cst_31 {dimension_numbers = #tpu.dot_dimension_numbers<[1], [0], [0], [1], [0, 0, 1, 1], [], []>} : vector<32x128xf32>, vector<128x64xf32>, vector<32x64xf32> -> vector<32x64xf32>
    %54 = vector.extract_strided_slice %18 {offsets = [0, 256], sizes = [1, 64], strides = [1, 1]} : vector<1x512xf32> to vector<1x64xf32>
    %55 = vector.broadcast %54 : vector<1x64xf32> to vector<32x64xf32>
    %56 = arith.mulf %53, %55 : vector<32x64xf32>
    %57 = arith.addf %49, %56 : vector<32x64xf32>
    %c5 = arith.constant 5 : index
    %c0_32 = arith.constant 0 : index
    %c0_33 = arith.constant 0 : index
    %58 = vector.load %arg5[%c5, %c0_32, %c0_33] : memref<8x32x128xf32, #tpu.memory_space<vmem>>, vector<1x32x128xf32>
    %59 = vector.shape_cast %58 : vector<1x32x128xf32> to vector<32x128xf32>
    %60 = vector.extract_strided_slice %2 {offsets = [0, 320], sizes = [128, 64], strides = [1, 1]} : vector<128x512xf32> to vector<128x64xf32>
    %cst_34 = arith.constant dense<0.000000e+00> : vector<32x64xf32>
    %61 = tpu.matmul %59, %60, %cst_34 {dimension_numbers = #tpu.dot_dimension_numbers<[1], [0], [0], [1], [0, 0, 1, 1], [], []>} : vector<32x128xf32>, vector<128x64xf32>, vector<32x64xf32> -> vector<32x64xf32>
    %62 = vector.extract_strided_slice %18 {offsets = [0, 320], sizes = [1, 64], strides = [1, 1]} : vector<1x512xf32> to vector<1x64xf32>
    %63 = vector.broadcast %62 : vector<1x64xf32> to vector<32x64xf32>
    %64 = arith.mulf %61, %63 : vector<32x64xf32>
    %65 = arith.addf %57, %64 : vector<32x64xf32>
    %c6 = arith.constant 6 : index
    %c0_35 = arith.constant 0 : index
    %c0_36 = arith.constant 0 : index
    %66 = vector.load %arg5[%c6, %c0_35, %c0_36] : memref<8x32x128xf32, #tpu.memory_space<vmem>>, vector<1x32x128xf32>
    %67 = vector.shape_cast %66 : vector<1x32x128xf32> to vector<32x128xf32>
    %68 = vector.extract_strided_slice %2 {offsets = [0, 384], sizes = [128, 64], strides = [1, 1]} : vector<128x512xf32> to vector<128x64xf32>
    %cst_37 = arith.constant dense<0.000000e+00> : vector<32x64xf32>
    %69 = tpu.matmul %67, %68, %cst_37 {dimension_numbers = #tpu.dot_dimension_numbers<[1], [0], [0], [1], [0, 0, 1, 1], [], []>} : vector<32x128xf32>, vector<128x64xf32>, vector<32x64xf32> -> vector<32x64xf32>
    %70 = vector.extract_strided_slice %18 {offsets = [0, 384], sizes = [1, 64], strides = [1, 1]} : vector<1x512xf32> to vector<1x64xf32>
    %71 = vector.broadcast %70 : vector<1x64xf32> to vector<32x64xf32>
    %72 = arith.mulf %69, %71 : vector<32x64xf32>
    %73 = arith.addf %65, %72 : vector<32x64xf32>
    %c7 = arith.constant 7 : index
    %c0_38 = arith.constant 0 : index
    %c0_39 = arith.constant 0 : index
    %74 = vector.load %arg5[%c7, %c0_38, %c0_39] : memref<8x32x128xf32, #tpu.memory_space<vmem>>, vector<1x32x128xf32>
    %75 = vector.shape_cast %74 : vector<1x32x128xf32> to vector<32x128xf32>
    %76 = vector.extract_strided_slice %2 {offsets = [0, 448], sizes = [128, 64], strides = [1, 1]} : vector<128x512xf32> to vector<128x64xf32>
    %cst_40 = arith.constant dense<0.000000e+00> : vector<32x64xf32>
    %77 = tpu.matmul %75, %76, %cst_40 {dimension_numbers = #tpu.dot_dimension_numbers<[1], [0], [0], [1], [0, 0, 1, 1], [], []>} : vector<32x128xf32>, vector<128x64xf32>, vector<32x64xf32> -> vector<32x64xf32>
    %78 = vector.extract_strided_slice %18 {offsets = [0, 448], sizes = [1, 64], strides = [1, 1]} : vector<1x512xf32> to vector<1x64xf32>
    %79 = vector.broadcast %78 : vector<1x64xf32> to vector<32x64xf32>
    %80 = arith.mulf %77, %79 : vector<32x64xf32>
    %81 = arith.addf %73, %80 : vector<32x64xf32>
    %82 = vector.extract_strided_slice %81 {offsets = [0, 0], sizes = [16, 64], strides = [1, 1]} : vector<32x64xf32> to vector<16x64xf32>
    %83 = vector.extract_strided_slice %81 {offsets = [16, 0], sizes = [16, 64], strides = [1, 1]} : vector<32x64xf32> to vector<16x64xf32>
    %84 = tpu.concatenate %82, %83 in 1 : vector<16x64xf32>, vector<16x64xf32> -> vector<16x128xf32>
    %cst_41 = arith.constant dense<0.000000e+00> : vector<16xf32>
    %85 = vector.multi_reduction <add>, %84, %cst_41 [1] : vector<16x128xf32> to vector<16xf32>
    %86 = vector.shape_cast %85 : vector<16xf32> to vector<16x1xf32>
    %cst_42 = arith.constant 1.280000e+02 : f32
    %87 = vector.broadcast %cst_42 : f32 to vector<16x1xf32>
    %88 = arith.divf %86, %87 : vector<16x1xf32>
    %89 = vector.broadcast %88 : vector<16x1xf32> to vector<16x128xf32>
    %90 = arith.subf %84, %89 : vector<16x128xf32>
    %91 = arith.mulf %90, %90 : vector<16x128xf32>
    %cst_43 = arith.constant dense<0.000000e+00> : vector<16xf32>
    %92 = vector.multi_reduction <add>, %91, %cst_43 [1] : vector<16x128xf32> to vector<16xf32>
    %93 = vector.shape_cast %92 : vector<16xf32> to vector<16x1xf32>
    %cst_44 = arith.constant 1.280000e+02 : f32
    %94 = vector.broadcast %cst_44 : f32 to vector<16x1xf32>
    %95 = arith.divf %93, %94 : vector<16x1xf32>
    %96 = math.rsqrt %95 : vector<16x1xf32>
    %97 = vector.broadcast %96 : vector<16x1xf32> to vector<16x128xf32>
    %98 = arith.mulf %90, %97 : vector<16x128xf32>
    %c0_45 = arith.constant 0 : index
    %c0_46 = arith.constant 0 : index
    %99 = vector.load %arg6[%c0_45, %c0_46] : memref<16x1xf32, #tpu.memory_space<vmem>>, vector<16x1xf32>
    %100 = vector.broadcast %99 : vector<16x1xf32> to vector<16x128xf32>
    %101 = arith.mulf %98, %100 : vector<16x128xf32>
    %c0_47 = arith.constant 0 : index
    %c0_48 = arith.constant 0 : index
    %102 = vector.load %arg7[%c0_47, %c0_48] : memref<16x1xf32, #tpu.memory_space<vmem>>, vector<16x1xf32>
    %103 = vector.broadcast %102 : vector<16x1xf32> to vector<16x128xf32>
    %104 = arith.addf %101, %103 : vector<16x128xf32>
    %cst_49 = arith.constant 0.000000e+00 : f32
    %105 = vector.broadcast %cst_49 : f32 to vector<16x128xf32>
    %106 = arith.cmpf ogt, %104, %105 : vector<16x128xf32>
    %cst_50 = arith.constant 0.000000e+00 : f32
    %107 = vector.broadcast %cst_50 : f32 to vector<16x128xf32>
    %108 = arith.minimumf %104, %107 : vector<16x128xf32>
    %109 = math.exp %108 : vector<16x128xf32>
    %cst_51 = arith.constant 1.000000e+00 : f32
    %110 = vector.broadcast %cst_51 : f32 to vector<16x128xf32>
    %111 = arith.subf %109, %110 : vector<16x128xf32>
    %112 = arith.select %106, %104, %111 : vector<16x128xi1>, vector<16x128xf32>
    %c0_52 = arith.constant 0 : index
    %c0_53 = arith.constant 0 : index
    %113 = vector.load %arg8[%c0_52, %c0_53] : memref<128x128xf32, #tpu.memory_space<vmem>>, vector<128x128xf32>
    %cst_54 = arith.constant dense<0.000000e+00> : vector<16x128xf32>
    %114 = tpu.matmul %112, %113, %cst_54 {dimension_numbers = #tpu.dot_dimension_numbers<[1], [0], [0], [1], [0, 0, 1, 1], [], []>} : vector<16x128xf32>, vector<128x128xf32>, vector<16x128xf32> -> vector<16x128xf32>
    %115 = vector.extract_strided_slice %114 {offsets = [0, 0], sizes = [16, 32], strides = [1, 1]} : vector<16x128xf32> to vector<16x32xf32>
    %116 = vector.extract_strided_slice %114 {offsets = [0, 32], sizes = [16, 32], strides = [1, 1]} : vector<16x128xf32> to vector<16x32xf32>
    %117 = arith.maximumf %115, %116 : vector<16x32xf32>
    %118 = vector.extract_strided_slice %114 {offsets = [0, 64], sizes = [16, 32], strides = [1, 1]} : vector<16x128xf32> to vector<16x32xf32>
    %119 = vector.extract_strided_slice %114 {offsets = [0, 96], sizes = [16, 32], strides = [1, 1]} : vector<16x128xf32> to vector<16x32xf32>
    %120 = arith.maximumf %118, %119 : vector<16x32xf32>
    %121 = arith.maximumf %117, %120 : vector<16x32xf32>
    %c0_55 = arith.constant 0 : index
    %c0_56 = arith.constant 0 : index
    %122 = vector.load %arg9[%c0_55, %c0_56] : memref<32x384xf32, #tpu.memory_space<vmem>>, vector<32x384xf32>
    %cst_57 = arith.constant dense<0.000000e+00> : vector<16x384xf32>
    %123 = tpu.matmul %121, %122, %cst_57 {dimension_numbers = #tpu.dot_dimension_numbers<[1], [0], [0], [1], [0, 0, 1, 1], [], []>} : vector<16x32xf32>, vector<32x384xf32>, vector<16x384xf32> -> vector<16x384xf32>
    %c0_58 = arith.constant 0 : index
    %c0_59 = arith.constant 0 : index
    %124 = vector.load %arg10[%c0_58, %c0_59] : memref<16x9xf32, #tpu.memory_space<vmem>>, vector<16x9xf32>
    %125 = vector.extract_strided_slice %123 {offsets = [0, 0], sizes = [16, 32], strides = [1, 1]} : vector<16x384xf32> to vector<16x32xf32>
    %126 = vector.extract_strided_slice %124 {offsets = [0, 0], sizes = [16, 1], strides = [1, 1]} : vector<16x9xf32> to vector<16x1xf32>
    %127 = vector.broadcast %126 : vector<16x1xf32> to vector<16x32xf32>
    %128 = arith.mulf %125, %127 : vector<16x32xf32>
    %129 = vector.extract_strided_slice %123 {offsets = [0, 32], sizes = [16, 32], strides = [1, 1]} : vector<16x384xf32> to vector<16x32xf32>
    %130 = vector.extract_strided_slice %124 {offsets = [0, 1], sizes = [16, 1], strides = [1, 1]} : vector<16x9xf32> to vector<16x1xf32>
    %131 = vector.broadcast %130 : vector<16x1xf32> to vector<16x32xf32>
    %132 = arith.mulf %129, %131 : vector<16x32xf32>
    %133 = arith.addf %128, %132 : vector<16x32xf32>
    %134 = vector.extract_strided_slice %123 {offsets = [0, 64], sizes = [16, 32], strides = [1, 1]} : vector<16x384xf32> to vector<16x32xf32>
    %135 = vector.extract_strided_slice %124 {offsets = [0, 2], sizes = [16, 1], strides = [1, 1]} : vector<16x9xf32> to vector<16x1xf32>
    %136 = vector.broadcast %135 : vector<16x1xf32> to vector<16x32xf32>
    %137 = arith.mulf %134, %136 : vector<16x32xf32>
    %138 = arith.addf %133, %137 : vector<16x32xf32>
    %139 = vector.extract_strided_slice %123 {offsets = [0, 96], sizes = [16, 32], strides = [1, 1]} : vector<16x384xf32> to vector<16x32xf32>
    %140 = vector.extract_strided_slice %124 {offsets = [0, 3], sizes = [16, 1], strides = [1, 1]} : vector<16x9xf32> to vector<16x1xf32>
    %141 = vector.broadcast %140 : vector<16x1xf32> to vector<16x32xf32>
    %142 = arith.mulf %139, %141 : vector<16x32xf32>
    %143 = arith.addf %138, %142 : vector<16x32xf32>
    %144 = vector.extract_strided_slice %123 {offsets = [0, 128], sizes = [16, 32], strides = [1, 1]} : vector<16x384xf32> to vector<16x32xf32>
    %145 = vector.extract_strided_slice %124 {offsets = [0, 4], sizes = [16, 1], strides = [1, 1]} : vector<16x9xf32> to vector<16x1xf32>
    %146 = vector.broadcast %145 : vector<16x1xf32> to vector<16x32xf32>
    %147 = arith.mulf %144, %146 : vector<16x32xf32>
    %148 = arith.addf %143, %147 : vector<16x32xf32>
    %149 = vector.extract_strided_slice %123 {offsets = [0, 160], sizes = [16, 32], strides = [1, 1]} : vector<16x384xf32> to vector<16x32xf32>
    %150 = vector.extract_strided_slice %124 {offsets = [0, 5], sizes = [16, 1], strides = [1, 1]} : vector<16x9xf32> to vector<16x1xf32>
    %151 = vector.broadcast %150 : vector<16x1xf32> to vector<16x32xf32>
    %152 = arith.mulf %149, %151 : vector<16x32xf32>
    %153 = arith.addf %148, %152 : vector<16x32xf32>
    %154 = vector.extract_strided_slice %123 {offsets = [0, 192], sizes = [16, 32], strides = [1, 1]} : vector<16x384xf32> to vector<16x32xf32>
    %155 = vector.extract_strided_slice %124 {offsets = [0, 6], sizes = [16, 1], strides = [1, 1]} : vector<16x9xf32> to vector<16x1xf32>
    %156 = vector.broadcast %155 : vector<16x1xf32> to vector<16x32xf32>
    %157 = arith.mulf %154, %156 : vector<16x32xf32>
    %158 = arith.addf %153, %157 : vector<16x32xf32>
    %159 = vector.extract_strided_slice %123 {offsets = [0, 224], sizes = [16, 32], strides = [1, 1]} : vector<16x384xf32> to vector<16x32xf32>
    %160 = vector.extract_strided_slice %124 {offsets = [0, 7], sizes = [16, 1], strides = [1, 1]} : vector<16x9xf32> to vector<16x1xf32>
    %161 = vector.broadcast %160 : vector<16x1xf32> to vector<16x32xf32>
    %162 = arith.mulf %159, %161 : vector<16x32xf32>
    %163 = arith.addf %158, %162 : vector<16x32xf32>
    %164 = vector.extract_strided_slice %123 {offsets = [0, 256], sizes = [16, 32], strides = [1, 1]} : vector<16x384xf32> to vector<16x32xf32>
    %165 = vector.extract_strided_slice %124 {offsets = [0, 8], sizes = [16, 1], strides = [1, 1]} : vector<16x9xf32> to vector<16x1xf32>
    %166 = vector.broadcast %165 : vector<16x1xf32> to vector<16x32xf32>
    %167 = arith.mulf %164, %166 : vector<16x32xf32>
    %168 = arith.addf %163, %167 : vector<16x32xf32>
    %c0_60 = arith.constant 0 : index
    %c0_61 = arith.constant 0 : index
    %169 = vector.load %arg11[%c0_60, %c0_61] : memref<8x16xf32, #tpu.memory_space<vmem>>, vector<8x16xf32>
    %cst_62 = arith.constant dense<0.000000e+00> : vector<8x32xf32>
    %170 = tpu.matmul %169, %168, %cst_62 {dimension_numbers = #tpu.dot_dimension_numbers<[1], [0], [0], [1], [0, 0, 1, 1], [], []>} : vector<8x16xf32>, vector<16x32xf32>, vector<8x32xf32> -> vector<8x32xf32>
    %cst_63 = arith.constant dense<0.000000e+00> : vector<8xf32>
    %171 = vector.multi_reduction <add>, %170, %cst_63 [1] : vector<8x32xf32> to vector<8xf32>
    %172 = vector.shape_cast %171 : vector<8xf32> to vector<8x1xf32>
    %cst_64 = arith.constant 3.200000e+01 : f32
    %173 = vector.broadcast %cst_64 : f32 to vector<8x1xf32>
    %174 = arith.divf %172, %173 : vector<8x1xf32>
    %175 = vector.broadcast %174 : vector<8x1xf32> to vector<8x32xf32>
    %176 = arith.subf %170, %175 : vector<8x32xf32>
    %177 = arith.mulf %176, %176 : vector<8x32xf32>
    %cst_65 = arith.constant dense<0.000000e+00> : vector<8xf32>
    %178 = vector.multi_reduction <add>, %177, %cst_65 [1] : vector<8x32xf32> to vector<8xf32>
    %179 = vector.shape_cast %178 : vector<8xf32> to vector<8x1xf32>
    %cst_66 = arith.constant 3.200000e+01 : f32
    %180 = vector.broadcast %cst_66 : f32 to vector<8x1xf32>
    %181 = arith.divf %179, %180 : vector<8x1xf32>
    %182 = math.rsqrt %181 : vector<8x1xf32>
    %183 = vector.broadcast %182 : vector<8x1xf32> to vector<8x32xf32>
    %184 = arith.mulf %176, %183 : vector<8x32xf32>
    %c0_67 = arith.constant 0 : index
    %c0_68 = arith.constant 0 : index
    %185 = vector.load %arg12[%c0_67, %c0_68] : memref<8x1xf32, #tpu.memory_space<vmem>>, vector<8x1xf32>
    %186 = vector.broadcast %185 : vector<8x1xf32> to vector<8x32xf32>
    %187 = arith.mulf %184, %186 : vector<8x32xf32>
    %c0_69 = arith.constant 0 : index
    %c0_70 = arith.constant 0 : index
    %188 = vector.load %arg13[%c0_69, %c0_70] : memref<8x1xf32, #tpu.memory_space<vmem>>, vector<8x1xf32>
    %189 = vector.broadcast %188 : vector<8x1xf32> to vector<8x32xf32>
    %190 = arith.addf %187, %189 : vector<8x32xf32>
    %cst_71 = arith.constant 0.000000e+00 : f32
    %191 = vector.broadcast %cst_71 : f32 to vector<8x32xf32>
    %192 = arith.cmpf ogt, %190, %191 : vector<8x32xf32>
    %cst_72 = arith.constant 0.000000e+00 : f32
    %193 = vector.broadcast %cst_72 : f32 to vector<8x32xf32>
    %194 = arith.minimumf %190, %193 : vector<8x32xf32>
    %195 = math.exp %194 : vector<8x32xf32>
    %cst_73 = arith.constant 1.000000e+00 : f32
    %196 = vector.broadcast %cst_73 : f32 to vector<8x32xf32>
    %197 = arith.subf %195, %196 : vector<8x32xf32>
    %198 = arith.select %192, %190, %197 : vector<8x32xi1>, vector<8x32xf32>
    %c0_74 = arith.constant 0 : index
    %c0_75 = arith.constant 0 : index
    %199 = vector.load %arg14[%c0_74, %c0_75] : memref<32x32xf32, #tpu.memory_space<vmem>>, vector<32x32xf32>
    %cst_76 = arith.constant dense<0.000000e+00> : vector<8x32xf32>
    %200 = tpu.matmul %198, %199, %cst_76 {dimension_numbers = #tpu.dot_dimension_numbers<[1], [0], [0], [1], [0, 0, 1, 1], [], []>} : vector<8x32xf32>, vector<32x32xf32>, vector<8x32xf32> -> vector<8x32xf32>
    %201 = vector.extract_strided_slice %200 {offsets = [0, 0], sizes = [8, 4], strides = [1, 1]} : vector<8x32xf32> to vector<8x4xf32>
    %202 = vector.extract_strided_slice %200 {offsets = [0, 4], sizes = [8, 4], strides = [1, 1]} : vector<8x32xf32> to vector<8x4xf32>
    %203 = arith.maximumf %201, %202 : vector<8x4xf32>
    %204 = vector.extract_strided_slice %200 {offsets = [0, 8], sizes = [8, 4], strides = [1, 1]} : vector<8x32xf32> to vector<8x4xf32>
    %205 = arith.maximumf %203, %204 : vector<8x4xf32>
    %206 = vector.extract_strided_slice %200 {offsets = [0, 12], sizes = [8, 4], strides = [1, 1]} : vector<8x32xf32> to vector<8x4xf32>
    %207 = arith.maximumf %205, %206 : vector<8x4xf32>
    %208 = vector.extract_strided_slice %200 {offsets = [0, 16], sizes = [8, 4], strides = [1, 1]} : vector<8x32xf32> to vector<8x4xf32>
    %209 = arith.maximumf %207, %208 : vector<8x4xf32>
    %210 = vector.extract_strided_slice %200 {offsets = [0, 20], sizes = [8, 4], strides = [1, 1]} : vector<8x32xf32> to vector<8x4xf32>
    %211 = arith.maximumf %209, %210 : vector<8x4xf32>
    %212 = vector.extract_strided_slice %200 {offsets = [0, 24], sizes = [8, 4], strides = [1, 1]} : vector<8x32xf32> to vector<8x4xf32>
    %213 = arith.maximumf %211, %212 : vector<8x4xf32>
    %214 = vector.extract_strided_slice %200 {offsets = [0, 28], sizes = [8, 4], strides = [1, 1]} : vector<8x32xf32> to vector<8x4xf32>
    %215 = arith.maximumf %213, %214 : vector<8x4xf32>
    %c0_77 = arith.constant 0 : index
    %c0_78 = arith.constant 0 : index
    %216 = vector.load %arg15[%c0_77, %c0_78] : memref<8x4xf32, #tpu.memory_space<vmem>>, vector<8x4xf32>
    %217 = arith.mulf %215, %216 : vector<8x4xf32>
    %218 = vector.extract_strided_slice %217 {offsets = [0, 0], sizes = [8, 2], strides = [1, 1]} : vector<8x4xf32> to vector<8x2xf32>
    %cst_79 = arith.constant dense<0.000000e+00> : vector<8xf32>
    %219 = vector.multi_reduction <add>, %218, %cst_79 [1] : vector<8x2xf32> to vector<8xf32>
    %220 = vector.shape_cast %219 : vector<8xf32> to vector<8x1xf32>
    %cst_80 = arith.constant dense<0.000000e+00> : vector<1xf32>
    %221 = vector.multi_reduction <add>, %220, %cst_80 [0] : vector<8x1xf32> to vector<1xf32>
    %222 = vector.shape_cast %221 : vector<1xf32> to vector<1x1xf32>
    %223 = vector.extract_strided_slice %217 {offsets = [0, 2], sizes = [8, 2], strides = [1, 1]} : vector<8x4xf32> to vector<8x2xf32>
    %cst_81 = arith.constant dense<0.000000e+00> : vector<8xf32>
    %224 = vector.multi_reduction <add>, %223, %cst_81 [1] : vector<8x2xf32> to vector<8xf32>
    %225 = vector.shape_cast %224 : vector<8xf32> to vector<8x1xf32>
    %cst_82 = arith.constant dense<0.000000e+00> : vector<1xf32>
    %226 = vector.multi_reduction <add>, %225, %cst_82 [0] : vector<8x1xf32> to vector<1xf32>
    %227 = vector.shape_cast %226 : vector<1xf32> to vector<1x1xf32>
    %228 = tpu.concatenate %222, %227 in 1 : vector<1x1xf32>, vector<1x1xf32> -> vector<1x2xf32>
    %c0_83 = arith.constant 0 : index
    %c0_84 = arith.constant 0 : index
    %229 = vector.load %arg16[%c0_83, %c0_84] : memref<1x1xf32, #tpu.memory_space<vmem>>, vector<1x1xf32>
    %230 = vector.broadcast %229 : vector<1x1xf32> to vector<1x2xf32>
    %231 = arith.addf %228, %230 : vector<1x2xf32>
    %cst_85 = arith.constant 0.000000e+00 : f32
    %232 = vector.broadcast %cst_85 : f32 to vector<1x2xf32>
    %233 = arith.subf %232, %231 : vector<1x2xf32>
    %234 = math.exp %233 : vector<1x2xf32>
    %cst_86 = arith.constant 1.000000e+00 : f32
    %235 = vector.broadcast %cst_86 : f32 to vector<1x2xf32>
    %236 = arith.addf %235, %234 : vector<1x2xf32>
    %cst_87 = arith.constant 1.000000e+00 : f32
    %237 = vector.broadcast %cst_87 : f32 to vector<1x2xf32>
    %238 = arith.divf %237, %236 : vector<1x2xf32>
    %c0_88 = arith.constant 0 : index
    %c0_89 = arith.constant 0 : index
    %239 = vector.load %arg17[%c0_88, %c0_89] : memref<1x2xf32, #tpu.memory_space<vmem>>, vector<1x2xf32>
    tpu.vector_store %arg17[%c0_88, %c0_89], %238 {strides = array<i32>} : memref<1x2xf32, #tpu.memory_space<vmem>>, vector<1x2xf32>,
    return
  }
}

</mosaic_0001>

<llo_original>
// kernel: discriminator_channel_62_pallas.1
$region0: #{discriminator_channel_62_pallas.1}
  #allocation0 [shape = 'u32[]', space=smem, size = 0x4, offset = 0x4, fixed_abs, tag = 'smem constant byte address 0x4 - core index']
  #allocation1 [shape = 'u32[144,128]{1,0:T(1,128)}', space=vmem, size = 0x12000, scoped, tag = 'internal scratch']
  #allocation2 [shape = 'f32[1,1]{1,0:T(1,128)S(1)}', space=vmem, size = 0x200, scoped, tag = 'scoped memory for discriminator_channel_62_pallas.1']
  %s0 = inlined_call_operand.vmem [shape: f32[128,128], index: 0, kind: input, shape index: {}]
  %s1 = inlined_call_operand.vmem [shape: f32[128,512], index: 1, kind: input, shape index: {}]
  %s2 = inlined_call_operand.vmem [shape: f32[512,8], index: 2, kind: input, shape index: {}]
  %s3 = inlined_call_operand.vmem [shape: f32[8,512], index: 3, kind: input, shape index: {}]
  %s4 = inlined_call_operand.vmem [shape: f32[1,8], index: 4, kind: input, shape index: {}]
  %s5 = inlined_call_operand.vmem [shape: f32[8,32,128], index: 5, kind: input, shape index: {}]
  %s6 = inlined_call_operand.vmem [shape: f32[16,1], index: 6, kind: input, shape index: {}]
  %s7 = inlined_call_operand.vmem [shape: f32[16,1], index: 7, kind: input, shape index: {}]
  %s8 = inlined_call_operand.vmem [shape: f32[128,128], index: 8, kind: input, shape index: {}]
  %s9 = inlined_call_operand.vmem [shape: f32[32,384], index: 9, kind: input, shape index: {}]
  %s10 = inlined_call_operand.vmem [shape: f32[16,9], index: 10, kind: input, shape index: {}]
  %s11 = inlined_call_operand.vmem [shape: f32[8,16], index: 11, kind: input, shape index: {}]
  %s12 = inlined_call_operand.vmem [shape: f32[8,1], index: 12, kind: input, shape index: {}]
  %s13 = inlined_call_operand.vmem [shape: f32[8,1], index: 13, kind: input, shape index: {}]
  %s14 = inlined_call_operand.vmem [shape: f32[32,32], index: 14, kind: input, shape index: {}]
  %s15 = inlined_call_operand.vmem [shape: f32[8,4], index: 15, kind: input, shape index: {}]
  %s16 = inlined_call_operand.<no memory space> [shape: f32[1,1], index: 16, kind: input, shape index: {}]
  %s17 = inlined_call_operand.hbm [shape: f32[1,2], index: 17, kind: output, shape index: {}]
  %s18 = sld [smem:[#allocation0]]
  $region78: #{discriminator_channel_62_pallas.1} parent=0
    _
  %s20 = ssub.s32 1, %s18
  %s21 = scalar_select 0, %s20, %s18
  %v22 = vstv %s16
  %23 = vst [vmem:[#allocation2] sm:$0x1] %v22
  $region1: #{discriminator_channel_62_pallas.1} parent=0
    #allocation3 [shape = 'u8[512]{0}', space=vmem, size = 0x400, scoped, tag = 'output window, operand 0, single buffered']
    #allocation4 [shape = 's32[1]{0}', space=sflag, size = 0x4, scoped, tag = 'scoped memory for discriminator_channel_62_pallas.1']
    %24 = vsyncpa [#allocation4], 0
    // Predicated region
    $region2: #{discriminator_channel_62_pallas.1} parent=1 // pred_check
      _
    $region3: #{discriminator_channel_62_pallas.1} parent=1 // pred_check_branch
      %26 = sbr.rel (0) target = $region5
    $region4: #{discriminator_channel_62_pallas.1} parent=1 // pred_region
      _
    $region5: #{discriminator_channel_62_pallas.1} parent=1 // pred_fallthru
      _
    // Predicated region
    $region6: #{discriminator_channel_62_pallas.1} parent=1 // pred_check
      _
    $region7: #{discriminator_channel_62_pallas.1} parent=1 // pred_check_branch
      %28 = sbr.rel (0) target = $region9
    $region8: #{discriminator_channel_62_pallas.1} parent=1 // pred_region
      _
    $region9: #{discriminator_channel_62_pallas.1} parent=1 // pred_fallthru
      _
    // Predicated region
    $region10: #{discriminator_channel_62_pallas.1} parent=1 // pred_check
      _
    $region11: #{discriminator_channel_62_pallas.1} parent=1 // pred_check_branch
      %30 = sbr.rel (0) target = $region13
    $region12: #{discriminator_channel_62_pallas.1} parent=1 // pred_region
      _
    $region13: #{discriminator_channel_62_pallas.1} parent=1 // pred_fallthru
      _
    // Predicated region
    $region14: #{discriminator_channel_62_pallas.1} parent=1 // pred_check
      _
    $region15: #{discriminator_channel_62_pallas.1} parent=1 // pred_check_branch
      %32 = sbr.rel (0) target = $region17
    $region16: #{discriminator_channel_62_pallas.1} parent=1 // pred_region
      _
    $region17: #{discriminator_channel_62_pallas.1} parent=1 // pred_fallthru
      _
    // Predicated region
    $region18: #{discriminator_channel_62_pallas.1} parent=1 // pred_check
      _
    $region19: #{discriminator_channel_62_pallas.1} parent=1 // pred_check_branch
      %34 = sbr.rel (0) target = $region21
    $region20: #{discriminator_channel_62_pallas.1} parent=1 // pred_region
      _
    $region21: #{discriminator_channel_62_pallas.1} parent=1 // pred_fallthru
      _
    // Predicated region
    $region22: #{discriminator_channel_62_pallas.1} parent=1 // pred_check
      _
    $region23: #{discriminator_channel_62_pallas.1} parent=1 // pred_check_branch
      %36 = sbr.rel (0) target = $region25
    $region24: #{discriminator_channel_62_pallas.1} parent=1 // pred_region
      _
    $region25: #{discriminator_channel_62_pallas.1} parent=1 // pred_fallthru
      _
    // Predicated region
    $region26: #{discriminator_channel_62_pallas.1} parent=1 // pred_check
      _
    $region27: #{discriminator_channel_62_pallas.1} parent=1 // pred_check_branch
      %38 = sbr.rel (0) target = $region29
    $region28: #{discriminator_channel_62_pallas.1} parent=1 // pred_region
      _
    $region29: #{discriminator_channel_62_pallas.1} parent=1 // pred_fallthru
      _
    // Predicated region
    $region30: #{discriminator_channel_62_pallas.1} parent=1 // pred_check
      _
    $region31: #{discriminator_channel_62_pallas.1} parent=1 // pred_check_branch
      %40 = sbr.rel (0) target = $region33
    $region32: #{discriminator_channel_62_pallas.1} parent=1 // pred_region
      _
    $region33: #{discriminator_channel_62_pallas.1} parent=1 // pred_fallthru
      _
    // Predicated region
    $region34: #{discriminator_channel_62_pallas.1} parent=1 // pred_check
      _
    $region35: #{discriminator_channel_62_pallas.1} parent=1 // pred_check_branch
      %42 = sbr.rel (0) target = $region37
    $region36: #{discriminator_channel_62_pallas.1} parent=1 // pred_region
      _
    $region37: #{discriminator_channel_62_pallas.1} parent=1 // pred_fallthru
      _
    // Predicated region
    $region38: #{discriminator_channel_62_pallas.1} parent=1 // pred_check
      _
    $region39: #{discriminator_channel_62_pallas.1} parent=1 // pred_check_branch
      %44 = sbr.rel (0) target = $region41
    $region40: #{discriminator_channel_62_pallas.1} parent=1 // pred_region
      _
    $region41: #{discriminator_channel_62_pallas.1} parent=1 // pred_fallthru
      _
    // Predicated region
    $region42: #{discriminator_channel_62_pallas.1} parent=1 // pred_check
      _
    $region43: #{discriminator_channel_62_pallas.1} parent=1 // pred_check_branch
      %46 = sbr.rel (0) target = $region45
    $region44: #{discriminator_channel_62_pallas.1} parent=1 // pred_region
      _
    $region45: #{discriminator_channel_62_pallas.1} parent=1 // pred_fallthru
      _
    // Predicated region
    $region46: #{discriminator_channel_62_pallas.1} parent=1 // pred_check
      _
    $region47: #{discriminator_channel_62_pallas.1} parent=1 // pred_check_branch
      %48 = sbr.rel (0) target = $region49
    $region48: #{discriminator_channel_62_pallas.1} parent=1 // pred_region
      _
    $region49: #{discriminator_channel_62_pallas.1} parent=1 // pred_fallthru
      _
    // Predicated region
    $region50: #{discriminator_channel_62_pallas.1} parent=1 // pred_check
      _
    $region51: #{discriminator_channel_62_pallas.1} parent=1 // pred_check_branch
      %50 = sbr.rel (0) target = $region53
    $region52: #{discriminator_channel_62_pallas.1} parent=1 // pred_region
      _
    $region53: #{discriminator_channel_62_pallas.1} parent=1 // pred_fallthru
      _
    // Predicated region
    $region54: #{discriminator_channel_62_pallas.1} parent=1 // pred_check
      _
    $region55: #{discriminator_channel_62_pallas.1} parent=1 // pred_check_branch
      %52 = sbr.rel (0) target = $region57
    $region56: #{discriminator_channel_62_pallas.1} parent=1 // pred_region
      _
    $region57: #{discriminator_channel_62_pallas.1} parent=1 // pred_fallthru
      _
    // Predicated region
    $region58: #{discriminator_channel_62_pallas.1} parent=1 // pred_check
      _
    $region59: #{discriminator_channel_62_pallas.1} parent=1 // pred_check_branch
      %54 = sbr.rel (0) target = $region61
    $region60: #{discriminator_channel_62_pallas.1} parent=1 // pred_region
      _
    $region61: #{discriminator_channel_62_pallas.1} parent=1 // pred_fallthru
      _
    // Predicated region
    $region62: #{discriminator_channel_62_pallas.1} parent=1 // pred_check
      _
    $region63: #{discriminator_channel_62_pallas.1} parent=1 // pred_check_branch
      %56 = sbr.rel (0) target = $region65
    $region64: #{discriminator_channel_62_pallas.1} parent=1 // pred_region
      _
    $region65: #{discriminator_channel_62_pallas.1} parent=1 // pred_fallthru
      _
    // Predicated region
    $region66: #{discriminator_channel_62_pallas.1} parent=1 // pred_check
      _
    $region67: #{discriminator_channel_62_pallas.1} parent=1 // pred_check_branch
      %58 = sbr.rel (0) target = $region69
    $region68: #{discriminator_channel_62_pallas.1} parent=1 // pred_region
      _
    $region69: #{discriminator_channel_62_pallas.1} parent=1 // pred_fallthru
      _
    %v59 = vld [vmem:[%s0] sm:$0xff]
    %v60 = vld [vmem:[%s0 + $0x8] sm:$0xff]
    %v61 = vld [vmem:[%s0 + $0x10] sm:$0xff]
    %v62 = vld [vmem:[%s0 + $0x18] sm:$0xff]
    %v63 = vld [vmem:[%s0 + $0x20] sm:$0xff]
    %v64 = vld [vmem:[%s0 + $0x28] sm:$0xff]
    %v65 = vld [vmem:[%s0 + $0x30] sm:$0xff]
    %v66 = vld [vmem:[%s0 + $0x38] sm:$0xff]
    %v67 = vld [vmem:[%s0 + $0x40] sm:$0xff]
    %v68 = vld [vmem:[%s0 + $0x48] sm:$0xff]
    %v69 = vld [vmem:[%s0 + $0x50] sm:$0xff]
    %v70 = vld [vmem:[%s0 + $0x58] sm:$0xff]
    %v71 = vld [vmem:[%s0 + $0x60] sm:$0xff]
    %v72 = vld [vmem:[%s0 + $0x68] sm:$0xff]
    %v73 = vld [vmem:[%s0 + $0x70] sm:$0xff]
    %v74 = vld [vmem:[%s0 + $0x78] sm:$0xff]
    %v75 = vld [vmem:[%s1] sm:$0xff]
    %v76 = vld [vmem:[%s1 + $0x8] sm:$0xff]
    %v77 = vld [vmem:[%s1 + $0x10] sm:$0xff]
    %v78 = vld [vmem:[%s1 + $0x18] sm:$0xff]
    %v79 = vld [vmem:[%s1 + $0x20] sm:$0xff]
    %v80 = vld [vmem:[%s1 + $0x28] sm:$0xff]
    %v81 = vld [vmem:[%s1 + $0x30] sm:$0xff]
    %v82 = vld [vmem:[%s1 + $0x38] sm:$0xff]
    %v83 = vld [vmem:[%s1 + $0x40] sm:$0xff]
    %v84 = vld [vmem:[%s1 + $0x48] sm:$0xff]
    %v85 = vld [vmem:[%s1 + $0x50] sm:$0xff]
    %v86 = vld [vmem:[%s1 + $0x58] sm:$0xff]
    %v87 = vld [vmem:[%s1 + $0x60] sm:$0xff]
    %v88 = vld [vmem:[%s1 + $0x68] sm:$0xff]
    %v89 = vld [vmem:[%s1 + $0x70] sm:$0xff]
    %v90 = vld [vmem:[%s1 + $0x78] sm:$0xff]
    %v91 = vld [vmem:[%s1 + $0x80] sm:$0xff]
    %v92 = vld [vmem:[%s1 + $0x88] sm:$0xff]
    %v93 = vld [vmem:[%s1 + $0x90] sm:$0xff]
    %v94 = vld [vmem:[%s1 + $0x98] sm:$0xff]
    %v95 = vld [vmem:[%s1 + $0xa0] sm:$0xff]
    %v96 = vld [vmem:[%s1 + $0xa8] sm:$0xff]
    %v97 = vld [vmem:[%s1 + $0xb0] sm:$0xff]
    %v98 = vld [vmem:[%s1 + $0xb8] sm:$0xff]
    %v99 = vld [vmem:[%s1 + $0xc0] sm:$0xff]
    %v100 = vld [vmem:[%s1 + $0xc8] sm:$0xff]
    %v101 = vld [vmem:[%s1 + $0xd0] sm:$0xff]
    %v102 = vld [vmem:[%s1 + $0xd8] sm:$0xff]
    %v103 = vld [vmem:[%s1 + $0xe0] sm:$0xff]
    %v104 = vld [vmem:[%s1 + $0xe8] sm:$0xff]
    %v105 = vld [vmem:[%s1 + $0xf0] sm:$0xff]
    %v106 = vld [vmem:[%s1 + $0xf8] sm:$0xff]
    %v107 = vld [vmem:[%s1 + $0x100] sm:$0xff]
    %v108 = vld [vmem:[%s1 + $0x108] sm:$0xff]
    %v109 = vld [vmem:[%s1 + $0x110] sm:$0xff]
    %v110 = vld [vmem:[%s1 + $0x118] sm:$0xff]
    %v111 = vld [vmem:[%s1 + $0x120] sm:$0xff]
    %v112 = vld [vmem:[%s1 + $0x128] sm:$0xff]
    %v113 = vld [vmem:[%s1 + $0x130] sm:$0xff]
    %v114 = vld [vmem:[%s1 + $0x138] sm:$0xff]
    %v115 = vld [vmem:[%s1 + $0x140] sm:$0xff]
    %v116 = vld [vmem:[%s1 + $0x148] sm:$0xff]
    %v117 = vld [vmem:[%s1 + $0x150] sm:$0xff]
    %v118 = vld [vmem:[%s1 + $0x158] sm:$0xff]
    %v119 = vld [vmem:[%s1 + $0x160] sm:$0xff]
    %v120 = vld [vmem:[%s1 + $0x168] sm:$0xff]
    %v121 = vld [vmem:[%s1 + $0x170] sm:$0xff]
    %v122 = vld [vmem:[%s1 + $0x178] sm:$0xff]
    %v123 = vld [vmem:[%s1 + $0x180] sm:$0xff]
    %v124 = vld [vmem:[%s1 + $0x188] sm:$0xff]
    %v125 = vld [vmem:[%s1 + $0x190] sm:$0xff]
    %v126 = vld [vmem:[%s1 + $0x198] sm:$0xff]
    %v127 = vld [vmem:[%s1 + $0x1a0] sm:$0xff]
    %v128 = vld [vmem:[%s1 + $0x1a8] sm:$0xff]
    %v129 = vld [vmem:[%s1 + $0x1b0] sm:$0xff]
    %v130 = vld [vmem:[%s1 + $0x1b8] sm:$0xff]
    %v131 = vld [vmem:[%s1 + $0x1c0] sm:$0xff]
    %v132 = vld [vmem:[%s1 + $0x1c8] sm:$0xff]
    %v133 = vld [vmem:[%s1 + $0x1d0] sm:$0xff]
    %v134 = vld [vmem:[%s1 + $0x1d8] sm:$0xff]
    %v135 = vld [vmem:[%s1 + $0x1e0] sm:$0xff]
    %v136 = vld [vmem:[%s1 + $0x1e8] sm:$0xff]
    %v137 = vld [vmem:[%s1 + $0x1f0] sm:$0xff]
    %v138 = vld [vmem:[%s1 + $0x1f8] sm:$0xff]
    %139 = vmatprep.subr.mxu0 %v76
    %140 = vmatpush1.msra.mxu0 %v75
    %141 = vmatprep.subr.mxu0 %v80
    %142 = vmatpush1.msra.mxu0 %v79
    %143 = vmatprep.subr.mxu0 %v84
    %144 = vmatpush1.msra.mxu0 %v83
    %145 = vmatprep.subr.mxu0 %v88
    %146 = vmatpush1.msra.mxu0 %v87
    %147 = vmatprep.subr.mxu0 %v92
    %148 = vmatpush1.msra.mxu0 %v91
    %149 = vmatprep.subr.mxu0 %v96
    %150 = vmatpush1.msra.mxu0 %v95
    %151 = vmatprep.subr.mxu0 %v100
    %152 = vmatpush1.msra.mxu0 %v99
    %153 = vmatprep.subr.mxu0 %v104
    %154 = vmatpush1.msra.mxu0 %v103
    %155 = vmatprep.subr.mxu0 %v108
    %156 = vmatpush1.msra.mxu0 %v107
    %157 = vmatprep.subr.mxu0 %v112
    %158 = vmatpush1.msra.mxu0 %v111
    %159 = vmatprep.subr.mxu0 %v116
    %160 = vmatpush1.msra.mxu0 %v115
    %161 = vmatprep.subr.mxu0 %v120
    %162 = vmatpush1.msra.mxu0 %v119
    %163 = vmatprep.subr.mxu0 %v124
    %164 = vmatpush1.msra.mxu0 %v123
    %165 = vmatprep.subr.mxu0 %v128
    %166 = vmatpush1.msra.mxu0 %v127
    %167 = vmatprep.subr.mxu0 %v132
    %168 = vmatpush1.msra.mxu0 %v131
    %169 = vmatprep.subr.mxu0 %v136
    %170 = vmatpush1.msra.mxu0 %v135
    %171 = vmatprep.subr.mxu0 0.0
    %172 = vmatpush1.msra.mxu0 0.0
    %173 = vmatprep.subr.mxu0 0.0
    %174 = vmatpush1.msra.mxu0 0.0
    %175 = vmatprep.subr.mxu0 0.0
    %176 = vmatpush1.msra.mxu0 0.0
    %177 = vmatprep.subr.mxu0 0.0
    %178 = vmatpush1.msra.mxu0 0.0
    %179 = vmatprep.subr.mxu0 0.0
    %180 = vmatpush1.msra.mxu0 0.0
    %181 = vmatprep.subr.mxu0 0.0
    %182 = vmatpush1.msra.mxu0 0.0
    %183 = vmatprep.subr.mxu0 0.0
    %184 = vmatpush1.msra.mxu0 0.0
    %185 = vmatprep.subr.mxu0 0.0
    %186 = vmatpush1.msra.mxu0 0.0
    %187 = vmatprep.subr.mxu0 0.0
    %188 = vmatpush1.msra.mxu0 0.0
    %189 = vmatprep.subr.mxu0 0.0
    %190 = vmatpush1.msra.mxu0 0.0
    %191 = vmatprep.subr.mxu0 0.0
    %192 = vmatpush1.msra.mxu0 0.0
    %193 = vmatprep.subr.mxu0 0.0
    %194 = vmatpush1.msra.mxu0 0.0
    %195 = vmatprep.subr.mxu0 0.0
    %196 = vmatpush1.msra.mxu0 0.0
    %197 = vmatprep.subr.mxu0 0.0
    %198 = vmatpush1.msra.mxu0 0.0
    %199 = vmatprep.subr.mxu0 0.0
    %200 = vmatpush1.msra.mxu0 0.0
    %201 = vmatprep.subr.mxu0 0.0
    %202 = vmatpush1.msra.mxu0 0.0
    %203 = vmatprep.mubr.f32.mxu0 0.0
    %204 = vmatmul.mubr.f32.gmra.mrb[0].mxu0 %v59
    %v205 = vpop.f32.mrb[0].mxu0
    %v206 = vadd.f32 0.0, %v205
    %v207 = vpop.f32.mrb[0].mxu0
    %v208 = vadd.f32 0.0, %v207
    %209 = vmatprep.mubr.f32.mxu0 0.0
    %210 = vmatmul.mubr.f32.gmra.mrb[0].mxu0 %v60
    %v211 = vpop.f32.mrb[0].mxu0
    %v212 = vadd.f32 0.0, %v211
    %v213 = vpop.f32.mrb[0].mxu0
    %v214 = vadd.f32 0.0, %v213
    %215 = vmatprep.mubr.f32.mxu0 0.0
    %216 = vmatmul.mubr.f32.gmra.mrb[0].mxu0 %v61
    %v217 = vpop.f32.mrb[0].mxu0
    %v218 = vadd.f32 0.0, %v217
    %v219 = vpop.f32.mrb[0].mxu0
    %v220 = vadd.f32 0.0, %v219
    %221 = vmatprep.mubr.f32.mxu0 0.0
    %222 = vmatmul.mubr.f32.gmra.mrb[0].mxu0 %v62
    %v223 = vpop.f32.mrb[0].mxu0
    %v224 = vadd.f32 0.0, %v223
    %v225 = vpop.f32.mrb[0].mxu0
    %v226 = vadd.f32 0.0, %v225
    %227 = vmatprep.mubr.f32.mxu0 0.0
    %228 = vmatmul.mubr.f32.gmra.mrb[0].mxu0 %v63
    %v229 = vpop.f32.mrb[0].mxu0
    %v230 = vadd.f32 0.0, %v229
    %v231 = vpop.f32.mrb[0].mxu0
    %v232 = vadd.f32 0.0, %v231
    %233 = vmatprep.mubr.f32.mxu0 0.0
    %234 = vmatmul.mubr.f32.gmra.mrb[0].mxu0 %v64
    %v235 = vpop.f32.mrb[0].mxu0
    %v236 = vadd.f32 0.0, %v235
    %v237 = vpop.f32.mrb[0].mxu0
    %v238 = vadd.f32 0.0, %v237
    %239 = vmatprep.mubr.f32.mxu0 0.0
    %240 = vmatmul.mubr.f32.gmra.mrb[0].mxu0 %v65
    %v241 = vpop.f32.mrb[0].mxu0
    %v242 = vadd.f32 0.0, %v241
    %v243 = vpop.f32.mrb[0].mxu0
    %v244 = vadd.f32 0.0, %v243
    %245 = vmatprep.mubr.f32.mxu0 0.0
    %246 = vmatmul.mubr.f32.gmra.mrb[0].mxu0 %v66
    %v247 = vpop.f32.mrb[0].mxu0
    %v248 = vadd.f32 0.0, %v247
    %v249 = vpop.f32.mrb[0].mxu0
    %v250 = vadd.f32 0.0, %v249
    %251 = vmatprep.mubr.f32.mxu0 0.0
    %252 = vmatmul.mubr.f32.gmra.mrb[0].mxu0 %v67
    %v253 = vpop.f32.mrb[0].mxu0
    %v254 = vadd.f32 0.0, %v253
    %v255 = vpop.f32.mrb[0].mxu0
    %v256 = vadd.f32 0.0, %v255
    %257 = vmatprep.mubr.f32.mxu0 0.0
    %258 = vmatmul.mubr.f32.gmra.mrb[0].mxu0 %v68
    %v259 = vpop.f32.mrb[0].mxu0
    %v260 = vadd.f32 0.0, %v259
    %v261 = vpop.f32.mrb[0].mxu0
    %v262 = vadd.f32 0.0, %v261
    %263 = vmatprep.mubr.f32.mxu0 0.0
    %264 = vmatmul.mubr.f32.gmra.mrb[0].mxu0 %v69
    %v265 = vpop.f32.mrb[0].mxu0
    %v266 = vadd.f32 0.0, %v265
    %v267 = vpop.f32.mrb[0].mxu0
    %v268 = vadd.f32 0.0, %v267
    %269 = vmatprep.mubr.f32.mxu0 0.0
    %270 = vmatmul.mubr.f32.gmra.mrb[0].mxu0 %v70
    %v271 = vpop.f32.mrb[0].mxu0
    %v272 = vadd.f32 0.0, %v271
    %v273 = vpop.f32.mrb[0].mxu0
    %v274 = vadd.f32 0.0, %v273
    %275 = vmatprep.mubr.f32.mxu0 0.0
    %276 = vmatmul.mubr.f32.gmra.mrb[0].mxu0 %v71
    %v277 = vpop.f32.mrb[0].mxu0
    %v278 = vadd.f32 0.0, %v277
    %v279 = vpop.f32.mrb[0].mxu0
    %v280 = vadd.f32 0.0, %v279
    %281 = vmatprep.mubr.f32.mxu0 0.0
    %282 = vmatmul.mubr.f32.gmra.mrb[0].mxu0 %v72
    %v283 = vpop.f32.mrb[0].mxu0
    %v284 = vadd.f32 0.0, %v283
    %v285 = vpop.f32.mrb[0].mxu0
    %v286 = vadd.f32 0.0, %v285
    %287 = vmatprep.mubr.f32.mxu0 0.0
    %288 = vmatmul.mubr.f32.gmra.mrb[0].mxu0 %v73
    %v289 = vpop.f32.mrb[0].mxu0
    %v290 = vadd.f32 0.0, %v289
    %v291 = vpop.f32.mrb[0].mxu0
    %v292 = vadd.f32 0.0, %v291
    %293 = vmatprep.mubr.f32.mxu0 0.0
    %294 = vmatmul.mubr.f32.gmra.mrb[0].mxu0 %v74
    %v295 = vpop.f32.mrb[0].mxu0
    %v296 = vadd.f32 0.0, %v295
    %v297 = vpop.f32.mrb[0].mxu0
    %v298 = vadd.f32 0.0, %v297
    %299 = vdwg.mxu0
    %300 = vmatprep.subr.mxu0 %v78
    %301 = vmatpush1.msra.mxu0 %v77
    %302 = vmatprep.subr.mxu0 %v82
    %303 = vmatpush1.msra.mxu0 %v81
    %304 = vmatprep.subr.mxu0 %v86
    %305 = vmatpush1.msra.mxu0 %v85
    %306 = vmatprep.subr.mxu0 %v90
    %307 = vmatpush1.msra.mxu0 %v89
    %308 = vmatprep.subr.mxu0 %v94
    %309 = vmatpush1.msra.mxu0 %v93
    %310 = vmatprep.subr.mxu0 %v98
    %311 = vmatpush1.msra.mxu0 %v97
    %312 = vmatprep.subr.mxu0 %v102
    %313 = vmatpush1.msra.mxu0 %v101
    %314 = vmatprep.subr.mxu0 %v106
    %315 = vmatpush1.msra.mxu0 %v105
    %316 = vmatprep.subr.mxu0 %v110
    %317 = vmatpush1.msra.mxu0 %v109
    %318 = vmatprep.subr.mxu0 %v114
    %319 = vmatpush1.msra.mxu0 %v113
    %320 = vmatprep.subr.mxu0 %v118
    %321 = vmatpush1.msra.mxu0 %v117
    %322 = vmatprep.subr.mxu0 %v122
    %323 = vmatpush1.msra.mxu0 %v121
    %324 = vmatprep.subr.mxu0 %v126
    %325 = vmatpush1.msra.mxu0 %v125
    %326 = vmatprep.subr.mxu0 %v130
    %327 = vmatpush1.msra.mxu0 %v129
    %328 = vmatprep.subr.mxu0 %v134
    %329 = vmatpush1.msra.mxu0 %v133
    %330 = vmatprep.subr.mxu0 %v138
    %331 = vmatpush1.msra.mxu0 %v137
    %332 = vmatprep.subr.mxu0 0.0
    %333 = vmatpush1.msra.mxu0 0.0
    %334 = vmatprep.subr.mxu0 0.0
    %335 = vmatpush1.msra.mxu0 0.0
    %336 = vmatprep.subr.mxu0 0.0
    %337 = vmatpush1.msra.mxu0 0.0
    %338 = vmatprep.subr.mxu0 0.0
    %339 = vmatpush1.msra.mxu0 0.0
    %340 = vmatprep.subr.mxu0 0.0
    %341 = vmatpush1.msra.mxu0 0.0
    %342 = vmatprep.subr.mxu0 0.0
    %343 = vmatpush1.msra.mxu0 0.0
    %344 = vmatprep.subr.mxu0 0.0
    %345 = vmatpush1.msra.mxu0 0.0
    %346 = vmatprep.subr.mxu0 0.0
    %347 = vmatpush1.msra.mxu0 0.0
    %348 = vmatprep.subr.mxu0 0.0
    %349 = vmatpush1.msra.mxu0 0.0
    %350 = vmatprep.subr.mxu0 0.0
    %351 = vmatpush1.msra.mxu0 0.0
    %352 = vmatprep.subr.mxu0 0.0
    %353 = vmatpush1.msra.mxu0 0.0
    %354 = vmatprep.subr.mxu0 0.0
    %355 = vmatpush1.msra.mxu0 0.0
    %356 = vmatprep.subr.mxu0 0.0
    %357 = vmatpush1.msra.mxu0 0.0
    %358 = vmatprep.subr.mxu0 0.0
    %359 = vmatpush1.msra.mxu0 0.0
    %360 = vmatprep.subr.mxu0 0.0
    %361 = vmatpush1.msra.mxu0 0.0
    %362 = vmatprep.subr.mxu0 0.0
    %363 = vmatpush1.msra.mxu0 0.0
    %364 = vmatprep.mubr.f32.mxu0 0.0
    %365 = vmatmul.mubr.f32.gmra.mrb[0].mxu0 %v59
    %v366 = vpop.f32.mrb[0].mxu0
    %v367 = vadd.f32 0.0, %v366
    %v368 = vpop.f32.mrb[0].mxu0
    %v369 = vadd.f32 0.0, %v368
    %370 = vmatprep.mubr.f32.mxu0 0.0
    %371 = vmatmul.mubr.f32.gmra.mrb[0].mxu0 %v60
    %v372 = vpop.f32.mrb[0].mxu0
    %v373 = vadd.f32 0.0, %v372
    %v374 = vpop.f32.mrb[0].mxu0
    %v375 = vadd.f32 0.0, %v374
    %376 = vmatprep.mubr.f32.mxu0 0.0
    %377 = vmatmul.mubr.f32.gmra.mrb[0].mxu0 %v61
    %v378 = vpop.f32.mrb[0].mxu0
    %v379 = vadd.f32 0.0, %v378
    %v380 = vpop.f32.mrb[0].mxu0
    %v381 = vadd.f32 0.0, %v380
    %382 = vmatprep.mubr.f32.mxu0 0.0
    %383 = vmatmul.mubr.f32.gmra.mrb[0].mxu0 %v62
    %v384 = vpop.f32.mrb[0].mxu0
    %v385 = vadd.f32 0.0, %v384
    %v386 = vpop.f32.mrb[0].mxu0
    %v387 = vadd.f32 0.0, %v386
    %388 = vmatprep.mubr.f32.mxu0 0.0
    %389 = vmatmul.mubr.f32.gmra.mrb[0].mxu0 %v63
    %v390 = vpop.f32.mrb[0].mxu0
    %v391 = vadd.f32 0.0, %v390
    %v392 = vpop.f32.mrb[0].mxu0
    %v393 = vadd.f32 0.0, %v392
    %394 = vmatprep.mubr.f32.mxu0 0.0
    %395 = vmatmul.mubr.f32.gmra.mrb[0].mxu0 %v64
    %v396 = vpop.f32.mrb[0].mxu0
    %v397 = vadd.f32 0.0, %v396
    %v398 = vpop.f32.mrb[0].mxu0
    %v399 = vadd.f32 0.0, %v398
    %400 = vmatprep.mubr.f32.mxu0 0.0
    %401 = vmatmul.mubr.f32.gmra.mrb[0].mxu0 %v65
    %v402 = vpop.f32.mrb[0].mxu0
    %v403 = vadd.f32 0.0, %v402
    %v404 = vpop.f32.mrb[0].mxu0
    %v405 = vadd.f32 0.0, %v404
    %406 = vmatprep.mubr.f32.mxu0 0.0
    %407 = vmatmul.mubr.f32.gmra.mrb[0].mxu0 %v66
    %v408 = vpop.f32.mrb[0].mxu0
    %v409 = vadd.f32 0.0, %v408
    %v410 = vpop.f32.mrb[0].mxu0
    %v411 = vadd.f32 0.0, %v410
    %412 = vmatprep.mubr.f32.mxu0 0.0
    %413 = vmatmul.mubr.f32.gmra.mrb[0].mxu0 %v67
    %v414 = vpop.f32.mrb[0].mxu0
    %v415 = vadd.f32 0.0, %v414
    %v416 = vpop.f32.mrb[0].mxu0
    %v417 = vadd.f32 0.0, %v416
    %418 = vmatprep.mubr.f32.mxu0 0.0
    %419 = vmatmul.mubr.f32.gmra.mrb[0].mxu0 %v68
    %v420 = vpop.f32.mrb[0].mxu0
    %v421 = vadd.f32 0.0, %v420
    %v422 = vpop.f32.mrb[0].mxu0
    %v423 = vadd.f32 0.0, %v422
    %424 = vmatprep.mubr.f32.mxu0 0.0
    %425 = vmatmul.mubr.f32.gmra.mrb[0].mxu0 %v69
    %v426 = vpop.f32.mrb[0].mxu0
    %v427 = vadd.f32 0.0, %v426
    %v428 = vpop.f32.mrb[0].mxu0
    %v429 = vadd.f32 0.0, %v428
    %430 = vmatprep.mubr.f32.mxu0 0.0
    %431 = vmatmul.mubr.f32.gmra.mrb[0].mxu0 %v70
    %v432 = vpop.f32.mrb[0].mxu0
    %v433 = vadd.f32 0.0, %v432
    %v434 = vpop.f32.mrb[0].mxu0
    %v435 = vadd.f32 0.0, %v434
    %436 = vmatprep.mubr.f32.mxu0 0.0
    %437 = vmatmul.mubr.f32.gmra.mrb[0].mxu0 %v71
    %v438 = vpop.f32.mrb[0].mxu0
    %v439 = vadd.f32 0.0, %v438
    %v440 = vpop.f32.mrb[0].mxu0
    %v441 = vadd.f32 0.0, %v440
    %442 = vmatprep.mubr.f32.mxu0 0.0
    %443 = vmatmul.mubr.f32.gmra.mrb[0].mxu0 %v72
    %v444 = vpop.f32.mrb[0].mxu0
    %v445 = vadd.f32 0.0, %v444
    %v446 = vpop.f32.mrb[0].mxu0
    %v447 = vadd.f32 0.0, %v446
    %448 = vmatprep.mubr.f32.mxu0 0.0
    %449 = vmatmul.mubr.f32.gmra.mrb[0].mxu0 %v73
    %v450 = vpop.f32.mrb[0].mxu0
    %v451 = vadd.f32 0.0, %v450
    %v452 = vpop.f32.mrb[0].mxu0
    %v453 = vadd.f32 0.0, %v452
    %454 = vmatprep.mubr.f32.mxu0 0.0
    %455 = vmatmul.mubr.f32.gmra.mrb[0].mxu0 %v74
    %v456 = vpop.f32.mrb[0].mxu0
    %v457 = vadd.f32 0.0, %v456
    %v458 = vpop.f32.mrb[0].mxu0
    %v459 = vadd.f32 0.0, %v458
    %460 = vdwg.mxu0
    %v461 = vadd.f32 %v206, %v212
    %v462 = vadd.f32 %v461, %v218
    %v463 = vadd.f32 %v462, %v224
    %v464 = vadd.f32 %v463, %v230
    %v465 = vadd.f32 %v464, %v236
    %v466 = vadd.f32 %v465, %v242
    %v467 = vadd.f32 %v466, %v248
    %v468 = vadd.f32 %v467, %v254
    %v469 = vadd.f32 %v468, %v260
    %v470 = vadd.f32 %v469, %v266
    %v471 = vadd.f32 %v470, %v272
    %v472 = vadd.f32 %v471, %v278
    %v473 = vadd.f32 %v472, %v284
    %v474 = vadd.f32 %v473, %v290
    %v475 = vadd.f32 %v474, %v296
    %v476 = vrot.slane %v475, 4
    %v477 = vadd.f32 %v475, %v476
    %v478 = vrot.slane %v477, 2
    %v479 = vadd.f32 %v477, %v478
    %v480 = vrot.slane %v479, 1
    %v481 = vadd.f32 %v479, %v480
    %v482 = vadd.f32 %v208, %v214
    %v483 = vadd.f32 %v482, %v220
    %v484 = vadd.f32 %v483, %v226
    %v485 = vadd.f32 %v484, %v232
    %v486 = vadd.f32 %v485, %v238
    %v487 = vadd.f32 %v486, %v244
    %v488 = vadd.f32 %v487, %v250
    %v489 = vadd.f32 %v488, %v256
    %v490 = vadd.f32 %v489, %v262
    %v491 = vadd.f32 %v490, %v268
    %v492 = vadd.f32 %v491, %v274
    %v493 = vadd.f32 %v492, %v280
    %v494 = vadd.f32 %v493, %v286
    %v495 = vadd.f32 %v494, %v292
    %v496 = vadd.f32 %v495, %v298
    %v497 = vrot.slane %v496, 4
    %v498 = vadd.f32 %v496, %v497
    %v499 = vrot.slane %v498, 2
    %v500 = vadd.f32 %v498, %v499
    %v501 = vrot.slane %v500, 1
    %v502 = vadd.f32 %v500, %v501
    %v503 = vadd.f32 %v367, %v373
    %v504 = vadd.f32 %v503, %v379
    %v505 = vadd.f32 %v504, %v385
    %v506 = vadd.f32 %v505, %v391
    %v507 = vadd.f32 %v506, %v397
    %v508 = vadd.f32 %v507, %v403
    %v509 = vadd.f32 %v508, %v409
    %v510 = vadd.f32 %v509, %v415
    %v511 = vadd.f32 %v510, %v421
    %v512 = vadd.f32 %v511, %v427
    %v513 = vadd.f32 %v512, %v433
    %v514 = vadd.f32 %v513, %v439
    %v515 = vadd.f32 %v514, %v445
    %v516 = vadd.f32 %v515, %v451
    %v517 = vadd.f32 %v516, %v457
    %v518 = vrot.slane %v517, 4
    %v519 = vadd.f32 %v517, %v518
    %v520 = vrot.slane %v519, 2
    %v521 = vadd.f32 %v519, %v520
    %v522 = vrot.slane %v521, 1
    %v523 = vadd.f32 %v521, %v522
    %v524 = vadd.f32 %v369, %v375
    %v525 = vadd.f32 %v524, %v381
    %v526 = vadd.f32 %v525, %v387
    %v527 = vadd.f32 %v526, %v393
    %v528 = vadd.f32 %v527, %v399
    %v529 = vadd.f32 %v528, %v405
    %v530 = vadd.f32 %v529, %v411
    %v531 = vadd.f32 %v530, %v417
    %v532 = vadd.f32 %v531, %v423
    %v533 = vadd.f32 %v532, %v429
    %v534 = vadd.f32 %v533, %v435
    %v535 = vadd.f32 %v534, %v441
    %v536 = vadd.f32 %v535, %v447
    %v537 = vadd.f32 %v536, %v453
    %v538 = vadd.f32 %v537, %v459
    %v539 = vrot.slane %v538, 4
    %v540 = vadd.f32 %v538, %v539
    %v541 = vrot.slane %v540, 2
    %v542 = vadd.f32 %v540, %v541
    %v543 = vrot.slane %v542, 1
    %v544 = vadd.f32 %v542, %v543
    %v545 = vmul.f32 %v206, %v206
    %v546 = vmul.f32 %v208, %v208
    %v547 = vmul.f32 %v367, %v367
    %v548 = vmul.f32 %v369, %v369
    %v549 = vmul.f32 %v212, %v212
    %v550 = vmul.f32 %v214, %v214
    %v551 = vmul.f32 %v373, %v373
    %v552 = vmul.f32 %v375, %v375
    %v553 = vmul.f32 %v218, %v218
    %v554 = vmul.f32 %v220, %v220
    %v555 = vmul.f32 %v379, %v379
    %v556 = vmul.f32 %v381, %v381
    %v557 = vmul.f32 %v224, %v224
    %v558 = vmul.f32 %v226, %v226
    %v559 = vmul.f32 %v385, %v385
    %v560 = vmul.f32 %v387, %v387
    %v561 = vmul.f32 %v230, %v230
    %v562 = vmul.f32 %v232, %v232
    %v563 = vmul.f32 %v391, %v391
    %v564 = vmul.f32 %v393, %v393
    %v565 = vmul.f32 %v236, %v236
    %v566 = vmul.f32 %v238, %v238
    %v567 = vmul.f32 %v397, %v397
    %v568 = vmul.f32 %v399, %v399
    %v569 = vmul.f32 %v242, %v242
    %v570 = vmul.f32 %v244, %v244
    %v571 = vmul.f32 %v403, %v403
    %v572 = vmul.f32 %v405, %v405
    %v573 = vmul.f32 %v248, %v248
    %v574 = vmul.f32 %v250, %v250
    %v575 = vmul.f32 %v409, %v409
    %v576 = vmul.f32 %v411, %v411
    %v577 = vmul.f32 %v254, %v254
    %v578 = vmul.f32 %v256, %v256
    %v579 = vmul.f32 %v415, %v415
    %v580 = vmul.f32 %v417, %v417
    %v581 = vmul.f32 %v260, %v260
    %v582 = vmul.f32 %v262, %v262
    %v583 = vmul.f32 %v421, %v421
    %v584 = vmul.f32 %v423, %v423
    %v585 = vmul.f32 %v266, %v266
    %v586 = vmul.f32 %v268, %v268
    %v587 = vmul.f32 %v427, %v427
    %v588 = vmul.f32 %v429, %v429
    %v589 = vmul.f32 %v272, %v272
    %v590 = vmul.f32 %v274, %v274
    %v591 = vmul.f32 %v433, %v433
    %v592 = vmul.f32 %v435, %v435
    %v593 = vmul.f32 %v278, %v278
    %v594 = vmul.f32 %v280, %v280
    %v595 = vmul.f32 %v439, %v439
    %v596 = vmul.f32 %v441, %v441
    %v597 = vmul.f32 %v284, %v284
    %v598 = vmul.f32 %v286, %v286
    %v599 = vmul.f32 %v445, %v445
    %v600 = vmul.f32 %v447, %v447
    %v601 = vmul.f32 %v290, %v290
    %v602 = vmul.f32 %v292, %v292
    %v603 = vmul.f32 %v451, %v451
    %v604 = vmul.f32 %v453, %v453
    %v605 = vmul.f32 %v296, %v296
    %v606 = vmul.f32 %v298, %v298
    %v607 = vmul.f32 %v457, %v457
    %v608 = vmul.f32 %v459, %v459
    %v609 = vadd.f32 %v545, %v549
    %v610 = vadd.f32 %v609, %v553
    %v611 = vadd.f32 %v610, %v557
    %v612 = vadd.f32 %v611, %v561
    %v613 = vadd.f32 %v612, %v565
    %v614 = vadd.f32 %v613, %v569
    %v615 = vadd.f32 %v614, %v573
    %v616 = vadd.f32 %v615, %v577
    %v617 = vadd.f32 %v616, %v581
    %v618 = vadd.f32 %v617, %v585
    %v619 = vadd.f32 %v618, %v589
    %v620 = vadd.f32 %v619, %v593
    %v621 = vadd.f32 %v620, %v597
    %v622 = vadd.f32 %v621, %v601
    %v623 = vadd.f32 %v622, %v605
    %v624 = vrot.slane %v623, 4
    %v625 = vadd.f32 %v623, %v624
    %v626 = vrot.slane %v625, 2
    %v627 = vadd.f32 %v625, %v626
    %v628 = vrot.slane %v627, 1
    %v629 = vadd.f32 %v627, %v628
    %v630 = vadd.f32 %v546, %v550
    %v631 = vadd.f32 %v630, %v554
    %v632 = vadd.f32 %v631, %v558
    %v633 = vadd.f32 %v632, %v562
    %v634 = vadd.f32 %v633, %v566
    %v635 = vadd.f32 %v634, %v570
    %v636 = vadd.f32 %v635, %v574
    %v637 = vadd.f32 %v636, %v578
    %v638 = vadd.f32 %v637, %v582
    %v639 = vadd.f32 %v638, %v586
    %v640 = vadd.f32 %v639, %v590
    %v641 = vadd.f32 %v640, %v594
    %v642 = vadd.f32 %v641, %v598
    %v643 = vadd.f32 %v642, %v602
    %v644 = vadd.f32 %v643, %v606
    %v645 = vrot.slane %v644, 4
    %v646 = vadd.f32 %v644, %v645
    %v647 = vrot.slane %v646, 2
    %v648 = vadd.f32 %v646, %v647
    %v649 = vrot.slane %v648, 1
    %v650 = vadd.f32 %v648, %v649
    %v651 = vadd.f32 %v547, %v551
    %v652 = vadd.f32 %v651, %v555
    %v653 = vadd.f32 %v652, %v559
    %v654 = vadd.f32 %v653, %v563
    %v655 = vadd.f32 %v654, %v567
    %v656 = vadd.f32 %v655, %v571
    %v657 = vadd.f32 %v656, %v575
    %v658 = vadd.f32 %v657, %v579
    %v659 = vadd.f32 %v658, %v583
    %v660 = vadd.f32 %v659, %v587
    %v661 = vadd.f32 %v660, %v591
    %v662 = vadd.f32 %v661, %v595
    %v663 = vadd.f32 %v662, %v599
    %v664 = vadd.f32 %v663, %v603
    %v665 = vadd.f32 %v664, %v607
    %v666 = vrot.slane %v665, 4
    %v667 = vadd.f32 %v665, %v666
    %v668 = vrot.slane %v667, 2
    %v669 = vadd.f32 %v667, %v668
    %v670 = vrot.slane %v669, 1
    %v671 = vadd.f32 %v669, %v670
    %v672 = vadd.f32 %v548, %v552
    %v673 = vadd.f32 %v672, %v556
    %v674 = vadd.f32 %v673, %v560
    %v675 = vadd.f32 %v674, %v564
    %v676 = vadd.f32 %v675, %v568
    %v677 = vadd.f32 %v676, %v572
    %v678 = vadd.f32 %v677, %v576
    %v679 = vadd.f32 %v678, %v580
    %v680 = vadd.f32 %v679, %v584
    %v681 = vadd.f32 %v680, %v588
    %v682 = vadd.f32 %v681, %v592
    %v683 = vadd.f32 %v682, %v596
    %v684 = vadd.f32 %v683, %v600
    %v685 = vadd.f32 %v684, %v604
    %v686 = vadd.f32 %v685, %v608
    %v687 = vrot.slane %v686, 4
    %v688 = vadd.f32 %v686, %v687
    %v689 = vrot.slane %v688, 2
    %v690 = vadd.f32 %v688, %v689
    %v691 = vrot.slane %v690, 1
    %v692 = vadd.f32 %v690, %v691
    %v693 = vld [vmem:[%s2] sm:$0xff]
    %v694 = vld [vmem:[%s2 + $0x8] sm:$0xff]
    %v695 = vld [vmem:[%s2 + $0x10] sm:$0xff]
    %v696 = vld [vmem:[%s2 + $0x18] sm:$0xff]
    %v697 = vld [vmem:[%s2 + $0x20] sm:$0xff]
    %v698 = vld [vmem:[%s2 + $0x28] sm:$0xff]
    %v699 = vld [vmem:[%s2 + $0x30] sm:$0xff]
    %v700 = vld [vmem:[%s2 + $0x38] sm:$0xff]
    %v701 = vld [vmem:[%s2 + $0x40] sm:$0xff]
    %v702 = vld [vmem:[%s2 + $0x48] sm:$0xff]
    %v703 = vld [vmem:[%s2 + $0x50] sm:$0xff]
    %v704 = vld [vmem:[%s2 + $0x58] sm:$0xff]
    %v705 = vld [vmem:[%s2 + $0x60] sm:$0xff]
    %v706 = vld [vmem:[%s2 + $0x68] sm:$0xff]
    %v707 = vld [vmem:[%s2 + $0x70] sm:$0xff]
    %v708 = vld [vmem:[%s2 + $0x78] sm:$0xff]
    %v709 = vld [vmem:[%s2 + $0x80] sm:$0xff]
    %v710 = vld [vmem:[%s2 + $0x88] sm:$0xff]
    %v711 = vld [vmem:[%s2 + $0x90] sm:$0xff]
    %v712 = vld [vmem:[%s2 + $0x98] sm:$0xff]
    %v713 = vld [vmem:[%s2 + $0xa0] sm:$0xff]
    %v714 = vld [vmem:[%s2 + $0xa8] sm:$0xff]
    %v715 = vld [vmem:[%s2 + $0xb0] sm:$0xff]
    %v716 = vld [vmem:[%s2 + $0xb8] sm:$0xff]
    %v717 = vld [vmem:[%s2 + $0xc0] sm:$0xff]
    %v718 = vld [vmem:[%s2 + $0xc8] sm:$0xff]
    %v719 = vld [vmem:[%s2 + $0xd0] sm:$0xff]
    %v720 = vld [vmem:[%s2 + $0xd8] sm:$0xff]
    %v721 = vld [vmem:[%s2 + $0xe0] sm:$0xff]
    %v722 = vld [vmem:[%s2 + $0xe8] sm:$0xff]
    %v723 = vld [vmem:[%s2 + $0xf0] sm:$0xff]
    %v724 = vld [vmem:[%s2 + $0xf8] sm:$0xff]
    %v725 = vld [vmem:[%s2 + $0x100] sm:$0xff]
    %v726 = vld [vmem:[%s2 + $0x108] sm:$0xff]
    %v727 = vld [vmem:[%s2 + $0x110] sm:$0xff]
    %v728 = vld [vmem:[%s2 + $0x118] sm:$0xff]
    %v729 = vld [vmem:[%s2 + $0x120] sm:$0xff]
    %v730 = vld [vmem:[%s2 + $0x128] sm:$0xff]
    %v731 = vld [vmem:[%s2 + $0x130] sm:$0xff]
    %v732 = vld [vmem:[%s2 + $0x138] sm:$0xff]
    %v733 = vld [vmem:[%s2 + $0x140] sm:$0xff]
    %v734 = vld [vmem:[%s2 + $0x148] sm:$0xff]
    %v735 = vld [vmem:[%s2 + $0x150] sm:$0xff]
    %v736 = vld [vmem:[%s2 + $0x158] sm:$0xff]
    %v737 = vld [vmem:[%s2 + $0x160] sm:$0xff]
    %v738 = vld [vmem:[%s2 + $0x168] sm:$0xff]
    %v739 = vld [vmem:[%s2 + $0x170] sm:$0xff]
    %v740 = vld [vmem:[%s2 + $0x178] sm:$0xff]
    %v741 = vld [vmem:[%s2 + $0x180] sm:$0xff]
    %v742 = vld [vmem:[%s2 + $0x188] sm:$0xff]
    %v743 = vld [vmem:[%s2 + $0x190] sm:$0xff]
    %v744 = vld [vmem:[%s2 + $0x198] sm:$0xff]
    %v745 = vld [vmem:[%s2 + $0x1a0] sm:$0xff]
    %v746 = vld [vmem:[%s2 + $0x1a8] sm:$0xff]
    %v747 = vld [vmem:[%s2 + $0x1b0] sm:$0xff]
    %v748 = vld [vmem:[%s2 + $0x1b8] sm:$0xff]
    %v749 = vld [vmem:[%s2 + $0x1c0] sm:$0xff]
    %v750 = vld [vmem:[%s2 + $0x1c8] sm:$0xff]
    %v751 = vld [vmem:[%s2 + $0x1d0] sm:$0xff]
    %v752 = vld [vmem:[%s2 + $0x1d8] sm:$0xff]
    %v753 = vld [vmem:[%s2 + $0x1e0] sm:$0xff]
    %v754 = vld [vmem:[%s2 + $0x1e8] sm:$0xff]
    %v755 = vld [vmem:[%s2 + $0x1f0] sm:$0xff]
    %v756 = vld [vmem:[%s2 + $0x1f8] sm:$0xff]
    %757 = vmatprep.subr.mxu0 0.0
    %758 = vmatpush1.msra.mxu0 %v693
    %759 = vmatprep.subr.mxu0 0.0
    %760 = vmatpush1.msra.mxu0 %v694
    %761 = vmatprep.subr.mxu0 0.0
    %762 = vmatpush1.msra.mxu0 %v695
    %763 = vmatprep.subr.mxu0 0.0
    %764 = vmatpush1.msra.mxu0 %v696
    %765 = vmatprep.subr.mxu0 0.0
    %766 = vmatpush1.msra.mxu0 %v697
    %767 = vmatprep.subr.mxu0 0.0
    %768 = vmatpush1.msra.mxu0 %v698
    %769 = vmatprep.subr.mxu0 0.0
    %770 = vmatpush1.msra.mxu0 %v699
    %771 = vmatprep.subr.mxu0 0.0
    %772 = vmatpush1.msra.mxu0 %v700
    %773 = vmatprep.subr.mxu0 0.0
    %774 = vmatpush1.msra.mxu0 %v701
    %775 = vmatprep.subr.mxu0 0.0
    %776 = vmatpush1.msra.mxu0 %v702
    %777 = vmatprep.subr.mxu0 0.0
    %778 = vmatpush1.msra.mxu0 %v703
    %779 = vmatprep.subr.mxu0 0.0
    %780 = vmatpush1.msra.mxu0 %v704
    %781 = vmatprep.subr.mxu0 0.0
    %782 = vmatpush1.msra.mxu0 %v705
    %783 = vmatprep.subr.mxu0 0.0
    %784 = vmatpush1.msra.mxu0 %v706
    %785 = vmatprep.subr.mxu0 0.0
    %786 = vmatpush1.msra.mxu0 %v707
    %787 = vmatprep.subr.mxu0 0.0
    %788 = vmatpush1.msra.mxu0 %v708
    %789 = vmatprep.subr.mxu0 0.0
    %790 = vmatpush1.msra.mxu0 %v709
    %791 = vmatprep.subr.mxu0 0.0
    %792 = vmatpush1.msra.mxu0 %v710
    %793 = vmatprep.subr.mxu0 0.0
    %794 = vmatpush1.msra.mxu0 %v711
    %795 = vmatprep.subr.mxu0 0.0
    %796 = vmatpush1.msra.mxu0 %v712
    %797 = vmatprep.subr.mxu0 0.0
    %798 = vmatpush1.msra.mxu0 %v713
    %799 = vmatprep.subr.mxu0 0.0
    %800 = vmatpush1.msra.mxu0 %v714
    %801 = vmatprep.subr.mxu0 0.0
    %802 = vmatpush1.msra.mxu0 %v715
    %803 = vmatprep.subr.mxu0 0.0
    %804 = vmatpush1.msra.mxu0 %v716
    %805 = vmatprep.subr.mxu0 0.0
    %806 = vmatpush1.msra.mxu0 %v717
    %807 = vmatprep.subr.mxu0 0.0
    %808 = vmatpush1.msra.mxu0 %v718
    %809 = vmatprep.subr.mxu0 0.0
    %810 = vmatpush1.msra.mxu0 %v719
    %811 = vmatprep.subr.mxu0 0.0
    %812 = vmatpush1.msra.mxu0 %v720
    %813 = vmatprep.subr.mxu0 0.0
    %814 = vmatpush1.msra.mxu0 %v721
    %815 = vmatprep.subr.mxu0 0.0
    %816 = vmatpush1.msra.mxu0 %v722
    %817 = vmatprep.subr.mxu0 0.0
    %818 = vmatpush1.msra.mxu0 %v723
    %819 = vmatprep.subr.mxu0 0.0
    %820 = vmatpush1.msra.mxu0 %v724
    %821 = vmatprep.mubr.f32.mxu0 %v502
    %822 = vmatmul.mubr.f32.gmra.mrb[0].mxu0 %v481
    %v823 = vpop.f32.mrb[0].mxu0
    %v824 = vadd.f32 0.0, %v823
    %v825 = vpop.f32.mrb[0].mxu0
    %826 = vdwg.mxu0
    %827 = vmatprep.subr.mxu0 0.0
    %828 = vmatpush1.msra.mxu0 %v725
    %829 = vmatprep.subr.mxu0 0.0
    %830 = vmatpush1.msra.mxu0 %v726
    %831 = vmatprep.subr.mxu0 0.0
    %832 = vmatpush1.msra.mxu0 %v727
    %833 = vmatprep.subr.mxu0 0.0
    %834 = vmatpush1.msra.mxu0 %v728
    %835 = vmatprep.subr.mxu0 0.0
    %836 = vmatpush1.msra.mxu0 %v729
    %837 = vmatprep.subr.mxu0 0.0
    %838 = vmatpush1.msra.mxu0 %v730
    %839 = vmatprep.subr.mxu0 0.0
    %840 = vmatpush1.msra.mxu0 %v731
    %841 = vmatprep.subr.mxu0 0.0
    %842 = vmatpush1.msra.mxu0 %v732
    %843 = vmatprep.subr.mxu0 0.0
    %844 = vmatpush1.msra.mxu0 %v733
    %845 = vmatprep.subr.mxu0 0.0
    %846 = vmatpush1.msra.mxu0 %v734
    %847 = vmatprep.subr.mxu0 0.0
    %848 = vmatpush1.msra.mxu0 %v735
    %849 = vmatprep.subr.mxu0 0.0
    %850 = vmatpush1.msra.mxu0 %v736
    %851 = vmatprep.subr.mxu0 0.0
    %852 = vmatpush1.msra.mxu0 %v737
    %853 = vmatprep.subr.mxu0 0.0
    %854 = vmatpush1.msra.mxu0 %v738
    %855 = vmatprep.subr.mxu0 0.0
    %856 = vmatpush1.msra.mxu0 %v739
    %857 = vmatprep.subr.mxu0 0.0
    %858 = vmatpush1.msra.mxu0 %v740
    %859 = vmatprep.subr.mxu0 0.0
    %860 = vmatpush1.msra.mxu0 %v741
    %861 = vmatprep.subr.mxu0 0.0
    %862 = vmatpush1.msra.mxu0 %v742
    %863 = vmatprep.subr.mxu0 0.0
    %864 = vmatpush1.msra.mxu0 %v743
    %865 = vmatprep.subr.mxu0 0.0
    %866 = vmatpush1.msra.mxu0 %v744
    %867 = vmatprep.subr.mxu0 0.0
    %868 = vmatpush1.msra.mxu0 %v745
    %869 = vmatprep.subr.mxu0 0.0
    %870 = vmatpush1.msra.mxu0 %v746
    %871 = vmatprep.subr.mxu0 0.0
    %872 = vmatpush1.msra.mxu0 %v747
    %873 = vmatprep.subr.mxu0 0.0
    %874 = vmatpush1.msra.mxu0 %v748
    %875 = vmatprep.subr.mxu0 0.0
    %876 = vmatpush1.msra.mxu0 %v749
    %877 = vmatprep.subr.mxu0 0.0
    %878 = vmatpush1.msra.mxu0 %v750
    %879 = vmatprep.subr.mxu0 0.0
    %880 = vmatpush1.msra.mxu0 %v751
    %881 = vmatprep.subr.mxu0 0.0
    %882 = vmatpush1.msra.mxu0 %v752
    %883 = vmatprep.subr.mxu0 0.0
    %884 = vmatpush1.msra.mxu0 %v753
    %885 = vmatprep.subr.mxu0 0.0
    %886 = vmatpush1.msra.mxu0 %v754
    %887 = vmatprep.subr.mxu0 0.0
    %888 = vmatpush1.msra.mxu0 %v755
    %889 = vmatprep.subr.mxu0 0.0
    %890 = vmatpush1.msra.mxu0 %v756
    %891 = vmatprep.mubr.f32.mxu0 %v544
    %892 = vmatmul.mubr.f32.gmra.mrb[0].mxu0 %v523
    %v893 = vpop.f32.mrb[0].mxu0
    %v894 = vadd.f32 %v824, %v893
    %v895 = vpop.f32.mrb[0].mxu0
    %896 = vdwg.mxu0
    %897 = vmatprep.subr.mxu0 0.0
    %898 = vmatpush1.msra.mxu0 %v693
    %899 = vmatprep.subr.mxu0 0.0
    %900 = vmatpush1.msra.mxu0 %v694
    %901 = vmatprep.subr.mxu0 0.0
    %902 = vmatpush1.msra.mxu0 %v695
    %903 = vmatprep.subr.mxu0 0.0
    %904 = vmatpush1.msra.mxu0 %v696
    %905 = vmatprep.subr.mxu0 0.0
    %906 = vmatpush1.msra.mxu0 %v697
    %907 = vmatprep.subr.mxu0 0.0
    %908 = vmatpush1.msra.mxu0 %v698
    %909 = vmatprep.subr.mxu0 0.0
    %910 = vmatpush1.msra.mxu0 %v699
    %911 = vmatprep.subr.mxu0 0.0
    %912 = vmatpush1.msra.mxu0 %v700
    %913 = vmatprep.subr.mxu0 0.0
    %914 = vmatpush1.msra.mxu0 %v701
    %915 = vmatprep.subr.mxu0 0.0
    %916 = vmatpush1.msra.mxu0 %v702
    %917 = vmatprep.subr.mxu0 0.0
    %918 = vmatpush1.msra.mxu0 %v703
    %919 = vmatprep.subr.mxu0 0.0
    %920 = vmatpush1.msra.mxu0 %v704
    %921 = vmatprep.subr.mxu0 0.0
    %922 = vmatpush1.msra.mxu0 %v705
    %923 = vmatprep.subr.mxu0 0.0
    %924 = vmatpush1.msra.mxu0 %v706
    %925 = vmatprep.subr.mxu0 0.0
    %926 = vmatpush1.msra.mxu0 %v707
    %927 = vmatprep.subr.mxu0 0.0
    %928 = vmatpush1.msra.mxu0 %v708
    %929 = vmatprep.subr.mxu0 0.0
    %930 = vmatpush1.msra.mxu0 %v709
    %931 = vmatprep.subr.mxu0 0.0
    %932 = vmatpush1.msra.mxu0 %v710
    %933 = vmatprep.subr.mxu0 0.0
    %934 = vmatpush1.msra.mxu0 %v711
    %935 = vmatprep.subr.mxu0 0.0
    %936 = vmatpush1.msra.mxu0 %v712
    %937 = vmatprep.subr.mxu0 0.0
    %938 = vmatpush1.msra.mxu0 %v713
    %939 = vmatprep.subr.mxu0 0.0
    %940 = vmatpush1.msra.mxu0 %v714
    %941 = vmatprep.subr.mxu0 0.0
    %942 = vmatpush1.msra.mxu0 %v715
    %943 = vmatprep.subr.mxu0 0.0
    %944 = vmatpush1.msra.mxu0 %v716
    %945 = vmatprep.subr.mxu0 0.0
    %946 = vmatpush1.msra.mxu0 %v717
    %947 = vmatprep.subr.mxu0 0.0
    %948 = vmatpush1.msra.mxu0 %v718
    %949 = vmatprep.subr.mxu0 0.0
    %950 = vmatpush1.msra.mxu0 %v719
    %951 = vmatprep.subr.mxu0 0.0
    %952 = vmatpush1.msra.mxu0 %v720
    %953 = vmatprep.subr.mxu0 0.0
    %954 = vmatpush1.msra.mxu0 %v721
    %955 = vmatprep.subr.mxu0 0.0
    %956 = vmatpush1.msra.mxu0 %v722
    %957 = vmatprep.subr.mxu0 0.0
    %958 = vmatpush1.msra.mxu0 %v723
    %959 = vmatprep.subr.mxu0 0.0
    %960 = vmatpush1.msra.mxu0 %v724
    %961 = vmatprep.mubr.f32.mxu0 %v650
    %962 = vmatmul.mubr.f32.gmra.mrb[0].mxu0 %v629
    %v963 = vpop.f32.mrb[0].mxu0
    %v964 = vadd.f32 0.0, %v963
    %v965 = vpop.f32.mrb[0].mxu0
    %966 = vdwg.mxu0
    %967 = vmatprep.subr.mxu0 0.0
    %968 = vmatpush1.msra.mxu0 %v725
    %969 = vmatprep.subr.mxu0 0.0
    %970 = vmatpush1.msra.mxu0 %v726
    %971 = vmatprep.subr.mxu0 0.0
    %972 = vmatpush1.msra.mxu0 %v727
    %973 = vmatprep.subr.mxu0 0.0
    %974 = vmatpush1.msra.mxu0 %v728
    %975 = vmatprep.subr.mxu0 0.0
    %976 = vmatpush1.msra.mxu0 %v729
    %977 = vmatprep.subr.mxu0 0.0
    %978 = vmatpush1.msra.mxu0 %v730
    %979 = vmatprep.subr.mxu0 0.0
    %980 = vmatpush1.msra.mxu0 %v731
    %981 = vmatprep.subr.mxu0 0.0
    %982 = vmatpush1.msra.mxu0 %v732
    %983 = vmatprep.subr.mxu0 0.0
    %984 = vmatpush1.msra.mxu0 %v733
    %985 = vmatprep.subr.mxu0 0.0
    %986 = vmatpush1.msra.mxu0 %v734
    %987 = vmatprep.subr.mxu0 0.0
    %988 = vmatpush1.msra.mxu0 %v735
    %989 = vmatprep.subr.mxu0 0.0
    %990 = vmatpush1.msra.mxu0 %v736
    %991 = vmatprep.subr.mxu0 0.0
    %992 = vmatpush1.msra.mxu0 %v737
    %993 = vmatprep.subr.mxu0 0.0
    %994 = vmatpush1.msra.mxu0 %v738
    %995 = vmatprep.subr.mxu0 0.0
    %996 = vmatpush1.msra.mxu0 %v739
    %997 = vmatprep.subr.mxu0 0.0
    %998 = vmatpush1.msra.mxu0 %v740
    %999 = vmatprep.subr.mxu0 0.0
    %1000 = vmatpush1.msra.mxu0 %v741
    %1001 = vmatprep.subr.mxu0 0.0
    %1002 = vmatpush1.msra.mxu0 %v742
    %1003 = vmatprep.subr.mxu0 0.0
    %1004 = vmatpush1.msra.mxu0 %v743
    %1005 = vmatprep.subr.mxu0 0.0
    %1006 = vmatpush1.msra.mxu0 %v744
    %1007 = vmatprep.subr.mxu0 0.0
    %1008 = vmatpush1.msra.mxu0 %v745
    %1009 = vmatprep.subr.mxu0 0.0
    %1010 = vmatpush1.msra.mxu0 %v746
    %1011 = vmatprep.subr.mxu0 0.0
    %1012 = vmatpush1.msra.mxu0 %v747
    %1013 = vmatprep.subr.mxu0 0.0
    %1014 = vmatpush1.msra.mxu0 %v748
    %1015 = vmatprep.subr.mxu0 0.0
    %1016 = vmatpush1.msra.mxu0 %v749
    %1017 = vmatprep.subr.mxu0 0.0
    %1018 = vmatpush1.msra.mxu0 %v750
    %1019 = vmatprep.subr.mxu0 0.0
    %1020 = vmatpush1.msra.mxu0 %v751
    %1021 = vmatprep.subr.mxu0 0.0
    %1022 = vmatpush1.msra.mxu0 %v752
    %1023 = vmatprep.subr.mxu0 0.0
    %1024 = vmatpush1.msra.mxu0 %v753
    %1025 = vmatprep.subr.mxu0 0.0
    %1026 = vmatpush1.msra.mxu0 %v754
    %1027 = vmatprep.subr.mxu0 0.0
    %1028 = vmatpush1.msra.mxu0 %v755
    %1029 = vmatprep.subr.mxu0 0.0
    %1030 = vmatpush1.msra.mxu0 %v756
    %1031 = vmatprep.mubr.f32.mxu0 %v692
    %1032 = vmatmul.mubr.f32.gmra.mrb[0].mxu0 %v671
    %v1033 = vpop.f32.mrb[0].mxu0
    %v1034 = vadd.f32 %v964, %v1033
    %v1035 = vpop.f32.mrb[0].mxu0
    %1036 = vdwg.mxu0
    %v1037 = vmul.f32 %v894, %v894
    %v1038 = vsub.f32 %v1034, %v1037
    %v1039 = vrsqrt.pop %v1038
    %v1040 = vld [vmem:[%s4] sm:$0x1]
    %v1041 = vmul.f32 %v1039, %v1040
    %v1042 = vld [vmem:[%s3] sm:$0xff]
    %v1043 = vld [vmem:[%s3 + $0x8] sm:$0xff]
    %v1044 = vld [vmem:[%s3 + $0x10] sm:$0xff]
    %v1045 = vld [vmem:[%s3 + $0x18] sm:$0xff]
    %vm1046 = vcmask 64512
    %v1048 = vsel %vm1046, %v1041, 0
    %1050 = vmatprep.subr.mxu0 %v1043
    %1051 = vmatpush1.msra.mxu0 %v1042
    %1052 = vmatprep.subr.mxu0 0.0
    %1053 = vmatpush1.msra.mxu0 0.0
    %1054 = vmatprep.subr.mxu0 0.0
    %1055 = vmatpush1.msra.mxu0 0.0
    %1056 = vmatprep.subr.mxu0 0.0
    %1057 = vmatpush1.msra.mxu0 0.0
    %1058 = vmatprep.subr.mxu0 0.0
    %1059 = vmatpush1.msra.mxu0 0.0
    %1060 = vmatprep.subr.mxu0 0.0
    %1061 = vmatpush1.msra.mxu0 0.0
    %1062 = vmatprep.subr.mxu0 0.0
    %1063 = vmatpush1.msra.mxu0 0.0
    %1064 = vmatprep.subr.mxu0 0.0
    %1065 = vmatpush1.msra.mxu0 0.0
    %1066 = vmatprep.subr.mxu0 0.0
    %1067 = vmatpush1.msra.mxu0 0.0
    %1068 = vmatprep.subr.mxu0 0.0
    %1069 = vmatpush1.msra.mxu0 0.0
    %1070 = vmatprep.subr.mxu0 0.0
    %1071 = vmatpush1.msra.mxu0 0.0
    %1072 = vmatprep.subr.mxu0 0.0
    %1073 = vmatpush1.msra.mxu0 0.0
    %1074 = vmatprep.subr.mxu0 0.0
    %1075 = vmatpush1.msra.mxu0 0.0
    %1076 = vmatprep.subr.mxu0 0.0
    %1077 = vmatpush1.msra.mxu0 0.0
    %1078 = vmatprep.subr.mxu0 0.0
    %1079 = vmatpush1.msra.mxu0 0.0
    %1080 = vmatprep.subr.mxu0 0.0
    %1081 = vmatpush1.msra.mxu0 0.0
    %1082 = vmatprep.subr.mxu0 0.0
    %1083 = vmatpush1.msra.mxu0 0.0
    %1084 = vmatprep.subr.mxu0 0.0
    %1085 = vmatpush1.msra.mxu0 0.0
    %1086 = vmatprep.subr.mxu0 0.0
    %1087 = vmatpush1.msra.mxu0 0.0
    %1088 = vmatprep.subr.mxu0 0.0
    %1089 = vmatpush1.msra.mxu0 0.0
    %1090 = vmatprep.subr.mxu0 0.0
    %1091 = vmatpush1.msra.mxu0 0.0
    %1092 = vmatprep.subr.mxu0 0.0
    %1093 = vmatpush1.msra.mxu0 0.0
    %1094 = vmatprep.subr.mxu0 0.0
    %1095 = vmatpush1.msra.mxu0 0.0
    %1096 = vmatprep.subr.mxu0 0.0
    %1097 = vmatpush1.msra.mxu0 0.0
    %1098 = vmatprep.subr.mxu0 0.0
    %1099 = vmatpush1.msra.mxu0 0.0
    %1100 = vmatprep.subr.mxu0 0.0
    %1101 = vmatpush1.msra.mxu0 0.0
    %1102 = vmatprep.subr.mxu0 0.0
    %1103 = vmatpush1.msra.mxu0 0.0
    %1104 = vmatprep.subr.mxu0 0.0
    %1105 = vmatpush1.msra.mxu0 0.0
    %1106 = vmatprep.subr.mxu0 0.0
    %1107 = vmatpush1.msra.mxu0 0.0
    %1108 = vmatprep.subr.mxu0 0.0
    %1109 = vmatpush1.msra.mxu0 0.0
    %1110 = vmatprep.subr.mxu0 0.0
    %1111 = vmatpush1.msra.mxu0 0.0
    %1112 = vmatprep.subr.mxu0 0.0
    %1113 = vmatpush1.msra.mxu0 0.0
    %1114 = vmatprep.mubr.f32.mxu0 0.0
    %1115 = vmatmul.mubr.f32.gmra.mrb[0].mxu0 %v1048
    %v1116 = vpop.f32.mrb[0].mxu0
    %v1117 = vadd.f32 0.0, %v1116
    %v1118 = vpop.f32.mrb[0].mxu0
    %v1119 = vadd.f32 0.0, %v1118
    %1120 = vdwg.mxu0
    %1121 = vmatprep.subr.mxu0 %v1045
    %1122 = vmatpush1.msra.mxu0 %v1044
    %1123 = vmatprep.subr.mxu0 0.0
    %1124 = vmatpush1.msra.mxu0 0.0
    %1125 = vmatprep.subr.mxu0 0.0
    %1126 = vmatpush1.msra.mxu0 0.0
    %1127 = vmatprep.subr.mxu0 0.0
    %1128 = vmatpush1.msra.mxu0 0.0
    %1129 = vmatprep.subr.mxu0 0.0
    %1130 = vmatpush1.msra.mxu0 0.0
    %1131 = vmatprep.subr.mxu0 0.0
    %1132 = vmatpush1.msra.mxu0 0.0
    %1133 = vmatprep.subr.mxu0 0.0
    %1134 = vmatpush1.msra.mxu0 0.0
    %1135 = vmatprep.subr.mxu0 0.0
    %1136 = vmatpush1.msra.mxu0 0.0
    %1137 = vmatprep.subr.mxu0 0.0
    %1138 = vmatpush1.msra.mxu0 0.0
    %1139 = vmatprep.subr.mxu0 0.0
    %1140 = vmatpush1.msra.mxu0 0.0
    %1141 = vmatprep.subr.mxu0 0.0
    %1142 = vmatpush1.msra.mxu0 0.0
    %1143 = vmatprep.subr.mxu0 0.0
    %1144 = vmatpush1.msra.mxu0 0.0
    %1145 = vmatprep.subr.mxu0 0.0
    %1146 = vmatpush1.msra.mxu0 0.0
    %1147 = vmatprep.subr.mxu0 0.0
    %1148 = vmatpush1.msra.mxu0 0.0
    %1149 = vmatprep.subr.mxu0 0.0
    %1150 = vmatpush1.msra.mxu0 0.0
    %1151 = vmatprep.subr.mxu0 0.0
    %1152 = vmatpush1.msra.mxu0 0.0
    %1153 = vmatprep.subr.mxu0 0.0
    %1154 = vmatpush1.msra.mxu0 0.0
    %1155 = vmatprep.subr.mxu0 0.0
    %1156 = vmatpush1.msra.mxu0 0.0
    %1157 = vmatprep.subr.mxu0 0.0
    %1158 = vmatpush1.msra.mxu0 0.0
    %1159 = vmatprep.subr.mxu0 0.0
    %1160 = vmatpush1.msra.mxu0 0.0
    %1161 = vmatprep.subr.mxu0 0.0
    %1162 = vmatpush1.msra.mxu0 0.0
    %1163 = vmatprep.subr.mxu0 0.0
    %1164 = vmatpush1.msra.mxu0 0.0
    %1165 = vmatprep.subr.mxu0 0.0
    %1166 = vmatpush1.msra.mxu0 0.0
    %1167 = vmatprep.subr.mxu0 0.0
    %1168 = vmatpush1.msra.mxu0 0.0
    %1169 = vmatprep.subr.mxu0 0.0
    %1170 = vmatpush1.msra.mxu0 0.0
    %1171 = vmatprep.subr.mxu0 0.0
    %1172 = vmatpush1.msra.mxu0 0.0
    %1173 = vmatprep.subr.mxu0 0.0
    %1174 = vmatpush1.msra.mxu0 0.0
    %1175 = vmatprep.subr.mxu0 0.0
    %1176 = vmatpush1.msra.mxu0 0.0
    %1177 = vmatprep.subr.mxu0 0.0
    %1178 = vmatpush1.msra.mxu0 0.0
    %1179 = vmatprep.subr.mxu0 0.0
    %1180 = vmatpush1.msra.mxu0 0.0
    %1181 = vmatprep.subr.mxu0 0.0
    %1182 = vmatpush1.msra.mxu0 0.0
    %1183 = vmatprep.subr.mxu0 0.0
    %1184 = vmatpush1.msra.mxu0 0.0
    %1185 = vmatprep.mubr.f32.mxu0 0.0
    %1186 = vmatmul.mubr.f32.gmra.mrb[0].mxu0 %v1048
    %v1187 = vpop.f32.mrb[0].mxu0
    %v1188 = vadd.f32 0.0, %v1187
    %v1189 = vpop.f32.mrb[0].mxu0
    %v1190 = vadd.f32 0.0, %v1189
    %1191 = vdwg.mxu0
    %v1192 = vld [vmem:[%s5] sm:$0xff]
    %v1193 = vld [vmem:[%s5 + $0x8] sm:$0xff]
    %v1194 = vld [vmem:[%s5 + $0x10] sm:$0xff]
    %v1195 = vld [vmem:[%s5 + $0x18] sm:$0xff]
    %1196 = vmatprep.subr.mxu0 0.0
    %1197 = vmatpush1.msra.mxu0 %v206
    %1198 = vmatprep.subr.mxu0 0.0
    %1199 = vmatpush1.msra.mxu0 %v212
    %1200 = vmatprep.subr.mxu0 0.0
    %1201 = vmatpush1.msra.mxu0 %v218
    %1202 = vmatprep.subr.mxu0 0.0
    %1203 = vmatpush1.msra.mxu0 %v224
    %1204 = vmatprep.subr.mxu0 0.0
    %1205 = vmatpush1.msra.mxu0 %v230
    %1206 = vmatprep.subr.mxu0 0.0
    %1207 = vmatpush1.msra.mxu0 %v236
    %1208 = vmatprep.subr.mxu0 0.0
    %1209 = vmatpush1.msra.mxu0 %v242
    %1210 = vmatprep.subr.mxu0 0.0
    %1211 = vmatpush1.msra.mxu0 %v248
    %1212 = vmatprep.subr.mxu0 0.0
    %1213 = vmatpush1.msra.mxu0 %v254
    %1214 = vmatprep.subr.mxu0 0.0
    %1215 = vmatpush1.msra.mxu0 %v260
    %1216 = vmatprep.subr.mxu0 0.0
    %1217 = vmatpush1.msra.mxu0 %v266
    %1218 = vmatprep.subr.mxu0 0.0
    %1219 = vmatpush1.msra.mxu0 %v272
    %1220 = vmatprep.subr.mxu0 0.0
    %1221 = vmatpush1.msra.mxu0 %v278
    %1222 = vmatprep.subr.mxu0 0.0
    %1223 = vmatpush1.msra.mxu0 %v284
    %1224 = vmatprep.subr.mxu0 0.0
    %1225 = vmatpush1.msra.mxu0 %v290
    %1226 = vmatprep.subr.mxu0 0.0
    %1227 = vmatpush1.msra.mxu0 %v296
    %1228 = vmatprep.subr.mxu0 0.0
    %1229 = vmatpush1.msra.mxu0 0.0
    %1230 = vmatprep.subr.mxu0 0.0
    %1231 = vmatpush1.msra.mxu0 0.0
    %1232 = vmatprep.subr.mxu0 0.0
    %1233 = vmatpush1.msra.mxu0 0.0
    %1234 = vmatprep.subr.mxu0 0.0
    %1235 = vmatpush1.msra.mxu0 0.0
    %1236 = vmatprep.subr.mxu0 0.0
    %1237 = vmatpush1.msra.mxu0 0.0
    %1238 = vmatprep.subr.mxu0 0.0
    %1239 = vmatpush1.msra.mxu0 0.0
    %1240 = vmatprep.subr.mxu0 0.0
    %1241 = vmatpush1.msra.mxu0 0.0
    %1242 = vmatprep.subr.mxu0 0.0
    %1243 = vmatpush1.msra.mxu0 0.0
    %1244 = vmatprep.subr.mxu0 0.0
    %1245 = vmatpush1.msra.mxu0 0.0
    %1246 = vmatprep.subr.mxu0 0.0
    %1247 = vmatpush1.msra.mxu0 0.0
    %1248 = vmatprep.subr.mxu0 0.0
    %1249 = vmatpush1.msra.mxu0 0.0
    %1250 = vmatprep.subr.mxu0 0.0
    %1251 = vmatpush1.msra.mxu0 0.0
    %1252 = vmatprep.subr.mxu0 0.0
    %1253 = vmatpush1.msra.mxu0 0.0
    %1254 = vmatprep.subr.mxu0 0.0
    %1255 = vmatpush1.msra.mxu0 0.0
    %1256 = vmatprep.subr.mxu0 0.0
    %1257 = vmatpush1.msra.mxu0 0.0
    %1258 = vmatprep.subr.mxu0 0.0
    %1259 = vmatpush1.msra.mxu0 0.0
    %1260 = vmatprep.mubr.f32.mxu0 0.0
    %1261 = vmatmul.mubr.f32.gmra.mrb[0].mxu0 %v1192
    %v1262 = vpop.f32.mrb[0].mxu0
    %v1263 = vadd.f32 0.0, %v1262
    %v1264 = vpop.f32.mrb[0].mxu0
    %1265 = vmatprep.mubr.f32.mxu0 0.0
    %1266 = vmatmul.mubr.f32.gmra.mrb[0].mxu0 %v1193
    %v1267 = vpop.f32.mrb[0].mxu0
    %v1268 = vadd.f32 0.0, %v1267
    %v1269 = vpop.f32.mrb[0].mxu0
    %1270 = vmatprep.mubr.f32.mxu0 0.0
    %1271 = vmatmul.mubr.f32.gmra.mrb[0].mxu0 %v1194
    %v1272 = vpop.f32.mrb[0].mxu0
    %v1273 = vadd.f32 0.0, %v1272
    %v1274 = vpop.f32.mrb[0].mxu0
    %1275 = vmatprep.mubr.f32.mxu0 0.0
    %1276 = vmatmul.mubr.f32.gmra.mrb[0].mxu0 %v1195
    %v1277 = vpop.f32.mrb[0].mxu0
    %v1278 = vadd.f32 0.0, %v1277
    %v1279 = vpop.f32.mrb[0].mxu0
    %1280 = vdwg.mxu0
    %v1281 = vlaneseq
    %v1282 = vshrl.u32 %v1281, 7
    %v1283 = vsub.s32 0, %v1282
    %v1284 = vrot.slane %v1117, %v1283
    %v1285 = vmul.f32 %v1263, %v1284
    %v1286 = vmul.f32 %v1268, %v1284
    %v1287 = vmul.f32 %v1273, %v1284
    %v1288 = vmul.f32 %v1278, %v1284
    %s1289 = scalar_lea.vmem %s5, 32
    %v1290 = vld [vmem:[%s1289] sm:$0xff]
    %v1291 = vld [vmem:[%s1289 + $0x8] sm:$0xff]
    %v1292 = vld [vmem:[%s1289 + $0x10] sm:$0xff]
    %v1293 = vld [vmem:[%s1289 + $0x18] sm:$0xff]
    %1310 = vrot.lane.b32.xlu0 %v206, 64
    %v1311 = vpop.permute.xlu0 %1310
    %1312 = vrot.lane.b32.xlu0 %v212, 64
    %v1313 = vpop.permute.xlu0 %1312
    %1314 = vrot.lane.b32.xlu0 %v218, 64
    %v1315 = vpop.permute.xlu0 %1314
    %1316 = vrot.lane.b32.xlu0 %v224, 64
    %v1317 = vpop.permute.xlu0 %1316
    %1318 = vrot.lane.b32.xlu0 %v230, 64
    %v1319 = vpop.permute.xlu0 %1318
    %1320 = vrot.lane.b32.xlu0 %v236, 64
    %v1321 = vpop.permute.xlu0 %1320
    %1322 = vrot.lane.b32.xlu0 %v242, 64
    %v1323 = vpop.permute.xlu0 %1322
    %1324 = vrot.lane.b32.xlu0 %v248, 64
    %v1325 = vpop.permute.xlu0 %1324
    %1326 = vrot.lane.b32.xlu0 %v254, 64
    %v1327 = vpop.permute.xlu0 %1326
    %1328 = vrot.lane.b32.xlu0 %v260, 64
    %v1329 = vpop.permute.xlu0 %1328
    %1330 = vrot.lane.b32.xlu0 %v266, 64
    %v1331 = vpop.permute.xlu0 %1330
    %1332 = vrot.lane.b32.xlu0 %v272, 64
    %v1333 = vpop.permute.xlu0 %1332
    %1334 = vrot.lane.b32.xlu0 %v278, 64
    %v1335 = vpop.permute.xlu0 %1334
    %1336 = vrot.lane.b32.xlu0 %v284, 64
    %v1337 = vpop.permute.xlu0 %1336
    %1338 = vrot.lane.b32.xlu0 %v290, 64
    %v1339 = vpop.permute.xlu0 %1338
    %1340 = vrot.lane.b32.xlu0 %v296, 64
    %v1341 = vpop.permute.xlu0 %1340
    %1358 = vmatprep.subr.mxu0 0.0
    %1359 = vmatpush1.msra.mxu0 %v1311
    %1360 = vmatprep.subr.mxu0 0.0
    %1361 = vmatpush1.msra.mxu0 %v1313
    %1362 = vmatprep.subr.mxu0 0.0
    %1363 = vmatpush1.msra.mxu0 %v1315
    %1364 = vmatprep.subr.mxu0 0.0
    %1365 = vmatpush1.msra.mxu0 %v1317
    %1366 = vmatprep.subr.mxu0 0.0
    %1367 = vmatpush1.msra.mxu0 %v1319
    %1368 = vmatprep.subr.mxu0 0.0
    %1369 = vmatpush1.msra.mxu0 %v1321
    %1370 = vmatprep.subr.mxu0 0.0
    %1371 = vmatpush1.msra.mxu0 %v1323
    %1372 = vmatprep.subr.mxu0 0.0
    %1373 = vmatpush1.msra.mxu0 %v1325
    %1374 = vmatprep.subr.mxu0 0.0
    %1375 = vmatpush1.msra.mxu0 %v1327
    %1376 = vmatprep.subr.mxu0 0.0
    %1377 = vmatpush1.msra.mxu0 %v1329
    %1378 = vmatprep.subr.mxu0 0.0
    %1379 = vmatpush1.msra.mxu0 %v1331
    %1380 = vmatprep.subr.mxu0 0.0
    %1381 = vmatpush1.msra.mxu0 %v1333
    %1382 = vmatprep.subr.mxu0 0.0
    %1383 = vmatpush1.msra.mxu0 %v1335
    %1384 = vmatprep.subr.mxu0 0.0
    %1385 = vmatpush1.msra.mxu0 %v1337
    %1386 = vmatprep.subr.mxu0 0.0
    %1387 = vmatpush1.msra.mxu0 %v1339
    %1388 = vmatprep.subr.mxu0 0.0
    %1389 = vmatpush1.msra.mxu0 %v1341
    %1390 = vmatprep.subr.mxu0 0.0
    %1391 = vmatpush1.msra.mxu0 0.0
    %1392 = vmatprep.subr.mxu0 0.0
    %1393 = vmatpush1.msra.mxu0 0.0
    %1394 = vmatprep.subr.mxu0 0.0
    %1395 = vmatpush1.msra.mxu0 0.0
    %1396 = vmatprep.subr.mxu0 0.0
    %1397 = vmatpush1.msra.mxu0 0.0
    %1398 = vmatprep.subr.mxu0 0.0
    %1399 = vmatpush1.msra.mxu0 0.0
    %1400 = vmatprep.subr.mxu0 0.0
    %1401 = vmatpush1.msra.mxu0 0.0
    %1402 = vmatprep.subr.mxu0 0.0
    %1403 = vmatpush1.msra.mxu0 0.0
    %1404 = vmatprep.subr.mxu0 0.0
    %1405 = vmatpush1.msra.mxu0 0.0
    %1406 = vmatprep.subr.mxu0 0.0
    %1407 = vmatpush1.msra.mxu0 0.0
    %1408 = vmatprep.subr.mxu0 0.0
    %1409 = vmatpush1.msra.mxu0 0.0
    %1410 = vmatprep.subr.mxu0 0.0
    %1411 = vmatpush1.msra.mxu0 0.0
    %1412 = vmatprep.subr.mxu0 0.0
    %1413 = vmatpush1.msra.mxu0 0.0
    %1414 = vmatprep.subr.mxu0 0.0
    %1415 = vmatpush1.msra.mxu0 0.0
    %1416 = vmatprep.subr.mxu0 0.0
    %1417 = vmatpush1.msra.mxu0 0.0
    %1418 = vmatprep.subr.mxu0 0.0
    %1419 = vmatpush1.msra.mxu0 0.0
    %1420 = vmatprep.subr.mxu0 0.0
    %1421 = vmatpush1.msra.mxu0 0.0
    %1422 = vmatprep.mubr.f32.mxu0 0.0
    %1423 = vmatmul.mubr.f32.gmra.mrb[0].mxu0 %v1290
    %v1424 = vpop.f32.mrb[0].mxu0
    %v1425 = vadd.f32 0.0, %v1424
    %v1426 = vpop.f32.mrb[0].mxu0
    %1427 = vmatprep.mubr.f32.mxu0 0.0
    %1428 = vmatmul.mubr.f32.gmra.mrb[0].mxu0 %v1291
    %v1429 = vpop.f32.mrb[0].mxu0
    %v1430 = vadd.f32 0.0, %v1429
    %v1431 = vpop.f32.mrb[0].mxu0
    %1432 = vmatprep.mubr.f32.mxu0 0.0
    %1433 = vmatmul.mubr.f32.gmra.mrb[0].mxu0 %v1292
    %v1434 = vpop.f32.mrb[0].mxu0
    %v1435 = vadd.f32 0.0, %v1434
    %v1436 = vpop.f32.mrb[0].mxu0
    %1437 = vmatprep.mubr.f32.mxu0 0.0
    %1438 = vmatmul.mubr.f32.gmra.mrb[0].mxu0 %v1293
    %v1439 = vpop.f32.mrb[0].mxu0
    %v1440 = vadd.f32 0.0, %v1439
    %v1441 = vpop.f32.mrb[0].mxu0
    %1442 = vdwg.mxu0
    %1444 = vrot.lane.b32.xlu0 %v1284, 64
    %v1445 = vpop.permute.xlu0 %1444
    %v1447 = vmul.f32 %v1425, %v1445
    %v1448 = vmul.f32 %v1430, %v1445
    %v1449 = vmul.f32 %v1435, %v1445
    %v1450 = vmul.f32 %v1440, %v1445
    %v1451 = vadd.f32 %v1285, %v1447
    %v1452 = vadd.f32 %v1286, %v1448
    %v1453 = vadd.f32 %v1287, %v1449
    %v1454 = vadd.f32 %v1288, %v1450
    %s1455 = scalar_lea.vmem %s5, 64
    %v1456 = vld [vmem:[%s1455] sm:$0xff]
    %v1457 = vld [vmem:[%s1455 + $0x8] sm:$0xff]
    %v1458 = vld [vmem:[%s1455 + $0x10] sm:$0xff]
    %v1459 = vld [vmem:[%s1455 + $0x18] sm:$0xff]
    %1460 = vmatprep.subr.mxu0 0.0
    %1461 = vmatpush1.msra.mxu0 %v208
    %1462 = vmatprep.subr.mxu0 0.0
    %1463 = vmatpush1.msra.mxu0 %v214
    %1464 = vmatprep.subr.mxu0 0.0
    %1465 = vmatpush1.msra.mxu0 %v220
    %1466 = vmatprep.subr.mxu0 0.0
    %1467 = vmatpush1.msra.mxu0 %v226
    %1468 = vmatprep.subr.mxu0 0.0
    %1469 = vmatpush1.msra.mxu0 %v232
    %1470 = vmatprep.subr.mxu0 0.0
    %1471 = vmatpush1.msra.mxu0 %v238
    %1472 = vmatprep.subr.mxu0 0.0
    %1473 = vmatpush1.msra.mxu0 %v244
    %1474 = vmatprep.subr.mxu0 0.0
    %1475 = vmatpush1.msra.mxu0 %v250
    %1476 = vmatprep.subr.mxu0 0.0
    %1477 = vmatpush1.msra.mxu0 %v256
    %1478 = vmatprep.subr.mxu0 0.0
    %1479 = vmatpush1.msra.mxu0 %v262
    %1480 = vmatprep.subr.mxu0 0.0
    %1481 = vmatpush1.msra.mxu0 %v268
    %1482 = vmatprep.subr.mxu0 0.0
    %1483 = vmatpush1.msra.mxu0 %v274
    %1484 = vmatprep.subr.mxu0 0.0
    %1485 = vmatpush1.msra.mxu0 %v280
    %1486 = vmatprep.subr.mxu0 0.0
    %1487 = vmatpush1.msra.mxu0 %v286
    %1488 = vmatprep.subr.mxu0 0.0
    %1489 = vmatpush1.msra.mxu0 %v292
    %1490 = vmatprep.subr.mxu0 0.0
    %1491 = vmatpush1.msra.mxu0 %v298
    %1492 = vmatprep.subr.mxu0 0.0
    %1493 = vmatpush1.msra.mxu0 0.0
    %1494 = vmatprep.subr.mxu0 0.0
    %1495 = vmatpush1.msra.mxu0 0.0
    %1496 = vmatprep.subr.mxu0 0.0
    %1497 = vmatpush1.msra.mxu0 0.0
    %1498 = vmatprep.subr.mxu0 0.0
    %1499 = vmatpush1.msra.mxu0 0.0
    %1500 = vmatprep.subr.mxu0 0.0
    %1501 = vmatpush1.msra.mxu0 0.0
    %1502 = vmatprep.subr.mxu0 0.0
    %1503 = vmatpush1.msra.mxu0 0.0
    %1504 = vmatprep.subr.mxu0 0.0
    %1505 = vmatpush1.msra.mxu0 0.0
    %1506 = vmatprep.subr.mxu0 0.0
    %1507 = vmatpush1.msra.mxu0 0.0
    %1508 = vmatprep.subr.mxu0 0.0
    %1509 = vmatpush1.msra.mxu0 0.0
    %1510 = vmatprep.subr.mxu0 0.0
    %1511 = vmatpush1.msra.mxu0 0.0
    %1512 = vmatprep.subr.mxu0 0.0
    %1513 = vmatpush1.msra.mxu0 0.0
    %1514 = vmatprep.subr.mxu0 0.0
    %1515 = vmatpush1.msra.mxu0 0.0
    %1516 = vmatprep.subr.mxu0 0.0
    %1517 = vmatpush1.msra.mxu0 0.0
    %1518 = vmatprep.subr.mxu0 0.0
    %1519 = vmatpush1.msra.mxu0 0.0
    %1520 = vmatprep.subr.mxu0 0.0
    %1521 = vmatpush1.msra.mxu0 0.0
    %1522 = vmatprep.subr.mxu0 0.0
    %1523 = vmatpush1.msra.mxu0 0.0
    %1524 = vmatprep.mubr.f32.mxu0 0.0
    %1525 = vmatmul.mubr.f32.gmra.mrb[0].mxu0 %v1456
    %v1526 = vpop.f32.mrb[0].mxu0
    %v1527 = vadd.f32 0.0, %v1526
    %v1528 = vpop.f32.mrb[0].mxu0
    %1529 = vmatprep.mubr.f32.mxu0 0.0
    %1530 = vmatmul.mubr.f32.gmra.mrb[0].mxu0 %v1457
    %v1531 = vpop.f32.mrb[0].mxu0
    %v1532 = vadd.f32 0.0, %v1531
    %v1533 = vpop.f32.mrb[0].mxu0
    %1534 = vmatprep.mubr.f32.mxu0 0.0
    %1535 = vmatmul.mubr.f32.gmra.mrb[0].mxu0 %v1458
    %v1536 = vpop.f32.mrb[0].mxu0
    %v1537 = vadd.f32 0.0, %v1536
    %v1538 = vpop.f32.mrb[0].mxu0
    %1539 = vmatprep.mubr.f32.mxu0 0.0
    %1540 = vmatmul.mubr.f32.gmra.mrb[0].mxu0 %v1459
    %v1541 = vpop.f32.mrb[0].mxu0
    %v1542 = vadd.f32 0.0, %v1541
    %v1543 = vpop.f32.mrb[0].mxu0
    %1544 = vdwg.mxu0
    %v1545 = vlaneseq
    %v1546 = vshrl.u32 %v1545, 7
    %v1547 = vsub.s32 0, %v1546
    %v1548 = vrot.slane %v1119, %v1547
    %v1549 = vmul.f32 %v1527, %v1548
    %v1550 = vmul.f32 %v1532, %v1548
    %v1551 = vmul.f32 %v1537, %v1548
    %v1552 = vmul.f32 %v1542, %v1548
    %v1553 = vadd.f32 %v1451, %v1549
    %v1554 = vadd.f32 %v1452, %v1550
    %v1555 = vadd.f32 %v1453, %v1551
    %v1556 = vadd.f32 %v1454, %v1552
    %s1557 = scalar_lea.vmem %s5, 96
    %v1558 = vld [vmem:[%s1557] sm:$0xff]
    %v1559 = vld [vmem:[%s1557 + $0x8] sm:$0xff]
    %v1560 = vld [vmem:[%s1557 + $0x10] sm:$0xff]
    %v1561 = vld [vmem:[%s1557 + $0x18] sm:$0xff]
    %1578 = vrot.lane.b32.xlu0 %v208, 64
    %v1579 = vpop.permute.xlu0 %1578
    %1580 = vrot.lane.b32.xlu0 %v214, 64
    %v1581 = vpop.permute.xlu0 %1580
    %1582 = vrot.lane.b32.xlu0 %v220, 64
    %v1583 = vpop.permute.xlu0 %1582
    %1584 = vrot.lane.b32.xlu0 %v226, 64
    %v1585 = vpop.permute.xlu0 %1584
    %1586 = vrot.lane.b32.xlu0 %v232, 64
    %v1587 = vpop.permute.xlu0 %1586
    %1588 = vrot.lane.b32.xlu0 %v238, 64
    %v1589 = vpop.permute.xlu0 %1588
    %1590 = vrot.lane.b32.xlu0 %v244, 64
    %v1591 = vpop.permute.xlu0 %1590
    %1592 = vrot.lane.b32.xlu0 %v250, 64
    %v1593 = vpop.permute.xlu0 %1592
    %1594 = vrot.lane.b32.xlu0 %v256, 64
    %v1595 = vpop.permute.xlu0 %1594
    %1596 = vrot.lane.b32.xlu0 %v262, 64
    %v1597 = vpop.permute.xlu0 %1596
    %1598 = vrot.lane.b32.xlu0 %v268, 64
    %v1599 = vpop.permute.xlu0 %1598
    %1600 = vrot.lane.b32.xlu0 %v274, 64
    %v1601 = vpop.permute.xlu0 %1600
    %1602 = vrot.lane.b32.xlu0 %v280, 64
    %v1603 = vpop.permute.xlu0 %1602
    %1604 = vrot.lane.b32.xlu0 %v286, 64
    %v1605 = vpop.permute.xlu0 %1604
    %1606 = vrot.lane.b32.xlu0 %v292, 64
    %v1607 = vpop.permute.xlu0 %1606
    %1608 = vrot.lane.b32.xlu0 %v298, 64
    %v1609 = vpop.permute.xlu0 %1608
    %1626 = vmatprep.subr.mxu0 0.0
    %1627 = vmatpush1.msra.mxu0 %v1579
    %1628 = vmatprep.subr.mxu0 0.0
    %1629 = vmatpush1.msra.mxu0 %v1581
    %1630 = vmatprep.subr.mxu0 0.0
    %1631 = vmatpush1.msra.mxu0 %v1583
    %1632 = vmatprep.subr.mxu0 0.0
    %1633 = vmatpush1.msra.mxu0 %v1585
    %1634 = vmatprep.subr.mxu0 0.0
    %1635 = vmatpush1.msra.mxu0 %v1587
    %1636 = vmatprep.subr.mxu0 0.0
    %1637 = vmatpush1.msra.mxu0 %v1589
    %1638 = vmatprep.subr.mxu0 0.0
    %1639 = vmatpush1.msra.mxu0 %v1591
    %1640 = vmatprep.subr.mxu0 0.0
    %1641 = vmatpush1.msra.mxu0 %v1593
    %1642 = vmatprep.subr.mxu0 0.0
    %1643 = vmatpush1.msra.mxu0 %v1595
    %1644 = vmatprep.subr.mxu0 0.0
    %1645 = vmatpush1.msra.mxu0 %v1597
    %1646 = vmatprep.subr.mxu0 0.0
    %1647 = vmatpush1.msra.mxu0 %v1599
    %1648 = vmatprep.subr.mxu0 0.0
    %1649 = vmatpush1.msra.mxu0 %v1601
    %1650 = vmatprep.subr.mxu0 0.0
    %1651 = vmatpush1.msra.mxu0 %v1603
    %1652 = vmatprep.subr.mxu0 0.0
    %1653 = vmatpush1.msra.mxu0 %v1605
    %1654 = vmatprep.subr.mxu0 0.0
    %1655 = vmatpush1.msra.mxu0 %v1607
    %1656 = vmatprep.subr.mxu0 0.0
    %1657 = vmatpush1.msra.mxu0 %v1609
    %1658 = vmatprep.subr.mxu0 0.0
    %1659 = vmatpush1.msra.mxu0 0.0
    %1660 = vmatprep.subr.mxu0 0.0
    %1661 = vmatpush1.msra.mxu0 0.0
    %1662 = vmatprep.subr.mxu0 0.0
    %1663 = vmatpush1.msra.mxu0 0.0
    %1664 = vmatprep.subr.mxu0 0.0
    %1665 = vmatpush1.msra.mxu0 0.0
    %1666 = vmatprep.subr.mxu0 0.0
    %1667 = vmatpush1.msra.mxu0 0.0
    %1668 = vmatprep.subr.mxu0 0.0
    %1669 = vmatpush1.msra.mxu0 0.0
    %1670 = vmatprep.subr.mxu0 0.0
    %1671 = vmatpush1.msra.mxu0 0.0
    %1672 = vmatprep.subr.mxu0 0.0
    %1673 = vmatpush1.msra.mxu0 0.0
    %1674 = vmatprep.subr.mxu0 0.0
    %1675 = vmatpush1.msra.mxu0 0.0
    %1676 = vmatprep.subr.mxu0 0.0
    %1677 = vmatpush1.msra.mxu0 0.0
    %1678 = vmatprep.subr.mxu0 0.0
    %1679 = vmatpush1.msra.mxu0 0.0
    %1680 = vmatprep.subr.mxu0 0.0
    %1681 = vmatpush1.msra.mxu0 0.0
    %1682 = vmatprep.subr.mxu0 0.0
    %1683 = vmatpush1.msra.mxu0 0.0
    %1684 = vmatprep.subr.mxu0 0.0
    %1685 = vmatpush1.msra.mxu0 0.0
    %1686 = vmatprep.subr.mxu0 0.0
    %1687 = vmatpush1.msra.mxu0 0.0
    %1688 = vmatprep.subr.mxu0 0.0
    %1689 = vmatpush1.msra.mxu0 0.0
    %1690 = vmatprep.mubr.f32.mxu0 0.0
    %1691 = vmatmul.mubr.f32.gmra.mrb[0].mxu0 %v1558
    %v1692 = vpop.f32.mrb[0].mxu0
    %v1693 = vadd.f32 0.0, %v1692
    %v1694 = vpop.f32.mrb[0].mxu0
    %1695 = vmatprep.mubr.f32.mxu0 0.0
    %1696 = vmatmul.mubr.f32.gmra.mrb[0].mxu0 %v1559
    %v1697 = vpop.f32.mrb[0].mxu0
    %v1698 = vadd.f32 0.0, %v1697
    %v1699 = vpop.f32.mrb[0].mxu0
    %1700 = vmatprep.mubr.f32.mxu0 0.0
    %1701 = vmatmul.mubr.f32.gmra.mrb[0].mxu0 %v1560
    %v1702 = vpop.f32.mrb[0].mxu0
    %v1703 = vadd.f32 0.0, %v1702
    %v1704 = vpop.f32.mrb[0].mxu0
    %1705 = vmatprep.mubr.f32.mxu0 0.0
    %1706 = vmatmul.mubr.f32.gmra.mrb[0].mxu0 %v1561
    %v1707 = vpop.f32.mrb[0].mxu0
    %v1708 = vadd.f32 0.0, %v1707
    %v1709 = vpop.f32.mrb[0].mxu0
    %1710 = vdwg.mxu0
    %1712 = vrot.lane.b32.xlu0 %v1548, 64
    %v1713 = vpop.permute.xlu0 %1712
    %v1715 = vmul.f32 %v1693, %v1713
    %v1716 = vmul.f32 %v1698, %v1713
    %v1717 = vmul.f32 %v1703, %v1713
    %v1718 = vmul.f32 %v1708, %v1713
    %v1719 = vadd.f32 %v1553, %v1715
    %v1720 = vadd.f32 %v1554, %v1716
    %v1721 = vadd.f32 %v1555, %v1717
    %v1722 = vadd.f32 %v1556, %v1718
    %s1723 = scalar_lea.vmem %s5, 128
    %v1724 = vld [vmem:[%s1723] sm:$0xff]
    %v1725 = vld [vmem:[%s1723 + $0x8] sm:$0xff]
    %v1726 = vld [vmem:[%s1723 + $0x10] sm:$0xff]
    %v1727 = vld [vmem:[%s1723 + $0x18] sm:$0xff]
    %1728 = vmatprep.subr.mxu0 0.0
    %1729 = vmatpush1.msra.mxu0 %v367
    %1730 = vmatprep.subr.mxu0 0.0
    %1731 = vmatpush1.msra.mxu0 %v373
    %1732 = vmatprep.subr.mxu0 0.0
    %1733 = vmatpush1.msra.mxu0 %v379
    %1734 = vmatprep.subr.mxu0 0.0
    %1735 = vmatpush1.msra.mxu0 %v385
    %1736 = vmatprep.subr.mxu0 0.0
    %1737 = vmatpush1.msra.mxu0 %v391
    %1738 = vmatprep.subr.mxu0 0.0
    %1739 = vmatpush1.msra.mxu0 %v397
    %1740 = vmatprep.subr.mxu0 0.0
    %1741 = vmatpush1.msra.mxu0 %v403
    %1742 = vmatprep.subr.mxu0 0.0
    %1743 = vmatpush1.msra.mxu0 %v409
    %1744 = vmatprep.subr.mxu0 0.0
    %1745 = vmatpush1.msra.mxu0 %v415
    %1746 = vmatprep.subr.mxu0 0.0
    %1747 = vmatpush1.msra.mxu0 %v421
    %1748 = vmatprep.subr.mxu0 0.0
    %1749 = vmatpush1.msra.mxu0 %v427
    %1750 = vmatprep.subr.mxu0 0.0
    %1751 = vmatpush1.msra.mxu0 %v433
    %1752 = vmatprep.subr.mxu0 0.0
    %1753 = vmatpush1.msra.mxu0 %v439
    %1754 = vmatprep.subr.mxu0 0.0
    %1755 = vmatpush1.msra.mxu0 %v445
    %1756 = vmatprep.subr.mxu0 0.0
    %1757 = vmatpush1.msra.mxu0 %v451
    %1758 = vmatprep.subr.mxu0 0.0
    %1759 = vmatpush1.msra.mxu0 %v457
    %1760 = vmatprep.subr.mxu0 0.0
    %1761 = vmatpush1.msra.mxu0 0.0
    %1762 = vmatprep.subr.mxu0 0.0
    %1763 = vmatpush1.msra.mxu0 0.0
    %1764 = vmatprep.subr.mxu0 0.0
    %1765 = vmatpush1.msra.mxu0 0.0
    %1766 = vmatprep.subr.mxu0 0.0
    %1767 = vmatpush1.msra.mxu0 0.0
    %1768 = vmatprep.subr.mxu0 0.0
    %1769 = vmatpush1.msra.mxu0 0.0
    %1770 = vmatprep.subr.mxu0 0.0
    %1771 = vmatpush1.msra.mxu0 0.0
    %1772 = vmatprep.subr.mxu0 0.0
    %1773 = vmatpush1.msra.mxu0 0.0
    %1774 = vmatprep.subr.mxu0 0.0
    %1775 = vmatpush1.msra.mxu0 0.0
    %1776 = vmatprep.subr.mxu0 0.0
    %1777 = vmatpush1.msra.mxu0 0.0
    %1778 = vmatprep.subr.mxu0 0.0
    %1779 = vmatpush1.msra.mxu0 0.0
    %1780 = vmatprep.subr.mxu0 0.0
    %1781 = vmatpush1.msra.mxu0 0.0
    %1782 = vmatprep.subr.mxu0 0.0
    %1783 = vmatpush1.msra.mxu0 0.0
    %1784 = vmatprep.subr.mxu0 0.0
    %1785 = vmatpush1.msra.mxu0 0.0
    %1786 = vmatprep.subr.mxu0 0.0
    %1787 = vmatpush1.msra.mxu0 0.0
    %1788 = vmatprep.subr.mxu0 0.0
    %1789 = vmatpush1.msra.mxu0 0.0
    %1790 = vmatprep.subr.mxu0 0.0
    %1791 = vmatpush1.msra.mxu0 0.0
    %1792 = vmatprep.mubr.f32.mxu0 0.0
    %1793 = vmatmul.mubr.f32.gmra.mrb[0].mxu0 %v1724
    %v1794 = vpop.f32.mrb[0].mxu0
    %v1795 = vadd.f32 0.0, %v1794
    %v1796 = vpop.f32.mrb[0].mxu0
    %1797 = vmatprep.mubr.f32.mxu0 0.0
    %1798 = vmatmul.mubr.f32.gmra.mrb[0].mxu0 %v1725
    %v1799 = vpop.f32.mrb[0].mxu0
    %v1800 = vadd.f32 0.0, %v1799
    %v1801 = vpop.f32.mrb[0].mxu0
    %1802 = vmatprep.mubr.f32.mxu0 0.0
    %1803 = vmatmul.mubr.f32.gmra.mrb[0].mxu0 %v1726
    %v1804 = vpop.f32.mrb[0].mxu0
    %v1805 = vadd.f32 0.0, %v1804
    %v1806 = vpop.f32.mrb[0].mxu0
    %1807 = vmatprep.mubr.f32.mxu0 0.0
    %1808 = vmatmul.mubr.f32.gmra.mrb[0].mxu0 %v1727
    %v1809 = vpop.f32.mrb[0].mxu0
    %v1810 = vadd.f32 0.0, %v1809
    %v1811 = vpop.f32.mrb[0].mxu0
    %1812 = vdwg.mxu0
    %v1813 = vlaneseq
    %v1814 = vshrl.u32 %v1813, 7
    %v1815 = vsub.s32 0, %v1814
    %v1816 = vrot.slane %v1188, %v1815
    %v1817 = vmul.f32 %v1795, %v1816
    %v1818 = vmul.f32 %v1800, %v1816
    %v1819 = vmul.f32 %v1805, %v1816
    %v1820 = vmul.f32 %v1810, %v1816
    %v1821 = vadd.f32 %v1719, %v1817
    %v1822 = vadd.f32 %v1720, %v1818
    %v1823 = vadd.f32 %v1721, %v1819
    %v1824 = vadd.f32 %v1722, %v1820
    %s1825 = scalar_lea.vmem %s5, 160
    %v1826 = vld [vmem:[%s1825] sm:$0xff]
    %v1827 = vld [vmem:[%s1825 + $0x8] sm:$0xff]
    %v1828 = vld [vmem:[%s1825 + $0x10] sm:$0xff]
    %v1829 = vld [vmem:[%s1825 + $0x18] sm:$0xff]
    %1846 = vrot.lane.b32.xlu0 %v367, 64
    %v1847 = vpop.permute.xlu0 %1846
    %1848 = vrot.lane.b32.xlu0 %v373, 64
    %v1849 = vpop.permute.xlu0 %1848
    %1850 = vrot.lane.b32.xlu0 %v379, 64
    %v1851 = vpop.permute.xlu0 %1850
    %1852 = vrot.lane.b32.xlu0 %v385, 64
    %v1853 = vpop.permute.xlu0 %1852
    %1854 = vrot.lane.b32.xlu0 %v391, 64
    %v1855 = vpop.permute.xlu0 %1854
    %1856 = vrot.lane.b32.xlu0 %v397, 64
    %v1857 = vpop.permute.xlu0 %1856
    %1858 = vrot.lane.b32.xlu0 %v403, 64
    %v1859 = vpop.permute.xlu0 %1858
    %1860 = vrot.lane.b32.xlu0 %v409, 64
    %v1861 = vpop.permute.xlu0 %1860
    %1862 = vrot.lane.b32.xlu0 %v415, 64
    %v1863 = vpop.permute.xlu0 %1862
    %1864 = vrot.lane.b32.xlu0 %v421, 64
    %v1865 = vpop.permute.xlu0 %1864
    %1866 = vrot.lane.b32.xlu0 %v427, 64
    %v1867 = vpop.permute.xlu0 %1866
    %1868 = vrot.lane.b32.xlu0 %v433, 64
    %v1869 = vpop.permute.xlu0 %1868
    %1870 = vrot.lane.b32.xlu0 %v439, 64
    %v1871 = vpop.permute.xlu0 %1870
    %1872 = vrot.lane.b32.xlu0 %v445, 64
    %v1873 = vpop.permute.xlu0 %1872
    %1874 = vrot.lane.b32.xlu0 %v451, 64
    %v1875 = vpop.permute.xlu0 %1874
    %1876 = vrot.lane.b32.xlu0 %v457, 64
    %v1877 = vpop.permute.xlu0 %1876
    %1894 = vmatprep.subr.mxu0 0.0
    %1895 = vmatpush1.msra.mxu0 %v1847
    %1896 = vmatprep.subr.mxu0 0.0
    %1897 = vmatpush1.msra.mxu0 %v1849
    %1898 = vmatprep.subr.mxu0 0.0
    %1899 = vmatpush1.msra.mxu0 %v1851
    %1900 = vmatprep.subr.mxu0 0.0
    %1901 = vmatpush1.msra.mxu0 %v1853
    %1902 = vmatprep.subr.mxu0 0.0
    %1903 = vmatpush1.msra.mxu0 %v1855
    %1904 = vmatprep.subr.mxu0 0.0
    %1905 = vmatpush1.msra.mxu0 %v1857
    %1906 = vmatprep.subr.mxu0 0.0
    %1907 = vmatpush1.msra.mxu0 %v1859
    %1908 = vmatprep.subr.mxu0 0.0
    %1909 = vmatpush1.msra.mxu0 %v1861
    %1910 = vmatprep.subr.mxu0 0.0
    %1911 = vmatpush1.msra.mxu0 %v1863
    %1912 = vmatprep.subr.mxu0 0.0
    %1913 = vmatpush1.msra.mxu0 %v1865
    %1914 = vmatprep.subr.mxu0 0.0
    %1915 = vmatpush1.msra.mxu0 %v1867
    %1916 = vmatprep.subr.mxu0 0.0
    %1917 = vmatpush1.msra.mxu0 %v1869
    %1918 = vmatprep.subr.mxu0 0.0
    %1919 = vmatpush1.msra.mxu0 %v1871
    %1920 = vmatprep.subr.mxu0 0.0
    %1921 = vmatpush1.msra.mxu0 %v1873
    %1922 = vmatprep.subr.mxu0 0.0
    %1923 = vmatpush1.msra.mxu0 %v1875
    %1924 = vmatprep.subr.mxu0 0.0
    %1925 = vmatpush1.msra.mxu0 %v1877
    %1926 = vmatprep.subr.mxu0 0.0
    %1927 = vmatpush1.msra.mxu0 0.0
    %1928 = vmatprep.subr.mxu0 0.0
    %1929 = vmatpush1.msra.mxu0 0.0
    %1930 = vmatprep.subr.mxu0 0.0
    %1931 = vmatpush1.msra.mxu0 0.0
    %1932 = vmatprep.subr.mxu0 0.0
    %1933 = vmatpush1.msra.mxu0 0.0
    %1934 = vmatprep.subr.mxu0 0.0
    %1935 = vmatpush1.msra.mxu0 0.0
    %1936 = vmatprep.subr.mxu0 0.0
    %1937 = vmatpush1.msra.mxu0 0.0
    %1938 = vmatprep.subr.mxu0 0.0
    %1939 = vmatpush1.msra.mxu0 0.0
    %1940 = vmatprep.subr.mxu0 0.0
    %1941 = vmatpush1.msra.mxu0 0.0
    %1942 = vmatprep.subr.mxu0 0.0
    %1943 = vmatpush1.msra.mxu0 0.0
    %1944 = vmatprep.subr.mxu0 0.0
    %1945 = vmatpush1.msra.mxu0 0.0
    %1946 = vmatprep.subr.mxu0 0.0
    %1947 = vmatpush1.msra.mxu0 0.0
    %1948 = vmatprep.subr.mxu0 0.0
    %1949 = vmatpush1.msra.mxu0 0.0
    %1950 = vmatprep.subr.mxu0 0.0
    %1951 = vmatpush1.msra.mxu0 0.0
    %1952 = vmatprep.subr.mxu0 0.0
    %1953 = vmatpush1.msra.mxu0 0.0
    %1954 = vmatprep.subr.mxu0 0.0
    %1955 = vmatpush1.msra.mxu0 0.0
    %1956 = vmatprep.subr.mxu0 0.0
    %1957 = vmatpush1.msra.mxu0 0.0
    %1958 = vmatprep.mubr.f32.mxu0 0.0
    %1959 = vmatmul.mubr.f32.gmra.mrb[0].mxu0 %v1826
    %v1960 = vpop.f32.mrb[0].mxu0
    %v1961 = vadd.f32 0.0, %v1960
    %v1962 = vpop.f32.mrb[0].mxu0
    %1963 = vmatprep.mubr.f32.mxu0 0.0
    %1964 = vmatmul.mubr.f32.gmra.mrb[0].mxu0 %v1827
    %v1965 = vpop.f32.mrb[0].mxu0
    %v1966 = vadd.f32 0.0, %v1965
    %v1967 = vpop.f32.mrb[0].mxu0
    %1968 = vmatprep.mubr.f32.mxu0 0.0
    %1969 = vmatmul.mubr.f32.gmra.mrb[0].mxu0 %v1828
    %v1970 = vpop.f32.mrb[0].mxu0
    %v1971 = vadd.f32 0.0, %v1970
    %v1972 = vpop.f32.mrb[0].mxu0
    %1973 = vmatprep.mubr.f32.mxu0 0.0
    %1974 = vmatmul.mubr.f32.gmra.mrb[0].mxu0 %v1829
    %v1975 = vpop.f32.mrb[0].mxu0
    %v1976 = vadd.f32 0.0, %v1975
    %v1977 = vpop.f32.mrb[0].mxu0
    %1978 = vdwg.mxu0
    %1980 = vrot.lane.b32.xlu0 %v1816, 64
    %v1981 = vpop.permute.xlu0 %1980
    %v1983 = vmul.f32 %v1961, %v1981
    %v1984 = vmul.f32 %v1966, %v1981
    %v1985 = vmul.f32 %v1971, %v1981
    %v1986 = vmul.f32 %v1976, %v1981
    %v1987 = vadd.f32 %v1821, %v1983
    %v1988 = vadd.f32 %v1822, %v1984
    %v1989 = vadd.f32 %v1823, %v1985
    %v1990 = vadd.f32 %v1824, %v1986
    %s1991 = scalar_lea.vmem %s5, 192
    %v1992 = vld [vmem:[%s1991] sm:$0xff]
    %v1993 = vld [vmem:[%s1991 + $0x8] sm:$0xff]
    %v1994 = vld [vmem:[%s1991 + $0x10] sm:$0xff]
    %v1995 = vld [vmem:[%s1991 + $0x18] sm:$0xff]
    %1996 = vmatprep.subr.mxu0 0.0
    %1997 = vmatpush1.msra.mxu0 %v369
    %1998 = vmatprep.subr.mxu0 0.0
    %1999 = vmatpush1.msra.mxu0 %v375
    %2000 = vmatprep.subr.mxu0 0.0
    %2001 = vmatpush1.msra.mxu0 %v381
    %2002 = vmatprep.subr.mxu0 0.0
    %2003 = vmatpush1.msra.mxu0 %v387
    %2004 = vmatprep.subr.mxu0 0.0
    %2005 = vmatpush1.msra.mxu0 %v393
    %2006 = vmatprep.subr.mxu0 0.0
    %2007 = vmatpush1.msra.mxu0 %v399
    %2008 = vmatprep.subr.mxu0 0.0
    %2009 = vmatpush1.msra.mxu0 %v405
    %2010 = vmatprep.subr.mxu0 0.0
    %2011 = vmatpush1.msra.mxu0 %v411
    %2012 = vmatprep.subr.mxu0 0.0
    %2013 = vmatpush1.msra.mxu0 %v417
    %2014 = vmatprep.subr.mxu0 0.0
    %2015 = vmatpush1.msra.mxu0 %v423
    %2016 = vmatprep.subr.mxu0 0.0
    %2017 = vmatpush1.msra.mxu0 %v429
    %2018 = vmatprep.subr.mxu0 0.0
    %2019 = vmatpush1.msra.mxu0 %v435
    %2020 = vmatprep.subr.mxu0 0.0
    %2021 = vmatpush1.msra.mxu0 %v441
    %2022 = vmatprep.subr.mxu0 0.0
    %2023 = vmatpush1.msra.mxu0 %v447
    %2024 = vmatprep.subr.mxu0 0.0
    %2025 = vmatpush1.msra.mxu0 %v453
    %2026 = vmatprep.subr.mxu0 0.0
    %2027 = vmatpush1.msra.mxu0 %v459
    %2028 = vmatprep.subr.mxu0 0.0
    %2029 = vmatpush1.msra.mxu0 0.0
    %2030 = vmatprep.subr.mxu0 0.0
    %2031 = vmatpush1.msra.mxu0 0.0
    %2032 = vmatprep.subr.mxu0 0.0
    %2033 = vmatpush1.msra.mxu0 0.0
    %2034 = vmatprep.subr.mxu0 0.0
    %2035 = vmatpush1.msra.mxu0 0.0
    %2036 = vmatprep.subr.mxu0 0.0
    %2037 = vmatpush1.msra.mxu0 0.0
    %2038 = vmatprep.subr.mxu0 0.0
    %2039 = vmatpush1.msra.mxu0 0.0
    %2040 = vmatprep.subr.mxu0 0.0
    %2041 = vmatpush1.msra.mxu0 0.0
    %2042 = vmatprep.subr.mxu0 0.0
    %2043 = vmatpush1.msra.mxu0 0.0
    %2044 = vmatprep.subr.mxu0 0.0
    %2045 = vmatpush1.msra.mxu0 0.0
    %2046 = vmatprep.subr.mxu0 0.0
    %2047 = vmatpush1.msra.mxu0 0.0
    %2048 = vmatprep.subr.mxu0 0.0
    %2049 = vmatpush1.msra.mxu0 0.0
    %2050 = vmatprep.subr.mxu0 0.0
    %2051 = vmatpush1.msra.mxu0 0.0
    %2052 = vmatprep.subr.mxu0 0.0
    %2053 = vmatpush1.msra.mxu0 0.0
    %2054 = vmatprep.subr.mxu0 0.0
    %2055 = vmatpush1.msra.mxu0 0.0
    %2056 = vmatprep.subr.mxu0 0.0
    %2057 = vmatpush1.msra.mxu0 0.0
    %2058 = vmatprep.subr.mxu0 0.0
    %2059 = vmatpush1.msra.mxu0 0.0
    %2060 = vmatprep.mubr.f32.mxu0 0.0
    %2061 = vmatmul.mubr.f32.gmra.mrb[0].mxu0 %v1992
    %v2062 = vpop.f32.mrb[0].mxu0
    %v2063 = vadd.f32 0.0, %v2062
    %v2064 = vpop.f32.mrb[0].mxu0
    %2065 = vmatprep.mubr.f32.mxu0 0.0
    %2066 = vmatmul.mubr.f32.gmra.mrb[0].mxu0 %v1993
    %v2067 = vpop.f32.mrb[0].mxu0
    %v2068 = vadd.f32 0.0, %v2067
    %v2069 = vpop.f32.mrb[0].mxu0
    %2070 = vmatprep.mubr.f32.mxu0 0.0
    %2071 = vmatmul.mubr.f32.gmra.mrb[0].mxu0 %v1994
    %v2072 = vpop.f32.mrb[0].mxu0
    %v2073 = vadd.f32 0.0, %v2072
    %v2074 = vpop.f32.mrb[0].mxu0
    %2075 = vmatprep.mubr.f32.mxu0 0.0
    %2076 = vmatmul.mubr.f32.gmra.mrb[0].mxu0 %v1995
    %v2077 = vpop.f32.mrb[0].mxu0
    %v2078 = vadd.f32 0.0, %v2077
    %v2079 = vpop.f32.mrb[0].mxu0
    %2080 = vdwg.mxu0
    %v2081 = vlaneseq
    %v2082 = vshrl.u32 %v2081, 7
    %v2083 = vsub.s32 0, %v2082
    %v2084 = vrot.slane %v1190, %v2083
    %v2085 = vmul.f32 %v2063, %v2084
    %v2086 = vmul.f32 %v2068, %v2084
    %v2087 = vmul.f32 %v2073, %v2084
    %v2088 = vmul.f32 %v2078, %v2084
    %v2089 = vadd.f32 %v1987, %v2085
    %v2090 = vadd.f32 %v1988, %v2086
    %v2091 = vadd.f32 %v1989, %v2087
    %v2092 = vadd.f32 %v1990, %v2088
    %s2093 = scalar_lea.vmem %s5, 224
    %v2094 = vld [vmem:[%s2093] sm:$0xff]
    %v2095 = vld [vmem:[%s2093 + $0x8] sm:$0xff]
    %v2096 = vld [vmem:[%s2093 + $0x10] sm:$0xff]
    %v2097 = vld [vmem:[%s2093 + $0x18] sm:$0xff]
    %2114 = vrot.lane.b32.xlu0 %v369, 64
    %v2115 = vpop.permute.xlu0 %2114
    %2116 = vrot.lane.b32.xlu0 %v375, 64
    %v2117 = vpop.permute.xlu0 %2116
    %2118 = vrot.lane.b32.xlu0 %v381, 64
    %v2119 = vpop.permute.xlu0 %2118
    %2120 = vrot.lane.b32.xlu0 %v387, 64
    %v2121 = vpop.permute.xlu0 %2120
    %2122 = vrot.lane.b32.xlu0 %v393, 64
    %v2123 = vpop.permute.xlu0 %2122
    %2124 = vrot.lane.b32.xlu0 %v399, 64
    %v2125 = vpop.permute.xlu0 %2124
    %2126 = vrot.lane.b32.xlu0 %v405, 64
    %v2127 = vpop.permute.xlu0 %2126
    %2128 = vrot.lane.b32.xlu0 %v411, 64
    %v2129 = vpop.permute.xlu0 %2128
    %2130 = vrot.lane.b32.xlu0 %v417, 64
    %v2131 = vpop.permute.xlu0 %2130
    %2132 = vrot.lane.b32.xlu0 %v423, 64
    %v2133 = vpop.permute.xlu0 %2132
    %2134 = vrot.lane.b32.xlu0 %v429, 64
    %v2135 = vpop.permute.xlu0 %2134
    %2136 = vrot.lane.b32.xlu0 %v435, 64
    %v2137 = vpop.permute.xlu0 %2136
    %2138 = vrot.lane.b32.xlu0 %v441, 64
    %v2139 = vpop.permute.xlu0 %2138
    %2140 = vrot.lane.b32.xlu0 %v447, 64
    %v2141 = vpop.permute.xlu0 %2140
    %2142 = vrot.lane.b32.xlu0 %v453, 64
    %v2143 = vpop.permute.xlu0 %2142
    %2144 = vrot.lane.b32.xlu0 %v459, 64
    %v2145 = vpop.permute.xlu0 %2144
    %2162 = vmatprep.subr.mxu0 0.0
    %2163 = vmatpush1.msra.mxu0 %v2115
    %2164 = vmatprep.subr.mxu0 0.0
    %2165 = vmatpush1.msra.mxu0 %v2117
    %2166 = vmatprep.subr.mxu0 0.0
    %2167 = vmatpush1.msra.mxu0 %v2119
    %2168 = vmatprep.subr.mxu0 0.0
    %2169 = vmatpush1.msra.mxu0 %v2121
    %2170 = vmatprep.subr.mxu0 0.0
    %2171 = vmatpush1.msra.mxu0 %v2123
    %2172 = vmatprep.subr.mxu0 0.0
    %2173 = vmatpush1.msra.mxu0 %v2125
    %2174 = vmatprep.subr.mxu0 0.0
    %2175 = vmatpush1.msra.mxu0 %v2127
    %2176 = vmatprep.subr.mxu0 0.0
    %2177 = vmatpush1.msra.mxu0 %v2129
    %2178 = vmatprep.subr.mxu0 0.0
    %2179 = vmatpush1.msra.mxu0 %v2131
    %2180 = vmatprep.subr.mxu0 0.0
    %2181 = vmatpush1.msra.mxu0 %v2133
    %2182 = vmatprep.subr.mxu0 0.0
    %2183 = vmatpush1.msra.mxu0 %v2135
    %2184 = vmatprep.subr.mxu0 0.0
    %2185 = vmatpush1.msra.mxu0 %v2137
    %2186 = vmatprep.subr.mxu0 0.0
    %2187 = vmatpush1.msra.mxu0 %v2139
    %2188 = vmatprep.subr.mxu0 0.0
    %2189 = vmatpush1.msra.mxu0 %v2141
    %2190 = vmatprep.subr.mxu0 0.0
    %2191 = vmatpush1.msra.mxu0 %v2143
    %2192 = vmatprep.subr.mxu0 0.0
    %2193 = vmatpush1.msra.mxu0 %v2145
    %2194 = vmatprep.subr.mxu0 0.0
    %2195 = vmatpush1.msra.mxu0 0.0
    %2196 = vmatprep.subr.mxu0 0.0
    %2197 = vmatpush1.msra.mxu0 0.0
    %2198 = vmatprep.subr.mxu0 0.0
    %2199 = vmatpush1.msra.mxu0 0.0
    %2200 = vmatprep.subr.mxu0 0.0
    %2201 = vmatpush1.msra.mxu0 0.0
    %2202 = vmatprep.subr.mxu0 0.0
    %2203 = vmatpush1.msra.mxu0 0.0
    %2204 = vmatprep.subr.mxu0 0.0
    %2205 = vmatpush1.msra.mxu0 0.0
    %2206 = vmatprep.subr.mxu0 0.0
    %2207 = vmatpush1.msra.mxu0 0.0
    %2208 = vmatprep.subr.mxu0 0.0
    %2209 = vmatpush1.msra.mxu0 0.0
    %2210 = vmatprep.subr.mxu0 0.0
    %2211 = vmatpush1.msra.mxu0 0.0
    %2212 = vmatprep.subr.mxu0 0.0
    %2213 = vmatpush1.msra.mxu0 0.0
    %2214 = vmatprep.subr.mxu0 0.0
    %2215 = vmatpush1.msra.mxu0 0.0
    %2216 = vmatprep.subr.mxu0 0.0
    %2217 = vmatpush1.msra.mxu0 0.0
    %2218 = vmatprep.subr.mxu0 0.0
    %2219 = vmatpush1.msra.mxu0 0.0
    %2220 = vmatprep.subr.mxu0 0.0
    %2221 = vmatpush1.msra.mxu0 0.0
    %2222 = vmatprep.subr.mxu0 0.0
    %2223 = vmatpush1.msra.mxu0 0.0
    %2224 = vmatprep.subr.mxu0 0.0
    %2225 = vmatpush1.msra.mxu0 0.0
    %2226 = vmatprep.mubr.f32.mxu0 0.0
    %2227 = vmatmul.mubr.f32.gmra.mrb[0].mxu0 %v2094
    %v2228 = vpop.f32.mrb[0].mxu0
    %v2229 = vadd.f32 0.0, %v2228
    %v2230 = vpop.f32.mrb[0].mxu0
    %2231 = vmatprep.mubr.f32.mxu0 0.0
    %2232 = vmatmul.mubr.f32.gmra.mrb[0].mxu0 %v2095
    %v2233 = vpop.f32.mrb[0].mxu0
    %v2234 = vadd.f32 0.0, %v2233
    %v2235 = vpop.f32.mrb[0].mxu0
    %2236 = vmatprep.mubr.f32.mxu0 0.0
    %2237 = vmatmul.mubr.f32.gmra.mrb[0].mxu0 %v2096
    %v2238 = vpop.f32.mrb[0].mxu0
    %v2239 = vadd.f32 0.0, %v2238
    %v2240 = vpop.f32.mrb[0].mxu0
    %2241 = vmatprep.mubr.f32.mxu0 0.0
    %2242 = vmatmul.mubr.f32.gmra.mrb[0].mxu0 %v2097
    %v2243 = vpop.f32.mrb[0].mxu0
    %v2244 = vadd.f32 0.0, %v2243
    %v2245 = vpop.f32.mrb[0].mxu0
    %2246 = vdwg.mxu0
    %2248 = vrot.lane.b32.xlu0 %v2084, 64
    %v2249 = vpop.permute.xlu0 %2248
    %v2251 = vmul.f32 %v2229, %v2249
    %v2252 = vmul.f32 %v2234, %v2249
    %v2253 = vmul.f32 %v2239, %v2249
    %v2254 = vmul.f32 %v2244, %v2249
    %v2255 = vadd.f32 %v2089, %v2251
    %v2256 = vadd.f32 %v2090, %v2252
    %v2257 = vadd.f32 %v2091, %v2253
    %v2258 = vadd.f32 %v2092, %v2254
    %2261 = vrot.lane.b32.xlu0 %v2257, 64
    %v2262 = vpop.permute.xlu0 %2261
    %2263 = vrot.lane.b32.xlu0 %v2258, 64
    %v2264 = vpop.permute.xlu0 %2263
    %vm2267 = vcmask 523264
    %v2268 = vsel %vm2267, %v2255, %v2262
    %v2269 = vsel %vm2267, %v2256, %v2264
    %2270 = vadd.xlane.f32.xlu0 %v2268
    %v2271 = vpop.xlane.xlu0 %2270
    %2272 = vadd.xlane.f32.xlu0 %v2269
    %v2273 = vpop.xlane.xlu0 %2272
    %v2274 = vrcp.pop 128.0
    %v2275 = vmul.f32 %v2271, %v2274
    %v2276 = vmul.f32 %v2273, %v2274
    %v2277 = vsub.f32 %v2268, %v2275
    %v2278 = vsub.f32 %v2269, %v2276
    %v2279 = vmul.f32 %v2277, %v2277
    %v2280 = vmul.f32 %v2278, %v2278
    %2281 = vadd.xlane.f32.xlu0 %v2279
    %v2282 = vpop.xlane.xlu0 %2281
    %2283 = vadd.xlane.f32.xlu0 %v2280
    %v2284 = vpop.xlane.xlu0 %2283
    %v2285 = vmul.f32 %v2282, %v2274
    %v2286 = vmul.f32 %v2284, %v2274
    %v2287 = vrsqrt.pop %v2285
    %v2288 = vrsqrt.pop %v2286
    %v2289 = vmul.f32 %v2277, %v2287
    %v2290 = vmul.f32 %v2278, %v2288
    %v2291 = vld [vmem:[%s6] sm:$0xff]
    %v2292 = vld [vmem:[%s6 + $0x8] sm:$0xff]
    %2294 = vset.pattern.permute.xlu0 0
    %2295 = vperm.xlu0 %2294, %v2291
    %v2296 = vpop.permute.xlu0 %2295
    %2299 = vset.pattern.permute.xlu0 0
    %2300 = vperm.xlu0 %2299, %v2292
    %v2301 = vpop.permute.xlu0 %2300
    %v2303 = vmul.f32 %v2289, %v2296
    %v2304 = vmul.f32 %v2290, %v2301
    %v2305 = vld [vmem:[%s7] sm:$0xff]
    %v2306 = vld [vmem:[%s7 + $0x8] sm:$0xff]
    %2308 = vset.pattern.permute.xlu0 0
    %2309 = vperm.xlu0 %2308, %v2305
    %v2310 = vpop.permute.xlu0 %2309
    %2313 = vset.pattern.permute.xlu0 0
    %2314 = vperm.xlu0 %2313, %v2306
    %v2315 = vpop.permute.xlu0 %2314
    %v2317 = vadd.f32 %v2303, %v2310
    %v2318 = vadd.f32 %v2304, %v2315
    %vm2319 = vcmp.gt.f32.partialorder %v2317, 0.0
    %vm2320 = vcmp.gt.f32.partialorder %v2318, 0.0
    %v2321 = vmin.f32 %v2317, 0.0
    %v2322 = vmin.f32 %v2318, 0.0
    %v2323 = vmul.f32 %v2321, 1.442695
    %v2324 = vpow.pop %v2323
    %v2325 = vmul.f32 %v2322, 1.442695
    %v2326 = vpow.pop %v2325
    %v2327 = vsub.f32 %v2324, 1.0
    %v2328 = vsub.f32 %v2326, 1.0
    %v2329 = vsel %vm2319, %v2317, %v2327
    %v2330 = vsel %vm2320, %v2318, %v2328
    %v2331 = vld [vmem:[%s8] sm:$0xff]
    %v2332 = vld [vmem:[%s8 + $0x8] sm:$0xff]
    %v2333 = vld [vmem:[%s8 + $0x10] sm:$0xff]
    %v2334 = vld [vmem:[%s8 + $0x18] sm:$0xff]
    %v2335 = vld [vmem:[%s8 + $0x20] sm:$0xff]
    %v2336 = vld [vmem:[%s8 + $0x28] sm:$0xff]
    %v2337 = vld [vmem:[%s8 + $0x30] sm:$0xff]
    %v2338 = vld [vmem:[%s8 + $0x38] sm:$0xff]
    %v2339 = vld [vmem:[%s8 + $0x40] sm:$0xff]
    %v2340 = vld [vmem:[%s8 + $0x48] sm:$0xff]
    %v2341 = vld [vmem:[%s8 + $0x50] sm:$0xff]
    %v2342 = vld [vmem:[%s8 + $0x58] sm:$0xff]
    %v2343 = vld [vmem:[%s8 + $0x60] sm:$0xff]
    %v2344 = vld [vmem:[%s8 + $0x68] sm:$0xff]
    %v2345 = vld [vmem:[%s8 + $0x70] sm:$0xff]
    %v2346 = vld [vmem:[%s8 + $0x78] sm:$0xff]
    %2347 = vmatprep.subr.mxu0 0.0
    %2348 = vmatpush1.msra.mxu0 %v2331
    %2349 = vmatprep.subr.mxu0 0.0
    %2350 = vmatpush1.msra.mxu0 %v2332
    %2351 = vmatprep.subr.mxu0 0.0
    %2352 = vmatpush1.msra.mxu0 %v2333
    %2353 = vmatprep.subr.mxu0 0.0
    %2354 = vmatpush1.msra.mxu0 %v2334
    %2355 = vmatprep.subr.mxu0 0.0
    %2356 = vmatpush1.msra.mxu0 %v2335
    %2357 = vmatprep.subr.mxu0 0.0
    %2358 = vmatpush1.msra.mxu0 %v2336
    %2359 = vmatprep.subr.mxu0 0.0
    %2360 = vmatpush1.msra.mxu0 %v2337
    %2361 = vmatprep.subr.mxu0 0.0
    %2362 = vmatpush1.msra.mxu0 %v2338
    %2363 = vmatprep.subr.mxu0 0.0
    %2364 = vmatpush1.msra.mxu0 %v2339
    %2365 = vmatprep.subr.mxu0 0.0
    %2366 = vmatpush1.msra.mxu0 %v2340
    %2367 = vmatprep.subr.mxu0 0.0
    %2368 = vmatpush1.msra.mxu0 %v2341
    %2369 = vmatprep.subr.mxu0 0.0
    %2370 = vmatpush1.msra.mxu0 %v2342
    %2371 = vmatprep.subr.mxu0 0.0
    %2372 = vmatpush1.msra.mxu0 %v2343
    %2373 = vmatprep.subr.mxu0 0.0
    %2374 = vmatpush1.msra.mxu0 %v2344
    %2375 = vmatprep.subr.mxu0 0.0
    %2376 = vmatpush1.msra.mxu0 %v2345
    %2377 = vmatprep.subr.mxu0 0.0
    %2378 = vmatpush1.msra.mxu0 %v2346
    %2379 = vmatprep.subr.mxu0 0.0
    %2380 = vmatpush1.msra.mxu0 0.0
    %2381 = vmatprep.subr.mxu0 0.0
    %2382 = vmatpush1.msra.mxu0 0.0
    %2383 = vmatprep.subr.mxu0 0.0
    %2384 = vmatpush1.msra.mxu0 0.0
    %2385 = vmatprep.subr.mxu0 0.0
    %2386 = vmatpush1.msra.mxu0 0.0
    %2387 = vmatprep.subr.mxu0 0.0
    %2388 = vmatpush1.msra.mxu0 0.0
    %2389 = vmatprep.subr.mxu0 0.0
    %2390 = vmatpush1.msra.mxu0 0.0
    %2391 = vmatprep.subr.mxu0 0.0
    %2392 = vmatpush1.msra.mxu0 0.0
    %2393 = vmatprep.subr.mxu0 0.0
    %2394 = vmatpush1.msra.mxu0 0.0
    %2395 = vmatprep.subr.mxu0 0.0
    %2396 = vmatpush1.msra.mxu0 0.0
    %2397 = vmatprep.subr.mxu0 0.0
    %2398 = vmatpush1.msra.mxu0 0.0
    %2399 = vmatprep.subr.mxu0 0.0
    %2400 = vmatpush1.msra.mxu0 0.0
    %2401 = vmatprep.subr.mxu0 0.0
    %2402 = vmatpush1.msra.mxu0 0.0
    %2403 = vmatprep.subr.mxu0 0.0
    %2404 = vmatpush1.msra.mxu0 0.0
    %2405 = vmatprep.subr.mxu0 0.0
    %2406 = vmatpush1.msra.mxu0 0.0
    %2407 = vmatprep.subr.mxu0 0.0
    %2408 = vmatpush1.msra.mxu0 0.0
    %2409 = vmatprep.subr.mxu0 0.0
    %2410 = vmatpush1.msra.mxu0 0.0
    %2411 = vmatprep.mubr.f32.mxu0 0.0
    %2412 = vmatmul.mubr.f32.gmra.mrb[0].mxu0 %v2329
    %v2413 = vpop.f32.mrb[0].mxu0
    %v2414 = vadd.f32 0.0, %v2413
    %v2415 = vpop.f32.mrb[0].mxu0
    %2416 = vmatprep.mubr.f32.mxu0 0.0
    %2417 = vmatmul.mubr.f32.gmra.mrb[0].mxu0 %v2330
    %v2418 = vpop.f32.mrb[0].mxu0
    %v2419 = vadd.f32 0.0, %v2418
    %v2420 = vpop.f32.mrb[0].mxu0
    %2421 = vdwg.mxu0
    %2424 = vrot.lane.b32.xlu0 %v2414, 96
    %v2425 = vpop.permute.xlu0 %2424
    %2426 = vrot.lane.b32.xlu0 %v2419, 96
    %v2427 = vpop.permute.xlu0 %2426
    %v2430 = vmax.f32 %v2414, %v2425
    %v2431 = vmax.f32 %v2419, %v2427
    %2434 = vrot.lane.b32.xlu0 %v2430, 64
    %v2435 = vpop.permute.xlu0 %2434
    %2436 = vrot.lane.b32.xlu0 %v2431, 64
    %v2437 = vpop.permute.xlu0 %2436
    %v2440 = vmax.f32 %v2430, %v2435
    %v2441 = vmax.f32 %v2431, %v2437
    %v2442 = vld [vmem:[%s9] sm:$0xff]
    %v2443 = vld [vmem:[%s9 + $0x8] sm:$0xff]
    %v2444 = vld [vmem:[%s9 + $0x10] sm:$0xff]
    %v2445 = vld [vmem:[%s9 + $0x18] sm:$0xff]
    %v2446 = vld [vmem:[%s9 + $0x20] sm:$0xff]
    %v2447 = vld [vmem:[%s9 + $0x28] sm:$0xff]
    %v2448 = vld [vmem:[%s9 + $0x30] sm:$0xff]
    %v2449 = vld [vmem:[%s9 + $0x38] sm:$0xff]
    %v2450 = vld [vmem:[%s9 + $0x40] sm:$0xff]
    %v2451 = vld [vmem:[%s9 + $0x48] sm:$0xff]
    %v2452 = vld [vmem:[%s9 + $0x50] sm:$0xff]
    %v2453 = vld [vmem:[%s9 + $0x58] sm:$0xff]
    %vm2454 = vcmask 261120
    %v2456 = vsel %vm2454, %v2440, 0
    %v2459 = vsel %vm2454, %v2441, 0
    %2461 = vmatprep.subr.mxu0 %v2443
    %2462 = vmatpush1.msra.mxu0 %v2442
    %2463 = vmatprep.subr.mxu0 %v2446
    %2464 = vmatpush1.msra.mxu0 %v2445
    %2465 = vmatprep.subr.mxu0 %v2449
    %2466 = vmatpush1.msra.mxu0 %v2448
    %2467 = vmatprep.subr.mxu0 %v2452
    %2468 = vmatpush1.msra.mxu0 %v2451
    %2469 = vmatprep.subr.mxu0 0.0
    %2470 = vmatpush1.msra.mxu0 0.0
    %2471 = vmatprep.subr.mxu0 0.0
    %2472 = vmatpush1.msra.mxu0 0.0
    %2473 = vmatprep.subr.mxu0 0.0
    %2474 = vmatpush1.msra.mxu0 0.0
    %2475 = vmatprep.subr.mxu0 0.0
    %2476 = vmatpush1.msra.mxu0 0.0
    %2477 = vmatprep.subr.mxu0 0.0
    %2478 = vmatpush1.msra.mxu0 0.0
    %2479 = vmatprep.subr.mxu0 0.0
    %2480 = vmatpush1.msra.mxu0 0.0
    %2481 = vmatprep.subr.mxu0 0.0
    %2482 = vmatpush1.msra.mxu0 0.0
    %2483 = vmatprep.subr.mxu0 0.0
    %2484 = vmatpush1.msra.mxu0 0.0
    %2485 = vmatprep.subr.mxu0 0.0
    %2486 = vmatpush1.msra.mxu0 0.0
    %2487 = vmatprep.subr.mxu0 0.0
    %2488 = vmatpush1.msra.mxu0 0.0
    %2489 = vmatprep.subr.mxu0 0.0
    %2490 = vmatpush1.msra.mxu0 0.0
    %2491 = vmatprep.subr.mxu0 0.0
    %2492 = vmatpush1.msra.mxu0 0.0
    %2493 = vmatprep.subr.mxu0 0.0
    %2494 = vmatpush1.msra.mxu0 0.0
    %2495 = vmatprep.subr.mxu0 0.0
    %2496 = vmatpush1.msra.mxu0 0.0
    %2497 = vmatprep.subr.mxu0 0.0
    %2498 = vmatpush1.msra.mxu0 0.0
    %2499 = vmatprep.subr.mxu0 0.0
    %2500 = vmatpush1.msra.mxu0 0.0
    %2501 = vmatprep.subr.mxu0 0.0
    %2502 = vmatpush1.msra.mxu0 0.0
    %2503 = vmatprep.subr.mxu0 0.0
    %2504 = vmatpush1.msra.mxu0 0.0
    %2505 = vmatprep.subr.mxu0 0.0
    %2506 = vmatpush1.msra.mxu0 0.0
    %2507 = vmatprep.subr.mxu0 0.0
    %2508 = vmatpush1.msra.mxu0 0.0
    %2509 = vmatprep.subr.mxu0 0.0
    %2510 = vmatpush1.msra.mxu0 0.0
    %2511 = vmatprep.subr.mxu0 0.0
    %2512 = vmatpush1.msra.mxu0 0.0
    %2513 = vmatprep.subr.mxu0 0.0
    %2514 = vmatpush1.msra.mxu0 0.0
    %2515 = vmatprep.subr.mxu0 0.0
    %2516 = vmatpush1.msra.mxu0 0.0
    %2517 = vmatprep.subr.mxu0 0.0
    %2518 = vmatpush1.msra.mxu0 0.0
    %2519 = vmatprep.subr.mxu0 0.0
    %2520 = vmatpush1.msra.mxu0 0.0
    %2521 = vmatprep.subr.mxu0 0.0
    %2522 = vmatpush1.msra.mxu0 0.0
    %2523 = vmatprep.subr.mxu0 0.0
    %2524 = vmatpush1.msra.mxu0 0.0
    %2525 = vmatprep.mubr.f32.mxu0 0.0
    %2526 = vmatmul.mubr.f32.gmra.mrb[0].mxu0 %v2456
    %v2527 = vpop.f32.mrb[0].mxu0
    %v2528 = vadd.f32 0.0, %v2527
    %v2529 = vpop.f32.mrb[0].mxu0
    %v2530 = vadd.f32 0.0, %v2529
    %2531 = vmatprep.mubr.f32.mxu0 0.0
    %2532 = vmatmul.mubr.f32.gmra.mrb[0].mxu0 %v2459
    %v2533 = vpop.f32.mrb[0].mxu0
    %v2534 = vadd.f32 0.0, %v2533
    %v2535 = vpop.f32.mrb[0].mxu0
    %v2536 = vadd.f32 0.0, %v2535
    %2537 = vdwg.mxu0
    %2538 = vmatprep.subr.mxu0 0.0
    %2539 = vmatpush1.msra.mxu0 %v2444
    %2540 = vmatprep.subr.mxu0 0.0
    %2541 = vmatpush1.msra.mxu0 %v2447
    %2542 = vmatprep.subr.mxu0 0.0
    %2543 = vmatpush1.msra.mxu0 %v2450
    %2544 = vmatprep.subr.mxu0 0.0
    %2545 = vmatpush1.msra.mxu0 %v2453
    %2546 = vmatprep.subr.mxu0 0.0
    %2547 = vmatpush1.msra.mxu0 0.0
    %2548 = vmatprep.subr.mxu0 0.0
    %2549 = vmatpush1.msra.mxu0 0.0
    %2550 = vmatprep.subr.mxu0 0.0
    %2551 = vmatpush1.msra.mxu0 0.0
    %2552 = vmatprep.subr.mxu0 0.0
    %2553 = vmatpush1.msra.mxu0 0.0
    %2554 = vmatprep.subr.mxu0 0.0
    %2555 = vmatpush1.msra.mxu0 0.0
    %2556 = vmatprep.subr.mxu0 0.0
    %2557 = vmatpush1.msra.mxu0 0.0
    %2558 = vmatprep.subr.mxu0 0.0
    %2559 = vmatpush1.msra.mxu0 0.0
    %2560 = vmatprep.subr.mxu0 0.0
    %2561 = vmatpush1.msra.mxu0 0.0
    %2562 = vmatprep.subr.mxu0 0.0
    %2563 = vmatpush1.msra.mxu0 0.0
    %2564 = vmatprep.subr.mxu0 0.0
    %2565 = vmatpush1.msra.mxu0 0.0
    %2566 = vmatprep.subr.mxu0 0.0
    %2567 = vmatpush1.msra.mxu0 0.0
    %2568 = vmatprep.subr.mxu0 0.0
    %2569 = vmatpush1.msra.mxu0 0.0
    %2570 = vmatprep.subr.mxu0 0.0
    %2571 = vmatpush1.msra.mxu0 0.0
    %2572 = vmatprep.subr.mxu0 0.0
    %2573 = vmatpush1.msra.mxu0 0.0
    %2574 = vmatprep.subr.mxu0 0.0
    %2575 = vmatpush1.msra.mxu0 0.0
    %2576 = vmatprep.subr.mxu0 0.0
    %2577 = vmatpush1.msra.mxu0 0.0
    %2578 = vmatprep.subr.mxu0 0.0
    %2579 = vmatpush1.msra.mxu0 0.0
    %2580 = vmatprep.subr.mxu0 0.0
    %2581 = vmatpush1.msra.mxu0 0.0
    %2582 = vmatprep.subr.mxu0 0.0
    %2583 = vmatpush1.msra.mxu0 0.0
    %2584 = vmatprep.subr.mxu0 0.0
    %2585 = vmatpush1.msra.mxu0 0.0
    %2586 = vmatprep.subr.mxu0 0.0
    %2587 = vmatpush1.msra.mxu0 0.0
    %2588 = vmatprep.subr.mxu0 0.0
    %2589 = vmatpush1.msra.mxu0 0.0
    %2590 = vmatprep.subr.mxu0 0.0
    %2591 = vmatpush1.msra.mxu0 0.0
    %2592 = vmatprep.subr.mxu0 0.0
    %2593 = vmatpush1.msra.mxu0 0.0
    %2594 = vmatprep.subr.mxu0 0.0
    %2595 = vmatpush1.msra.mxu0 0.0
    %2596 = vmatprep.subr.mxu0 0.0
    %2597 = vmatpush1.msra.mxu0 0.0
    %2598 = vmatprep.subr.mxu0 0.0
    %2599 = vmatpush1.msra.mxu0 0.0
    %2600 = vmatprep.subr.mxu0 0.0
    %2601 = vmatpush1.msra.mxu0 0.0
    %2602 = vmatprep.mubr.f32.mxu0 0.0
    %2603 = vmatmul.mubr.f32.gmra.mrb[0].mxu0 %v2456
    %v2604 = vpop.f32.mrb[0].mxu0
    %v2605 = vadd.f32 0.0, %v2604
    %v2606 = vpop.f32.mrb[0].mxu0
    %2607 = vmatprep.mubr.f32.mxu0 0.0
    %2608 = vmatmul.mubr.f32.gmra.mrb[0].mxu0 %v2459
    %v2609 = vpop.f32.mrb[0].mxu0
    %v2610 = vadd.f32 0.0, %v2609
    %v2611 = vpop.f32.mrb[0].mxu0
    %2612 = vdwg.mxu0
    %v2613 = vld [vmem:[%s10] sm:$0xff]
    %v2614 = vld [vmem:[%s10 + $0x8] sm:$0xff]
    %2616 = vset.pattern.permute.xlu0 0
    %2617 = vperm.xlu0 %2616, %v2613
    %v2618 = vpop.permute.xlu0 %2617
    %2621 = vset.pattern.permute.xlu0 0
    %2622 = vperm.xlu0 %2621, %v2614
    %v2623 = vpop.permute.xlu0 %2622
    %v2625 = vmul.f32 %v2528, %v2618
    %v2626 = vmul.f32 %v2534, %v2623
    %2627 = vset.pattern.permute.xlu0 1
    %2628 = vperm.xlu0 %2627, %v2613
    %v2629 = vpop.permute.xlu0 %2628
    %2631 = vset.pattern.permute.xlu0 1
    %2632 = vperm.xlu0 %2631, %v2614
    %v2633 = vpop.permute.xlu0 %2632
    %v2635 = vmul.f32 %v2528, %v2629
    %v2636 = vmul.f32 %v2534, %v2633
    %2639 = vrot.lane.b32.xlu0 %v2635, 96
    %v2640 = vpop.permute.xlu0 %2639
    %2641 = vrot.lane.b32.xlu0 %v2636, 96
    %v2642 = vpop.permute.xlu0 %2641
    %v2645 = vadd.f32 %v2625, %v2640
    %v2646 = vadd.f32 %v2626, %v2642
    %2647 = vset.pattern.permute.xlu0 2
    %2648 = vperm.xlu0 %2647, %v2613
    %v2649 = vpop.permute.xlu0 %2648
    %2651 = vset.pattern.permute.xlu0 2
    %2652 = vperm.xlu0 %2651, %v2614
    %v2653 = vpop.permute.xlu0 %2652
    %v2655 = vmul.f32 %v2528, %v2649
    %v2656 = vmul.f32 %v2534, %v2653
    %2659 = vrot.lane.b32.xlu0 %v2655, 64
    %v2660 = vpop.permute.xlu0 %2659
    %2661 = vrot.lane.b32.xlu0 %v2656, 64
    %v2662 = vpop.permute.xlu0 %2661
    %v2665 = vadd.f32 %v2645, %v2660
    %v2666 = vadd.f32 %v2646, %v2662
    %2667 = vset.pattern.permute.xlu0 3
    %2668 = vperm.xlu0 %2667, %v2613
    %v2669 = vpop.permute.xlu0 %2668
    %2671 = vset.pattern.permute.xlu0 3
    %2672 = vperm.xlu0 %2671, %v2614
    %v2673 = vpop.permute.xlu0 %2672
    %v2675 = vmul.f32 %v2528, %v2669
    %v2676 = vmul.f32 %v2534, %v2673
    %2679 = vrot.lane.b32.xlu0 %v2675, 32
    %v2680 = vpop.permute.xlu0 %2679
    %2681 = vrot.lane.b32.xlu0 %v2676, 32
    %v2682 = vpop.permute.xlu0 %2681
    %v2685 = vadd.f32 %v2665, %v2680
    %v2686 = vadd.f32 %v2666, %v2682
    %2687 = vset.pattern.permute.xlu0 4
    %2688 = vperm.xlu0 %2687, %v2613
    %v2689 = vpop.permute.xlu0 %2688
    %2691 = vset.pattern.permute.xlu0 4
    %2692 = vperm.xlu0 %2691, %v2614
    %v2693 = vpop.permute.xlu0 %2692
    %v2695 = vmul.f32 %v2530, %v2689
    %v2696 = vmul.f32 %v2536, %v2693
    %v2697 = vadd.f32 %v2685, %v2695
    %v2698 = vadd.f32 %v2686, %v2696
    %2699 = vset.pattern.permute.xlu0 5
    %2700 = vperm.xlu0 %2699, %v2613
    %v2701 = vpop.permute.xlu0 %2700
    %2703 = vset.pattern.permute.xlu0 5
    %2704 = vperm.xlu0 %2703, %v2614
    %v2705 = vpop.permute.xlu0 %2704
    %v2707 = vmul.f32 %v2530, %v2701
    %v2708 = vmul.f32 %v2536, %v2705
    %2711 = vrot.lane.b32.xlu0 %v2707, 96
    %v2712 = vpop.permute.xlu0 %2711
    %2713 = vrot.lane.b32.xlu0 %v2708, 96
    %v2714 = vpop.permute.xlu0 %2713
    %v2717 = vadd.f32 %v2697, %v2712
    %v2718 = vadd.f32 %v2698, %v2714
    %2719 = vset.pattern.permute.xlu0 6
    %2720 = vperm.xlu0 %2719, %v2613
    %v2721 = vpop.permute.xlu0 %2720
    %2723 = vset.pattern.permute.xlu0 6
    %2724 = vperm.xlu0 %2723, %v2614
    %v2725 = vpop.permute.xlu0 %2724
    %v2727 = vmul.f32 %v2530, %v2721
    %v2728 = vmul.f32 %v2536, %v2725
    %2731 = vrot.lane.b32.xlu0 %v2727, 64
    %v2732 = vpop.permute.xlu0 %2731
    %2733 = vrot.lane.b32.xlu0 %v2728, 64
    %v2734 = vpop.permute.xlu0 %2733
    %v2737 = vadd.f32 %v2717, %v2732
    %v2738 = vadd.f32 %v2718, %v2734
    %2739 = vset.pattern.permute.xlu0 7
    %2740 = vperm.xlu0 %2739, %v2613
    %v2741 = vpop.permute.xlu0 %2740
    %2743 = vset.pattern.permute.xlu0 7
    %2744 = vperm.xlu0 %2743, %v2614
    %v2745 = vpop.permute.xlu0 %2744
    %v2747 = vmul.f32 %v2530, %v2741
    %v2748 = vmul.f32 %v2536, %v2745
    %2751 = vrot.lane.b32.xlu0 %v2747, 32
    %v2752 = vpop.permute.xlu0 %2751
    %2753 = vrot.lane.b32.xlu0 %v2748, 32
    %v2754 = vpop.permute.xlu0 %2753
    %v2757 = vadd.f32 %v2737, %v2752
    %v2758 = vadd.f32 %v2738, %v2754
    %2759 = vset.pattern.permute.xlu0 8
    %2760 = vperm.xlu0 %2759, %v2613
    %v2761 = vpop.permute.xlu0 %2760
    %2763 = vset.pattern.permute.xlu0 8
    %2764 = vperm.xlu0 %2763, %v2614
    %v2765 = vpop.permute.xlu0 %2764
    %v2767 = vmul.f32 %v2605, %v2761
    %v2768 = vmul.f32 %v2610, %v2765
    %v2769 = vadd.f32 %v2757, %v2767
    %v2770 = vadd.f32 %v2758, %v2768
    %v2771 = vld [vmem:[%s11] sm:$0xff]
    %vm2772 = vcmask 130048
    %v2774 = vsel %vm2772, %v2771, 0
    %2776 = vmatprep.subr.mxu0 0.0
    %2777 = vmatpush1.msra.mxu0 %v2769
    %2778 = vmatprep.subr.mxu0 0.0
    %2779 = vmatpush1.msra.mxu0 %v2770
    %2780 = vmatprep.subr.mxu0 0.0
    %2781 = vmatpush1.msra.mxu0 0.0
    %2782 = vmatprep.subr.mxu0 0.0
    %2783 = vmatpush1.msra.mxu0 0.0
    %2784 = vmatprep.subr.mxu0 0.0
    %2785 = vmatpush1.msra.mxu0 0.0
    %2786 = vmatprep.subr.mxu0 0.0
    %2787 = vmatpush1.msra.mxu0 0.0
    %2788 = vmatprep.subr.mxu0 0.0
    %2789 = vmatpush1.msra.mxu0 0.0
    %2790 = vmatprep.subr.mxu0 0.0
    %2791 = vmatpush1.msra.mxu0 0.0
    %2792 = vmatprep.subr.mxu0 0.0
    %2793 = vmatpush1.msra.mxu0 0.0
    %2794 = vmatprep.subr.mxu0 0.0
    %2795 = vmatpush1.msra.mxu0 0.0
    %2796 = vmatprep.subr.mxu0 0.0
    %2797 = vmatpush1.msra.mxu0 0.0
    %2798 = vmatprep.subr.mxu0 0.0
    %2799 = vmatpush1.msra.mxu0 0.0
    %2800 = vmatprep.subr.mxu0 0.0
    %2801 = vmatpush1.msra.mxu0 0.0
    %2802 = vmatprep.subr.mxu0 0.0
    %2803 = vmatpush1.msra.mxu0 0.0
    %2804 = vmatprep.subr.mxu0 0.0
    %2805 = vmatpush1.msra.mxu0 0.0
    %2806 = vmatprep.subr.mxu0 0.0
    %2807 = vmatpush1.msra.mxu0 0.0
    %2808 = vmatprep.subr.mxu0 0.0
    %2809 = vmatpush1.msra.mxu0 0.0
    %2810 = vmatprep.subr.mxu0 0.0
    %2811 = vmatpush1.msra.mxu0 0.0
    %2812 = vmatprep.subr.mxu0 0.0
    %2813 = vmatpush1.msra.mxu0 0.0
    %2814 = vmatprep.subr.mxu0 0.0
    %2815 = vmatpush1.msra.mxu0 0.0
    %2816 = vmatprep.subr.mxu0 0.0
    %2817 = vmatpush1.msra.mxu0 0.0
    %2818 = vmatprep.subr.mxu0 0.0
    %2819 = vmatpush1.msra.mxu0 0.0
    %2820 = vmatprep.subr.mxu0 0.0
    %2821 = vmatpush1.msra.mxu0 0.0
    %2822 = vmatprep.subr.mxu0 0.0
    %2823 = vmatpush1.msra.mxu0 0.0
    %2824 = vmatprep.subr.mxu0 0.0
    %2825 = vmatpush1.msra.mxu0 0.0
    %2826 = vmatprep.subr.mxu0 0.0
    %2827 = vmatpush1.msra.mxu0 0.0
    %2828 = vmatprep.subr.mxu0 0.0
    %2829 = vmatpush1.msra.mxu0 0.0
    %2830 = vmatprep.subr.mxu0 0.0
    %2831 = vmatpush1.msra.mxu0 0.0
    %2832 = vmatprep.subr.mxu0 0.0
    %2833 = vmatpush1.msra.mxu0 0.0
    %2834 = vmatprep.subr.mxu0 0.0
    %2835 = vmatpush1.msra.mxu0 0.0
    %2836 = vmatprep.subr.mxu0 0.0
    %2837 = vmatpush1.msra.mxu0 0.0
    %2838 = vmatprep.subr.mxu0 0.0
    %2839 = vmatpush1.msra.mxu0 0.0
    %2840 = vmatprep.mubr.f32.mxu0 0.0
    %2841 = vmatmul.mubr.f32.gmra.mrb[0].mxu0 %v2774
    %v2842 = vpop.f32.mrb[0].mxu0
    %v2843 = vadd.f32 0.0, %v2842
    %v2844 = vpop.f32.mrb[0].mxu0
    %2845 = vdwg.mxu0
    %v2846 = vsel %vm2454, %v2843, 0.0
    %2847 = vadd.xlane.f32.xlu0 %v2846
    %v2848 = vpop.xlane.xlu0 %2847
    %v2849 = vrcp.pop 32.0
    %v2850 = vmul.f32 %v2848, %v2849
    %v2851 = vsub.f32 %v2843, %v2850
    %v2852 = vmul.f32 %v2851, %v2851
    %v2853 = vsel %vm2454, %v2852, 0.0
    %2854 = vadd.xlane.f32.xlu0 %v2853
    %v2855 = vpop.xlane.xlu0 %2854
    %v2856 = vmul.f32 %v2855, %v2849
    %v2857 = vrsqrt.pop %v2856
    %v2858 = vmul.f32 %v2851, %v2857
    %v2859 = vld [vmem:[%s12] sm:$0xff]
    %2861 = vset.pattern.permute.xlu0 0
    %2862 = vperm.xlu0 %2861, %v2859
    %v2863 = vpop.permute.xlu0 %2862
    %v2865 = vmul.f32 %v2858, %v2863
    %v2866 = vld [vmem:[%s13] sm:$0xff]
    %2868 = vset.pattern.permute.xlu0 0
    %2869 = vperm.xlu0 %2868, %v2866
    %v2870 = vpop.permute.xlu0 %2869
    %v2872 = vadd.f32 %v2865, %v2870
    %vm2873 = vcmp.gt.f32.partialorder %v2872, 0.0
    %v2874 = vmin.f32 %v2872, 0.0
    %v2875 = vmul.f32 %v2874, 1.442695
    %v2876 = vpow.pop %v2875
    %v2877 = vsub.f32 %v2876, 1.0
    %v2878 = vsel %vm2873, %v2872, %v2877
    %v2879 = vld [vmem:[%s14] sm:$0xff]
    %v2880 = vld [vmem:[%s14 + $0x8] sm:$0xff]
    %v2881 = vld [vmem:[%s14 + $0x10] sm:$0xff]
    %v2882 = vld [vmem:[%s14 + $0x18] sm:$0xff]
    %v2884 = vsel %vm2454, %v2878, 0
    %2886 = vmatprep.subr.mxu0 0.0
    %2887 = vmatpush1.msra.mxu0 %v2879
    %2888 = vmatprep.subr.mxu0 0.0
    %2889 = vmatpush1.msra.mxu0 %v2880
    %2890 = vmatprep.subr.mxu0 0.0
    %2891 = vmatpush1.msra.mxu0 %v2881
    %2892 = vmatprep.subr.mxu0 0.0
    %2893 = vmatpush1.msra.mxu0 %v2882
    %2894 = vmatprep.subr.mxu0 0.0
    %2895 = vmatpush1.msra.mxu0 0.0
    %2896 = vmatprep.subr.mxu0 0.0
    %2897 = vmatpush1.msra.mxu0 0.0
    %2898 = vmatprep.subr.mxu0 0.0
    %2899 = vmatpush1.msra.mxu0 0.0
    %2900 = vmatprep.subr.mxu0 0.0
    %2901 = vmatpush1.msra.mxu0 0.0
    %2902 = vmatprep.subr.mxu0 0.0
    %2903 = vmatpush1.msra.mxu0 0.0
    %2904 = vmatprep.subr.mxu0 0.0
    %2905 = vmatpush1.msra.mxu0 0.0
    %2906 = vmatprep.subr.mxu0 0.0
    %2907 = vmatpush1.msra.mxu0 0.0
    %2908 = vmatprep.subr.mxu0 0.0
    %2909 = vmatpush1.msra.mxu0 0.0
    %2910 = vmatprep.subr.mxu0 0.0
    %2911 = vmatpush1.msra.mxu0 0.0
    %2912 = vmatprep.subr.mxu0 0.0
    %2913 = vmatpush1.msra.mxu0 0.0
    %2914 = vmatprep.subr.mxu0 0.0
    %2915 = vmatpush1.msra.mxu0 0.0
    %2916 = vmatprep.subr.mxu0 0.0
    %2917 = vmatpush1.msra.mxu0 0.0
    %2918 = vmatprep.subr.mxu0 0.0
    %2919 = vmatpush1.msra.mxu0 0.0
    %2920 = vmatprep.subr.mxu0 0.0
    %2921 = vmatpush1.msra.mxu0 0.0
    %2922 = vmatprep.subr.mxu0 0.0
    %2923 = vmatpush1.msra.mxu0 0.0
    %2924 = vmatprep.subr.mxu0 0.0
    %2925 = vmatpush1.msra.mxu0 0.0
    %2926 = vmatprep.subr.mxu0 0.0
    %2927 = vmatpush1.msra.mxu0 0.0
    %2928 = vmatprep.subr.mxu0 0.0
    %2929 = vmatpush1.msra.mxu0 0.0
    %2930 = vmatprep.subr.mxu0 0.0
    %2931 = vmatpush1.msra.mxu0 0.0
    %2932 = vmatprep.subr.mxu0 0.0
    %2933 = vmatpush1.msra.mxu0 0.0
    %2934 = vmatprep.subr.mxu0 0.0
    %2935 = vmatpush1.msra.mxu0 0.0
    %2936 = vmatprep.subr.mxu0 0.0
    %2937 = vmatpush1.msra.mxu0 0.0
    %2938 = vmatprep.subr.mxu0 0.0
    %2939 = vmatpush1.msra.mxu0 0.0
    %2940 = vmatprep.subr.mxu0 0.0
    %2941 = vmatpush1.msra.mxu0 0.0
    %2942 = vmatprep.subr.mxu0 0.0
    %2943 = vmatpush1.msra.mxu0 0.0
    %2944 = vmatprep.subr.mxu0 0.0
    %2945 = vmatpush1.msra.mxu0 0.0
    %2946 = vmatprep.subr.mxu0 0.0
    %2947 = vmatpush1.msra.mxu0 0.0
    %2948 = vmatprep.subr.mxu0 0.0
    %2949 = vmatpush1.msra.mxu0 0.0
    %2950 = vmatprep.mubr.f32.mxu0 0.0
    %2951 = vmatmul.mubr.f32.gmra.mrb[0].mxu0 %v2884
    %v2952 = vpop.f32.mrb[0].mxu0
    %v2953 = vadd.f32 0.0, %v2952
    %v2954 = vpop.f32.mrb[0].mxu0
    %2955 = vdwg.mxu0
    %2957 = vrot.lane.b32.xlu0 %v2953, 124
    %v2958 = vpop.permute.xlu0 %2957
    %v2960 = vmax.f32 %v2953, %v2958
    %2961 = vrot.lane.b32.xlu0 %v2953, 120
    %v2962 = vpop.permute.xlu0 %2961
    %v2964 = vmax.f32 %v2960, %v2962
    %2965 = vrot.lane.b32.xlu0 %v2953, 116
    %v2966 = vpop.permute.xlu0 %2965
    %v2968 = vmax.f32 %v2964, %v2966
    %2969 = vrot.lane.b32.xlu0 %v2953, 112
    %v2970 = vpop.permute.xlu0 %2969
    %v2972 = vmax.f32 %v2968, %v2970
    %2973 = vrot.lane.b32.xlu0 %v2953, 108
    %v2974 = vpop.permute.xlu0 %2973
    %v2976 = vmax.f32 %v2972, %v2974
    %2977 = vrot.lane.b32.xlu0 %v2953, 104
    %v2978 = vpop.permute.xlu0 %2977
    %v2980 = vmax.f32 %v2976, %v2978
    %2981 = vrot.lane.b32.xlu0 %v2953, 100
    %v2982 = vpop.permute.xlu0 %2981
    %v2984 = vmax.f32 %v2980, %v2982
    %v2985 = vld [vmem:[%s15] sm:$0xff]
    %v2986 = vmul.f32 %v2984, %v2985
    %vm2987 = vcmask 15360
    %v2988 = vsel %vm2987, %v2986, 0.0
    %2989 = vadd.xlane.f32.xlu0 %v2988
    %v2990 = vpop.xlane.xlu0 %2989
    %v2991 = vrot.slane %v2990, 4
    %v2992 = vadd.f32 %v2990, %v2991
    %v2993 = vrot.slane %v2992, 2
    %v2994 = vadd.f32 %v2992, %v2993
    %v2995 = vrot.slane %v2994, 1
    %v2996 = vadd.f32 %v2994, %v2995
    %2998 = vrot.lane.b32.xlu0 %v2986, 126
    %v2999 = vpop.permute.xlu0 %2998
    %v3001 = vsel %vm2987, %v2999, 0.0
    %3002 = vadd.xlane.f32.xlu0 %v3001
    %v3003 = vpop.xlane.xlu0 %3002
    %v3004 = vrot.slane %v3003, 4
    %v3005 = vadd.f32 %v3003, %v3004
    %v3006 = vrot.slane %v3005, 2
    %v3007 = vadd.f32 %v3005, %v3006
    %v3008 = vrot.slane %v3007, 1
    %v3009 = vadd.f32 %v3007, %v3008
    %vm3010 = vcmask 7168
    %v3011 = vsel %vm3010, %v2996, %v3009
    %v3012 = vld [vmem:[#allocation2] sm:$0x1]
    %3014 = vset.pattern.permute.xlu0 0
    %3015 = vperm.xlu0 %3014, %v3012
    %v3016 = vpop.permute.xlu0 %3015
    %v3018 = vlaneseq
    %v3019 = vshrl.u32 %v3018, 7
    %v3020 = vsub.s32 0, %v3019
    %v3021 = vrot.slane %v3016, %v3020
    %v3022 = vadd.f32 %v3011, %v3021
    %v3023 = vsub.f32 0.0, %v3022
    %v3024 = vmul.f32 %v3023, 1.442695
    %v3025 = vpow.pop %v3024
    %v3026 = vadd.f32 %v3025, 1.0
    %v3027 = vrcp.pop %v3026
    %v3028 = vmul.f32 1.0, %v3027
    %vm3029 = vcmask 8192
    %3030 = vst.msk [vmem:[#allocation3] sm:$0x1] %vm3029, %v3028
    // Predicated region
    $region70: #{discriminator_channel_62_pallas.1} parent=1 // pred_check
      _
    $region71: #{discriminator_channel_62_pallas.1} parent=1 // pred_check_branch
      %3032 = sbr.rel (0) target = $region73
    $region72: #{discriminator_channel_62_pallas.1} parent=1 // pred_region
      %s3034 = ssub.s32 16, 16
      %3035 = vsyncadd [#allocation4], %s3034
      %s3037 = sshll.u32 [#allocation3], 4
      %s3038 = int_to_ptr.vmem [resolvable:$true] %s3037
      %3040 = dma.vmem_to_hbm [thread:$0]  %s3038, 16, %s17, [#allocation4]
    $region73: #{discriminator_channel_62_pallas.1} parent=1 // pred_fallthru
      _
    // Predicated region
    $region74: #{discriminator_channel_62_pallas.1} parent=1 // pred_check
      _
    $region75: #{discriminator_channel_62_pallas.1} parent=1 // pred_check_branch
      %3042 = sbr.rel (0) target = $region77
    $region76: #{discriminator_channel_62_pallas.1} parent=1 // pred_region
      %3043 = dma.done [#allocation4], 16
    $region77: #{discriminator_channel_62_pallas.1} parent=1 // pred_fallthru
      _
    %3044 = vsyncpa [#allocation4], 1

</llo_original>
